<compile_context>
chip_gen: v6e
topology: v6e:2x2x1
jax: 0.10.0
libtpu: 0.0.40
codegen_flags: <defaults>
</compile_context>

<pallas_src>
import functools
import random

import jax
import jax.numpy as jnp
import numpy as np
from jax.experimental import pallas as pl
from jax.experimental.pallas import tpu as pltpu

LANE = 128


# ----------------------------------------------------------------------------
# Host-side sampling of the echo train (mirrors RevEcho._reverb RNG usage).
# ----------------------------------------------------------------------------
def _sample_echo_taps(rng, length, initial, first_delay, rt60, repeat,
                      jitter, sample_rate):
    """Returns [(total_shift, scale)] such that reverb = sum scale*shift(x)."""
    taps = []
    for _ in range(repeat):
        frac = 1.0
        scale = initial
        total_shift = 0
        while frac > 0.001:
            jit = 1 + jitter * rng.uniform(-1, 1)
            delay = min(1 + int(jit * first_delay * sample_rate), length)
            total_shift += delay
            if total_shift < length:          # echoes past the end are zeros
                taps.append((total_shift, scale))
            jit = 1 + jitter * rng.uniform(-1, 1)
            attenuation = 10 ** (-3 * jit * first_delay / rt60)
            scale *= attenuation
            frac *= attenuation
    return taps


def _build_plan(taps, keep_clean, length):
    """Merge duplicate shifts, fold keep_clean, group taps by lane residue.

    Returns (pad, plan) with plan = ((residue, ((window_start, scale), ...)), ...),
    residues ascending.  For a tap with shift d = 128*q + r the kernel reads the
    lane-aligned window [pad - 128*q, pad - 128*q + T) of
    roll([zeros(pad) | x  with  x[T-r:T] zeroed], r), which equals
    shift_right_zero(x, d) exactly.
    """
    merged = {}
    for d, s in taps:
        merged[d] = merged.get(d, 0.0) + s
    if not merged:
        return LANE, ()
    max_d = max(merged)
    pad = max(LANE, ((max_d + LANE - 1) // LANE) * LANE)
    groups = {}
    for d in sorted(merged):
        q, r = divmod(d, LANE)
        groups.setdefault(r, []).append(
            (pad - LANE * q, float(keep_clean * merged[d])))
    plan = tuple((r, tuple(groups[r])) for r in sorted(groups))
    return pad, plan


# ----------------------------------------------------------------------------
# Pallas kernel: out = x + sum_k scale_k * shift_right_zero(x, shift_k)
# (keep_clean already folded into scale_k on the host)
# ----------------------------------------------------------------------------
def _revecho_kernel(x_ref, o_ref, zbuf_ref, *, pad, plan, n_acc):
    rb, t = x_ref.shape
    x = x_ref[...].astype(jnp.float32)          # f32 accumulate (bf16-safe)

    # Padded working copy: [0, pad) zeros, [pad, pad+T) = x.
    zbuf_ref[:, 0:pad] = jnp.zeros((rb, pad), jnp.float32)
    zbuf_ref[:, pad:pad + t] = x

    # Independent partial accumulators break the serial vadd chain.
    accs = [x] + [jnp.zeros_like(x) for _ in range(n_acc - 1)]

    tap_idx = 0
    prev_r = 0
    for r, taps in plan:                        # residues ascending
        # Incremental tail zero: destroy x[T-r : T-prev_r]; that data is never
        # needed by this or any later (larger-residue) group.  Narrow masked
        # store (< 1 vreg column), replaces the old per-tap full-width mask.
        if r > prev_r:
            zbuf_ref[:, pad + t - r: pad + t - prev_r] = jnp.zeros(
                (rb, r - prev_r), jnp.float32)
            prev_r = r
        z = zbuf_ref[...]
        # One XLU rotate per DISTINCT residue (not per tap); the wrapped tail
        # is the zeroed region, so heads are correctly zero-filled.
        w = z if r == 0 else pltpu.roll(z, shift=r, axis=1)
        for start, scale in taps:
            # 128*q part: lane-aligned window (vreg-column selection, no XLU),
            # then a plain VPU fma into a round-robined accumulator.
            a = tap_idx % n_acc
            accs[a] = accs[a] + scale * w[:, start:start + t]
            tap_idx += 1

    acc = accs[0]
    for extra in accs[1:]:
        acc = acc + extra
    o_ref[...] = acc.astype(o_ref.dtype)


# ----------------------------------------------------------------------------
# Block sizing: sublane-packing-, VMEM- and megacore-aware.
# ----------------------------------------------------------------------------
def _pick_row_block(rows, length, itemsize):
    granule = max(8, 32 // max(itemsize, 1))        # 8 f32 / 16 bf16 / 32 int8
    if rows % granule != 0:
        return rows                                  # full-dim block is legal
    budget = 8 << 20                                 # f32-equiv bytes, v7x-safe
    divisors = [d for d in range(granule, rows + 1, granule) if rows % d == 0]
    fitting = [d for d in divisors if d * length * 4 <= budget] or [granule]
    for min_steps in (8, 2, 1):                      # feed both v7x TCs
        cands = [d for d in fitting if rows // d >= min_steps]
        if cands:
            return max(cands)
    return fitting[-1]


def _add_reverb_pallas(x2d, taps, keep_clean, donate_input):
    rows, length = x2d.shape
    pad, plan = _build_plan(taps, keep_clean, length)
    if not plan:
        return x2d
    n_taps = sum(len(g) for _, g in plan)
    n_acc = 2 if n_taps >= 2 else 1
    itemsize = x2d.dtype.itemsize
    r_blk = _pick_row_block(rows, length, itemsize)

    blk_bytes = r_blk * length * itemsize
    zbuf_bytes = r_blk * (pad + length) * 4
    vmem_bytes = 4 * blk_bytes + zbuf_bytes + (2 << 20)   # 2x dbl-buffered io
    vmem_limit = int(min(max(vmem_bytes, 32 << 20), 64 << 20))

    kernel = functools.partial(_revecho_kernel, pad=pad, plan=plan, n_acc=n_acc)
    launch = pl.pallas_call(
        kernel,
        out_shape=jax.ShapeDtypeStruct((rows, length), x2d.dtype),
        grid_spec=pltpu.PrefetchScalarGridSpec(
            num_scalar_prefetch=0,
            grid=(rows // r_blk,),
            in_specs=[pl.BlockSpec((r_blk, length), lambda r: (r, 0))],
            out_specs=pl.BlockSpec((r_blk, length), lambda r: (r, 0)),
            scratch_shapes=[pltpu.VMEM((r_blk, pad + length), jnp.float32)],
        ),
        compiler_params=pltpu.CompilerParams(
            dimension_semantics=("parallel",),
            vmem_limit_bytes=vmem_limit),
        input_output_aliases={0: 0},
    )
    # Donate only when x2d is a fresh buffer (reshape made a copy); otherwise
    # XLA inserts its own defensive copy for the aliased operand.
    donate = (0,) if donate_input else ()
    return jax.jit(launch, donate_argnums=donate)(x2d)


# ----------------------------------------------------------------------------
# Functional forward (matches RevEcho.forward; returns a new dict).
# ----------------------------------------------------------------------------
def revecho_forward(samples, *, proba=0.5, initial=0.3, rt60=(0.3, 1.3),
                    first_delay=(0.01, 0.03), repeat=3, jitter=0.1,
                    keep_clean=0.1, sample_rate=16000, rng=None, seed=42):
    rng = rng if rng is not None else random.Random(seed)
    if rng.random() >= proba:
        return dict(samples)

    raw_wav = samples["raw_wav"]
    orig_shape = raw_wav.shape
    length = orig_shape[-1]

    initial_v = rng.random() * initial
    first_delay_v = rng.uniform(*first_delay)
    rt60_v = rng.uniform(*rt60)
    taps = _sample_echo_taps(rng, length, initial_v, first_delay_v, rt60_v,
                             repeat, jitter, sample_rate)

    x2d = raw_wav.reshape(-1, length)              # (B*C, T): fill sublanes
    out2d = _add_reverb_pallas(x2d, taps, keep_clean,
                               donate_input=(x2d is not raw_wav))
    out = out2d.reshape(orig_shape)
    # torch quirk: a (B, 1, T) input comes back squeezed to (B, T)
    if raw_wav.ndim == 3 and orig_shape[1] == 1:
        out = out.reshape(orig_shape[0], length)

    new_samples = dict(samples)
    new_samples["raw_wav"] = out
    return new_samples


# ----------------------------------------------------------------------------
# Pure-numpy reference: faithful port of the torch module (for the self-check;
# this also guards the pltpu.roll rotation-direction assumption).
# ----------------------------------------------------------------------------
def _reverb_ref(rng, source, initial, first_delay, rt60, repeat, jitter,
                sample_rate):
    length = source.shape[-1]
    reverb = np.zeros_like(source)
    for _ in range(repeat):
        frac = 1.0
        echo = initial * source
        while frac > 0.001:
            jit = 1 + jitter * rng.uniform(-1, 1)
            delay = min(1 + int(jit * first_delay * sample_rate), length)
            pad = np.zeros(echo.shape[:-1] + (delay,), dtype=echo.dtype)
            echo = np.concatenate([pad, echo[..., :length - delay]], axis=-1)
            reverb += echo
            jit = 1 + jitter * rng.uniform(-1, 1)
            attenuation = 10 ** (-3 * jit * first_delay / rt60)
            echo = echo * attenuation
            frac *= attenuation
    return reverb


def revecho_forward_ref(samples, *, proba, initial, rt60, first_delay, repeat,
                        jitter, keep_clean, sample_rate, rng):
    if rng.random() >= proba:
        return dict(samples)
    raw_wav = np.array(samples["raw_wav"], dtype=np.float32)
    if raw_wav.ndim == 2:
        raw_wav = raw_wav[:, None, :]
    initial_v = rng.random() * initial
    first_delay_v = rng.uniform(*first_delay)
    rt60_v = rng.uniform(*rt60)
    reverb = _reverb_ref(rng, raw_wav, initial_v, first_delay_v, rt60_v,
                         repeat, jitter, sample_rate)
    raw_wav = raw_wav + keep_clean * reverb
    if raw_wav.ndim == 3 and raw_wav.shape[1] == 1:
        raw_wav = raw_wav[:, 0, :]
    out = dict(samples)
    out["raw_wav"] = raw_wav
    return out


if __name__ == "__main__":
    B, C, T = 4, 4, 2048              # 16 rows -> 2 parallel grid steps
    SR = 16000
    params = dict(proba=1.0, initial=0.3, rt60=(0.3, 1.3),
                  first_delay=(0.01, 0.03), repeat=3, jitter=0.1,
                  keep_clean=0.1, sample_rate=SR)
    seed = 42

    key = jax.random.PRNGKey(0)
    raw_wav = jax.random.normal(key, (B, C, T), dtype=jnp.float32)
    raw_np = np.asarray(raw_wav)                 # snapshot before the kernel
    samples = {"raw_wav": raw_wav}

    out = revecho_forward(samples, rng=random.Random(seed), **params)
    result = np.asarray(jax.block_until_ready(out["raw_wav"]))

    ref = revecho_forward_ref({"raw_wav": raw_np}, rng=random.Random(seed),
                              **params)
    np.testing.assert_allclose(result, ref["raw_wav"], rtol=1e-4, atol=1e-4)

    print("KERNEL_OK")
</pallas_src>

<mosaic_0001>
module attributes {stable_mosaic.version = 11 : i64} {
  func.func @_revecho_kernel(%arg0: i32, %arg1: memref<8x2048xf32, #tpu.memory_space<vmem>>, %arg2: memref<8x2048xf32, #tpu.memory_space<vmem>>, %arg3: memref<8x4096xf32, #tpu.memory_space<vmem>>) attributes {dimension_semantics = [#tpu.dimension_semantics<parallel>], iteration_bounds = array<i64: 2>, scalar_prefetch = 0 : i64, scratch_operands = 1 : i64, tpu.core_type = #tpu.core_type<tc>, window_params = [{transform_indices = @transform_0, window_bounds = array<i64: 8, 2048>}, {transform_indices = @transform_1, window_bounds = array<i64: 8, 2048>}]} {
    %c0 = arith.constant 0 : index
    %c0_0 = arith.constant 0 : index
    %0 = vector.load %arg1[%c0, %c0_0] : memref<8x2048xf32, #tpu.memory_space<vmem>>, vector<8x2048xf32>
    %cst = arith.constant 0.000000e+00 : f32
    %1 = vector.broadcast %cst : f32 to vector<8x2048xf32>
    %c0_1 = arith.constant 0 : index
    %c0_2 = arith.constant 0 : index
    %2 = vector.load %arg3[%c0_1, %c0_2] : memref<8x4096xf32, #tpu.memory_space<vmem>>, vector<8x2048xf32>
    tpu.vector_store %arg3[%c0_1, %c0_2], %1 {strides = array<i32>} : memref<8x4096xf32, #tpu.memory_space<vmem>>, vector<8x2048xf32>,
    %c0_3 = arith.constant 0 : index
    %c2048 = arith.constant 2048 : index
    %3 = vector.load %arg3[%c0_3, %c2048] : memref<8x4096xf32, #tpu.memory_space<vmem>>, vector<8x2048xf32>
    tpu.vector_store %arg3[%c0_3, %c2048], %0 {strides = array<i32>} : memref<8x4096xf32, #tpu.memory_space<vmem>>, vector<8x2048xf32>,
    %cst_4 = arith.constant 0.000000e+00 : f32
    %4 = vector.broadcast %cst_4 : f32 to vector<8x2048xf32>
    %c0_5 = arith.constant 0 : index
    %c0_6 = arith.constant 0 : index
    %5 = vector.load %arg3[%c0_5, %c0_6] : memref<8x4096xf32, #tpu.memory_space<vmem>>, vector<8x4096xf32>
    %6 = vector.extract_strided_slice %5 {offsets = [0, 1792], sizes = [8, 2048], strides = [1, 1]} : vector<8x4096xf32> to vector<8x2048xf32>
    %cst_7 = arith.constant 7.50322652E-4 : f32
    %7 = vector.broadcast %cst_7 : f32 to vector<8x2048xf32>
    %8 = arith.mulf %7, %6 : vector<8x2048xf32>
    %9 = arith.addf %0, %8 : vector<8x2048xf32>
    %cst_8 = arith.constant 0.000000e+00 : f32
    %10 = vector.broadcast %cst_8 : f32 to vector<8x4xf32>
    %c0_9 = arith.constant 0 : index
    %c4092 = arith.constant 4092 : index
    %11 = vector.load %arg3[%c0_9, %c4092] : memref<8x4096xf32, #tpu.memory_space<vmem>>, vector<8x4xf32>
    tpu.vector_store %arg3[%c0_9, %c4092], %10 {strides = array<i32>} : memref<8x4096xf32, #tpu.memory_space<vmem>>, vector<8x4xf32>,
    %c0_10 = arith.constant 0 : index
    %c0_11 = arith.constant 0 : index
    %12 = vector.load %arg3[%c0_10, %c0_11] : memref<8x4096xf32, #tpu.memory_space<vmem>>, vector<8x4096xf32>
    %c4_i32 = arith.constant 4 : i32
    %13 = tpu.dynamic_rotate %12 by %c4_i32 dim 1 : vector<8x4096xf32>, i32 -> vector<8x4096xf32>
    %14 = vector.extract_strided_slice %13 {offsets = [0, 1792], sizes = [8, 2048], strides = [1, 1]} : vector<8x4096xf32> to vector<8x2048xf32>
    %cst_12 = arith.constant 7.50322652E-4 : f32
    %15 = vector.broadcast %cst_12 : f32 to vector<8x2048xf32>
    %16 = arith.mulf %15, %14 : vector<8x2048xf32>
    %17 = arith.addf %4, %16 : vector<8x2048xf32>
    %cst_13 = arith.constant 0.000000e+00 : f32
    %18 = vector.broadcast %cst_13 : f32 to vector<8x1xf32>
    %c0_14 = arith.constant 0 : index
    %c4091 = arith.constant 4091 : index
    %19 = vector.load %arg3[%c0_14, %c4091] : memref<8x4096xf32, #tpu.memory_space<vmem>>, vector<8x1xf32>
    tpu.vector_store %arg3[%c0_14, %c4091], %18 {strides = array<i32>} : memref<8x4096xf32, #tpu.memory_space<vmem>>, vector<8x1xf32>,
    %c0_15 = arith.constant 0 : index
    %c0_16 = arith.constant 0 : index
    %20 = vector.load %arg3[%c0_15, %c0_16] : memref<8x4096xf32, #tpu.memory_space<vmem>>, vector<8x4096xf32>
    %c5_i32 = arith.constant 5 : i32
    %21 = tpu.dynamic_rotate %20 by %c5_i32 dim 1 : vector<8x4096xf32>, i32 -> vector<8x4096xf32>
    %22 = vector.extract_strided_slice %21 {offsets = [0, 1280], sizes = [8, 2048], strides = [1, 1]} : vector<8x4096xf32> to vector<8x2048xf32>
    %cst_17 = arith.constant 5.03146148E-4 : f32
    %23 = vector.broadcast %cst_17 : f32 to vector<8x2048xf32>
    %24 = arith.mulf %23, %22 : vector<8x2048xf32>
    %25 = arith.addf %9, %24 : vector<8x2048xf32>
    %cst_18 = arith.constant 0.000000e+00 : f32
    %26 = vector.broadcast %cst_18 : f32 to vector<8x8xf32>
    %c0_19 = arith.constant 0 : index
    %c4083 = arith.constant 4083 : index
    %27 = vector.load %arg3[%c0_19, %c4083] : memref<8x4096xf32, #tpu.memory_space<vmem>>, vector<8x8xf32>
    tpu.vector_store %arg3[%c0_19, %c4083], %26 {strides = array<i32>} : memref<8x4096xf32, #tpu.memory_space<vmem>>, vector<8x8xf32>,
    %c0_20 = arith.constant 0 : index
    %c0_21 = arith.constant 0 : index
    %28 = vector.load %arg3[%c0_20, %c0_21] : memref<8x4096xf32, #tpu.memory_space<vmem>>, vector<8x4096xf32>
    %c13_i32 = arith.constant 13 : i32
    %29 = tpu.dynamic_rotate %28 by %c13_i32 dim 1 : vector<8x4096xf32>, i32 -> vector<8x4096xf32>
    %30 = vector.extract_strided_slice %29 {offsets = [0, 1536], sizes = [8, 2048], strides = [1, 1]} : vector<8x4096xf32> to vector<8x2048xf32>
    %cst_22 = arith.constant 6.14080869E-4 : f32
    %31 = vector.broadcast %cst_22 : f32 to vector<8x2048xf32>
    %32 = arith.mulf %31, %30 : vector<8x2048xf32>
    %33 = arith.addf %17, %32 : vector<8x2048xf32>
    %cst_23 = arith.constant 0.000000e+00 : f32
    %34 = vector.broadcast %cst_23 : f32 to vector<8x3xf32>
    %c0_24 = arith.constant 0 : index
    %c4080 = arith.constant 4080 : index
    %35 = vector.load %arg3[%c0_24, %c4080] : memref<8x4096xf32, #tpu.memory_space<vmem>>, vector<8x3xf32>
    tpu.vector_store %arg3[%c0_24, %c4080], %34 {strides = array<i32>} : memref<8x4096xf32, #tpu.memory_space<vmem>>, vector<8x3xf32>,
    %c0_25 = arith.constant 0 : index
    %c0_26 = arith.constant 0 : index
    %36 = vector.load %arg3[%c0_25, %c0_26] : memref<8x4096xf32, #tpu.memory_space<vmem>>, vector<8x4096xf32>
    %c16_i32 = arith.constant 16 : i32
    %37 = tpu.dynamic_rotate %36 by %c16_i32 dim 1 : vector<8x4096xf32>, i32 -> vector<8x4096xf32>
    %38 = vector.extract_strided_slice %37 {offsets = [0, 1536], sizes = [8, 2048], strides = [1, 1]} : vector<8x4096xf32> to vector<8x2048xf32>
    %cst_27 = arith.constant 6.07056951E-4 : f32
    %39 = vector.broadcast %cst_27 : f32 to vector<8x2048xf32>
    %40 = arith.mulf %39, %38 : vector<8x2048xf32>
    %41 = arith.addf %25, %40 : vector<8x2048xf32>
    %cst_28 = arith.constant 0.000000e+00 : f32
    %42 = vector.broadcast %cst_28 : f32 to vector<8x18xf32>
    %c0_29 = arith.constant 0 : index
    %c4062 = arith.constant 4062 : index
    %43 = vector.load %arg3[%c0_29, %c4062] : memref<8x4096xf32, #tpu.memory_space<vmem>>, vector<8x18xf32>
    tpu.vector_store %arg3[%c0_29, %c4062], %42 {strides = array<i32>} : memref<8x4096xf32, #tpu.memory_space<vmem>>, vector<8x18xf32>,
    %c0_30 = arith.constant 0 : index
    %c0_31 = arith.constant 0 : index
    %44 = vector.load %arg3[%c0_30, %c0_31] : memref<8x4096xf32, #tpu.memory_space<vmem>>, vector<8x4096xf32>
    %c34_i32 = arith.constant 34 : i32
    %45 = tpu.dynamic_rotate %44 by %c34_i32 dim 1 : vector<8x4096xf32>, i32 -> vector<8x4096xf32>
    %46 = vector.extract_strided_slice %45 {offsets = [0, 128], sizes = [8, 2048], strides = [1, 1]} : vector<8x4096xf32> to vector<8x2048xf32>
    %cst_32 = arith.constant 1.78971459E-4 : f32
    %47 = vector.broadcast %cst_32 : f32 to vector<8x2048xf32>
    %48 = arith.mulf %47, %46 : vector<8x2048xf32>
    %49 = arith.addf %33, %48 : vector<8x2048xf32>
    %cst_33 = arith.constant 0.000000e+00 : f32
    %50 = vector.broadcast %cst_33 : f32 to vector<8x16xf32>
    %c0_34 = arith.constant 0 : index
    %c4046 = arith.constant 4046 : index
    %51 = vector.load %arg3[%c0_34, %c4046] : memref<8x4096xf32, #tpu.memory_space<vmem>>, vector<8x16xf32>
    tpu.vector_store %arg3[%c0_34, %c4046], %50 {strides = array<i32>} : memref<8x4096xf32, #tpu.memory_space<vmem>>, vector<8x16xf32>,
    %c0_35 = arith.constant 0 : index
    %c0_36 = arith.constant 0 : index
    %52 = vector.load %arg3[%c0_35, %c0_36] : memref<8x4096xf32, #tpu.memory_space<vmem>>, vector<8x4096xf32>
    %c50_i32 = arith.constant 50 : i32
    %53 = tpu.dynamic_rotate %52 by %c50_i32 dim 1 : vector<8x4096xf32>, i32 -> vector<8x4096xf32>
    %54 = vector.extract_strided_slice %53 {offsets = [0, 384], sizes = [8, 2048], strides = [1, 1]} : vector<8x4096xf32> to vector<8x2048xf32>
    %cst_37 = arith.constant 2.17153982E-4 : f32
    %55 = vector.broadcast %cst_37 : f32 to vector<8x2048xf32>
    %56 = arith.mulf %55, %54 : vector<8x2048xf32>
    %57 = arith.addf %41, %56 : vector<8x2048xf32>
    %cst_38 = arith.constant 0.000000e+00 : f32
    %58 = vector.broadcast %cst_38 : f32 to vector<8x10xf32>
    %c0_39 = arith.constant 0 : index
    %c4036 = arith.constant 4036 : index
    %59 = vector.load %arg3[%c0_39, %c4036] : memref<8x4096xf32, #tpu.memory_space<vmem>>, vector<8x10xf32>
    tpu.vector_store %arg3[%c0_39, %c4036], %58 {strides = array<i32>} : memref<8x4096xf32, #tpu.memory_space<vmem>>, vector<8x10xf32>,
    %c0_40 = arith.constant 0 : index
    %c0_41 = arith.constant 0 : index
    %60 = vector.load %arg3[%c0_40, %c0_41] : memref<8x4096xf32, #tpu.memory_space<vmem>>, vector<8x4096xf32>
    %c60_i32 = arith.constant 60 : i32
    %61 = tpu.dynamic_rotate %60 by %c60_i32 dim 1 : vector<8x4096xf32>, i32 -> vector<8x4096xf32>
    %62 = vector.extract_strided_slice %61 {offsets = [0, 384], sizes = [8, 2048], strides = [1, 1]} : vector<8x4096xf32> to vector<8x2048xf32>
    %cst_42 = arith.constant 2.28560297E-4 : f32
    %63 = vector.broadcast %cst_42 : f32 to vector<8x2048xf32>
    %64 = arith.mulf %63, %62 : vector<8x2048xf32>
    %65 = arith.addf %49, %64 : vector<8x2048xf32>
    %cst_43 = arith.constant 0.000000e+00 : f32
    %66 = vector.broadcast %cst_43 : f32 to vector<8x8xf32>
    %c0_44 = arith.constant 0 : index
    %c4028 = arith.constant 4028 : index
    %67 = vector.load %arg3[%c0_44, %c4028] : memref<8x4096xf32, #tpu.memory_space<vmem>>, vector<8x8xf32>
    tpu.vector_store %arg3[%c0_44, %c4028], %66 {strides = array<i32>} : memref<8x4096xf32, #tpu.memory_space<vmem>>, vector<8x8xf32>,
    %c0_45 = arith.constant 0 : index
    %c0_46 = arith.constant 0 : index
    %68 = vector.load %arg3[%c0_45, %c0_46] : memref<8x4096xf32, #tpu.memory_space<vmem>>, vector<8x4096xf32>
    %c68_i32 = arith.constant 68 : i32
    %69 = tpu.dynamic_rotate %68 by %c68_i32 dim 1 : vector<8x4096xf32>, i32 -> vector<8x4096xf32>
    %70 = vector.extract_strided_slice %69 {offsets = [0, 128], sizes = [8, 2048], strides = [1, 1]} : vector<8x4096xf32> to vector<8x2048xf32>
    %cst_47 = arith.constant 1.85582219E-4 : f32
    %71 = vector.broadcast %cst_47 : f32 to vector<8x2048xf32>
    %72 = arith.mulf %71, %70 : vector<8x2048xf32>
    %73 = arith.addf %57, %72 : vector<8x2048xf32>
    %cst_48 = arith.constant 0.000000e+00 : f32
    %74 = vector.broadcast %cst_48 : f32 to vector<8x2xf32>
    %c0_49 = arith.constant 0 : index
    %c4026 = arith.constant 4026 : index
    %75 = vector.load %arg3[%c0_49, %c4026] : memref<8x4096xf32, #tpu.memory_space<vmem>>, vector<8x2xf32>
    tpu.vector_store %arg3[%c0_49, %c4026], %74 {strides = array<i32>} : memref<8x4096xf32, #tpu.memory_space<vmem>>, vector<8x2xf32>,
    %c0_50 = arith.constant 0 : index
    %c0_51 = arith.constant 0 : index
    %76 = vector.load %arg3[%c0_50, %c0_51] : memref<8x4096xf32, #tpu.memory_space<vmem>>, vector<8x4096xf32>
    %c70_i32 = arith.constant 70 : i32
    %77 = tpu.dynamic_rotate %76 by %c70_i32 dim 1 : vector<8x4096xf32>, i32 -> vector<8x4096xf32>
    %78 = vector.extract_strided_slice %77 {offsets = [0, 1152], sizes = [8, 2048], strides = [1, 1]} : vector<8x4096xf32> to vector<8x2048xf32>
    %cst_52 = arith.constant 4.00894962E-4 : f32
    %79 = vector.broadcast %cst_52 : f32 to vector<8x2048xf32>
    %80 = arith.mulf %79, %78 : vector<8x2048xf32>
    %81 = arith.addf %65, %80 : vector<8x2048xf32>
    %cst_53 = arith.constant 0.000000e+00 : f32
    %82 = vector.broadcast %cst_53 : f32 to vector<8x6xf32>
    %c0_54 = arith.constant 0 : index
    %c4020 = arith.constant 4020 : index
    %83 = vector.load %arg3[%c0_54, %c4020] : memref<8x4096xf32, #tpu.memory_space<vmem>>, vector<8x6xf32>
    tpu.vector_store %arg3[%c0_54, %c4020], %82 {strides = array<i32>} : memref<8x4096xf32, #tpu.memory_space<vmem>>, vector<8x6xf32>,
    %c0_55 = arith.constant 0 : index
    %c0_56 = arith.constant 0 : index
    %84 = vector.load %arg3[%c0_55, %c0_56] : memref<8x4096xf32, #tpu.memory_space<vmem>>, vector<8x4096xf32>
    %c76_i32 = arith.constant 76 : i32
    %85 = tpu.dynamic_rotate %84 by %c76_i32 dim 1 : vector<8x4096xf32>, i32 -> vector<8x4096xf32>
    %86 = vector.extract_strided_slice %85 {offsets = [0, 640], sizes = [8, 2048], strides = [1, 1]} : vector<8x4096xf32> to vector<8x2048xf32>
    %cst_57 = arith.constant 2.66660034E-4 : f32
    %87 = vector.broadcast %cst_57 : f32 to vector<8x2048xf32>
    %88 = arith.mulf %87, %86 : vector<8x2048xf32>
    %89 = arith.addf %73, %88 : vector<8x2048xf32>
    %cst_58 = arith.constant 0.000000e+00 : f32
    %90 = vector.broadcast %cst_58 : f32 to vector<8x5xf32>
    %c0_59 = arith.constant 0 : index
    %c4015 = arith.constant 4015 : index
    %91 = vector.load %arg3[%c0_59, %c4015] : memref<8x4096xf32, #tpu.memory_space<vmem>>, vector<8x5xf32>
    tpu.vector_store %arg3[%c0_59, %c4015], %90 {strides = array<i32>} : memref<8x4096xf32, #tpu.memory_space<vmem>>, vector<8x5xf32>,
    %c0_60 = arith.constant 0 : index
    %c0_61 = arith.constant 0 : index
    %92 = vector.load %arg3[%c0_60, %c0_61] : memref<8x4096xf32, #tpu.memory_space<vmem>>, vector<8x4096xf32>
    %c81_i32 = arith.constant 81 : i32
    %93 = tpu.dynamic_rotate %92 by %c81_i32 dim 1 : vector<8x4096xf32>, i32 -> vector<8x4096xf32>
    %94 = vector.extract_strided_slice %93 {offsets = [0, 896], sizes = [8, 2048], strides = [1, 1]} : vector<8x4096xf32> to vector<8x2048xf32>
    %cst_62 = arith.constant 3.40566301E-4 : f32
    %95 = vector.broadcast %cst_62 : f32 to vector<8x2048xf32>
    %96 = arith.mulf %95, %94 : vector<8x2048xf32>
    %97 = arith.addf %81, %96 : vector<8x2048xf32>
    %98 = vector.extract_strided_slice %93 {offsets = [0, 640], sizes = [8, 2048], strides = [1, 1]} : vector<8x4096xf32> to vector<8x2048xf32>
    %cst_63 = arith.constant 2.80981243E-4 : f32
    %99 = vector.broadcast %cst_63 : f32 to vector<8x2048xf32>
    %100 = arith.mulf %99, %98 : vector<8x2048xf32>
    %101 = arith.addf %89, %100 : vector<8x2048xf32>
    %cst_64 = arith.constant 0.000000e+00 : f32
    %102 = vector.broadcast %cst_64 : f32 to vector<8x6xf32>
    %c0_65 = arith.constant 0 : index
    %c4009 = arith.constant 4009 : index
    %103 = vector.load %arg3[%c0_65, %c4009] : memref<8x4096xf32, #tpu.memory_space<vmem>>, vector<8x6xf32>
    tpu.vector_store %arg3[%c0_65, %c4009], %102 {strides = array<i32>} : memref<8x4096xf32, #tpu.memory_space<vmem>>, vector<8x6xf32>,
    %c0_66 = arith.constant 0 : index
    %c0_67 = arith.constant 0 : index
    %104 = vector.load %arg3[%c0_66, %c0_67] : memref<8x4096xf32, #tpu.memory_space<vmem>>, vector<8x4096xf32>
    %c87_i32 = arith.constant 87 : i32
    %105 = tpu.dynamic_rotate %104 by %c87_i32 dim 1 : vector<8x4096xf32>, i32 -> vector<8x4096xf32>
    %106 = vector.extract_strided_slice %105 {offsets = [0, 896], sizes = [8, 2048], strides = [1, 1]} : vector<8x4096xf32> to vector<8x2048xf32>
    %cst_68 = arith.constant 3.29230272E-4 : f32
    %107 = vector.broadcast %cst_68 : f32 to vector<8x2048xf32>
    %108 = arith.mulf %107, %106 : vector<8x2048xf32>
    %109 = arith.addf %97, %108 : vector<8x2048xf32>
    %cst_69 = arith.constant 0.000000e+00 : f32
    %110 = vector.broadcast %cst_69 : f32 to vector<8x5xf32>
    %c0_70 = arith.constant 0 : index
    %c4004 = arith.constant 4004 : index
    %111 = vector.load %arg3[%c0_70, %c4004] : memref<8x4096xf32, #tpu.memory_space<vmem>>, vector<8x5xf32>
    tpu.vector_store %arg3[%c0_70, %c4004], %110 {strides = array<i32>} : memref<8x4096xf32, #tpu.memory_space<vmem>>, vector<8x5xf32>,
    %c0_71 = arith.constant 0 : index
    %c0_72 = arith.constant 0 : index
    %112 = vector.load %arg3[%c0_71, %c0_72] : memref<8x4096xf32, #tpu.memory_space<vmem>>, vector<8x4096xf32>
    %c92_i32 = arith.constant 92 : i32
    %113 = tpu.dynamic_rotate %112 by %c92_i32 dim 1 : vector<8x4096xf32>, i32 -> vector<8x4096xf32>
    %114 = vector.extract_strided_slice %113 {offsets = [0, 1408], sizes = [8, 2048], strides = [1, 1]} : vector<8x4096xf32> to vector<8x2048xf32>
    %cst_73 = arith.constant 4.96587076E-4 : f32
    %115 = vector.broadcast %cst_73 : f32 to vector<8x2048xf32>
    %116 = arith.mulf %115, %114 : vector<8x2048xf32>
    %117 = arith.addf %101, %116 : vector<8x2048xf32>
    %118 = vector.extract_strided_slice %113 {offsets = [0, 128], sizes = [8, 2048], strides = [1, 1]} : vector<8x4096xf32> to vector<8x2048xf32>
    %cst_74 = arith.constant 1.828776E-4 : f32
    %119 = vector.broadcast %cst_74 : f32 to vector<8x2048xf32>
    %120 = arith.mulf %119, %118 : vector<8x2048xf32>
    %121 = arith.addf %109, %120 : vector<8x2048xf32>
    %cst_75 = arith.constant 0.000000e+00 : f32
    %122 = vector.broadcast %cst_75 : f32 to vector<8x6xf32>
    %c0_76 = arith.constant 0 : index
    %c3998 = arith.constant 3998 : index
    %123 = vector.load %arg3[%c0_76, %c3998] : memref<8x4096xf32, #tpu.memory_space<vmem>>, vector<8x6xf32>
    tpu.vector_store %arg3[%c0_76, %c3998], %122 {strides = array<i32>} : memref<8x4096xf32, #tpu.memory_space<vmem>>, vector<8x6xf32>,
    %c0_77 = arith.constant 0 : index
    %c0_78 = arith.constant 0 : index
    %124 = vector.load %arg3[%c0_77, %c0_78] : memref<8x4096xf32, #tpu.memory_space<vmem>>, vector<8x4096xf32>
    %c98_i32 = arith.constant 98 : i32
    %125 = tpu.dynamic_rotate %124 by %c98_i32 dim 1 : vector<8x4096xf32>, i32 -> vector<8x4096xf32>
    %126 = vector.extract_strided_slice %125 {offsets = [0, 1664], sizes = [8, 2048], strides = [1, 1]} : vector<8x4096xf32> to vector<8x2048xf32>
    %cst_79 = arith.constant 6.02213084E-4 : f32
    %127 = vector.broadcast %cst_79 : f32 to vector<8x2048xf32>
    %128 = arith.mulf %127, %126 : vector<8x2048xf32>
    %129 = arith.addf %117, %128 : vector<8x2048xf32>
    %cst_80 = arith.constant 0.000000e+00 : f32
    %130 = vector.broadcast %cst_80 : f32 to vector<8x5xf32>
    %c0_81 = arith.constant 0 : index
    %c3993 = arith.constant 3993 : index
    %131 = vector.load %arg3[%c0_81, %c3993] : memref<8x4096xf32, #tpu.memory_space<vmem>>, vector<8x5xf32>
    tpu.vector_store %arg3[%c0_81, %c3993], %130 {strides = array<i32>} : memref<8x4096xf32, #tpu.memory_space<vmem>>, vector<8x5xf32>,
    %c0_82 = arith.constant 0 : index
    %c0_83 = arith.constant 0 : index
    %132 = vector.load %arg3[%c0_82, %c0_83] : memref<8x4096xf32, #tpu.memory_space<vmem>>, vector<8x4096xf32>
    %c103_i32 = arith.constant 103 : i32
    %133 = tpu.dynamic_rotate %132 by %c103_i32 dim 1 : vector<8x4096xf32>, i32 -> vector<8x4096xf32>
    %134 = vector.extract_strided_slice %133 {offsets = [0, 640], sizes = [8, 2048], strides = [1, 1]} : vector<8x4096xf32> to vector<8x2048xf32>
    %cst_84 = arith.constant 2.72330304E-4 : f32
    %135 = vector.broadcast %cst_84 : f32 to vector<8x2048xf32>
    %136 = arith.mulf %135, %134 : vector<8x2048xf32>
    %137 = arith.addf %121, %136 : vector<8x2048xf32>
    %cst_85 = arith.constant 0.000000e+00 : f32
    %138 = vector.broadcast %cst_85 : f32 to vector<8x6xf32>
    %c0_86 = arith.constant 0 : index
    %c3987 = arith.constant 3987 : index
    %139 = vector.load %arg3[%c0_86, %c3987] : memref<8x4096xf32, #tpu.memory_space<vmem>>, vector<8x6xf32>
    tpu.vector_store %arg3[%c0_86, %c3987], %138 {strides = array<i32>} : memref<8x4096xf32, #tpu.memory_space<vmem>>, vector<8x6xf32>,
    %c0_87 = arith.constant 0 : index
    %c0_88 = arith.constant 0 : index
    %140 = vector.load %arg3[%c0_87, %c0_88] : memref<8x4096xf32, #tpu.memory_space<vmem>>, vector<8x4096xf32>
    %c109_i32 = arith.constant 109 : i32
    %141 = tpu.dynamic_rotate %140 by %c109_i32 dim 1 : vector<8x4096xf32>, i32 -> vector<8x4096xf32>
    %142 = vector.extract_strided_slice %141 {offsets = [0, 1920], sizes = [8, 2048], strides = [1, 1]} : vector<8x4096xf32> to vector<8x2048xf32>
    %cst_89 = arith.constant 7.50322652E-4 : f32
    %143 = vector.broadcast %cst_89 : f32 to vector<8x2048xf32>
    %144 = arith.mulf %143, %142 : vector<8x2048xf32>
    %145 = arith.addf %129, %144 : vector<8x2048xf32>
    %cst_90 = arith.constant 0.000000e+00 : f32
    %146 = vector.broadcast %cst_90 : f32 to vector<8x3xf32>
    %c0_91 = arith.constant 0 : index
    %c3984 = arith.constant 3984 : index
    %147 = vector.load %arg3[%c0_91, %c3984] : memref<8x4096xf32, #tpu.memory_space<vmem>>, vector<8x3xf32>
    tpu.vector_store %arg3[%c0_91, %c3984], %146 {strides = array<i32>} : memref<8x4096xf32, #tpu.memory_space<vmem>>, vector<8x3xf32>,
    %c0_92 = arith.constant 0 : index
    %c0_93 = arith.constant 0 : index
    %148 = vector.load %arg3[%c0_92, %c0_93] : memref<8x4096xf32, #tpu.memory_space<vmem>>, vector<8x4096xf32>
    %c112_i32 = arith.constant 112 : i32
    %149 = tpu.dynamic_rotate %148 by %c112_i32 dim 1 : vector<8x4096xf32>, i32 -> vector<8x4096xf32>
    %150 = vector.extract_strided_slice %149 {offsets = [0, 1152], sizes = [8, 2048], strides = [1, 1]} : vector<8x4096xf32> to vector<8x2048xf32>
    %cst_94 = arith.constant 4.17998352E-4 : f32
    %151 = vector.broadcast %cst_94 : f32 to vector<8x2048xf32>
    %152 = arith.mulf %151, %150 : vector<8x2048xf32>
    %153 = arith.addf %137, %152 : vector<8x2048xf32>
    %cst_95 = arith.constant 0.000000e+00 : f32
    %154 = vector.broadcast %cst_95 : f32 to vector<8x3xf32>
    %c0_96 = arith.constant 0 : index
    %c3981 = arith.constant 3981 : index
    %155 = vector.load %arg3[%c0_96, %c3981] : memref<8x4096xf32, #tpu.memory_space<vmem>>, vector<8x3xf32>
    tpu.vector_store %arg3[%c0_96, %c3981], %154 {strides = array<i32>} : memref<8x4096xf32, #tpu.memory_space<vmem>>, vector<8x3xf32>,
    %c0_97 = arith.constant 0 : index
    %c0_98 = arith.constant 0 : index
    %156 = vector.load %arg3[%c0_97, %c0_98] : memref<8x4096xf32, #tpu.memory_space<vmem>>, vector<8x4096xf32>
    %c115_i32 = arith.constant 115 : i32
    %157 = tpu.dynamic_rotate %156 by %c115_i32 dim 1 : vector<8x4096xf32>, i32 -> vector<8x4096xf32>
    %158 = vector.extract_strided_slice %157 {offsets = [0, 896], sizes = [8, 2048], strides = [1, 1]} : vector<8x4096xf32> to vector<8x2048xf32>
    %cst_99 = arith.constant 3.3966059E-4 : f32
    %159 = vector.broadcast %cst_99 : f32 to vector<8x2048xf32>
    %160 = arith.mulf %159, %158 : vector<8x2048xf32>
    %161 = arith.addf %145, %160 : vector<8x2048xf32>
    %cst_100 = arith.constant 0.000000e+00 : f32
    %162 = vector.broadcast %cst_100 : f32 to vector<8x3xf32>
    %c0_101 = arith.constant 0 : index
    %c3978 = arith.constant 3978 : index
    %163 = vector.load %arg3[%c0_101, %c3978] : memref<8x4096xf32, #tpu.memory_space<vmem>>, vector<8x3xf32>
    tpu.vector_store %arg3[%c0_101, %c3978], %162 {strides = array<i32>} : memref<8x4096xf32, #tpu.memory_space<vmem>>, vector<8x3xf32>,
    %c0_102 = arith.constant 0 : index
    %c0_103 = arith.constant 0 : index
    %164 = vector.load %arg3[%c0_102, %c0_103] : memref<8x4096xf32, #tpu.memory_space<vmem>>, vector<8x4096xf32>
    %c118_i32 = arith.constant 118 : i32
    %165 = tpu.dynamic_rotate %164 by %c118_i32 dim 1 : vector<8x4096xf32>, i32 -> vector<8x4096xf32>
    %166 = vector.extract_strided_slice %165 {offsets = [0, 1152], sizes = [8, 2048], strides = [1, 1]} : vector<8x4096xf32> to vector<8x2048xf32>
    %cst_104 = arith.constant 4.12767462E-4 : f32
    %167 = vector.broadcast %cst_104 : f32 to vector<8x2048xf32>
    %168 = arith.mulf %167, %166 : vector<8x2048xf32>
    %169 = arith.addf %153, %168 : vector<8x2048xf32>
    %cst_105 = arith.constant 0.000000e+00 : f32
    %170 = vector.broadcast %cst_105 : f32 to vector<8x2xf32>
    %c0_106 = arith.constant 0 : index
    %c3976 = arith.constant 3976 : index
    %171 = vector.load %arg3[%c0_106, %c3976] : memref<8x4096xf32, #tpu.memory_space<vmem>>, vector<8x2xf32>
    tpu.vector_store %arg3[%c0_106, %c3976], %170 {strides = array<i32>} : memref<8x4096xf32, #tpu.memory_space<vmem>>, vector<8x2xf32>,
    %c0_107 = arith.constant 0 : index
    %c0_108 = arith.constant 0 : index
    %172 = vector.load %arg3[%c0_107, %c0_108] : memref<8x4096xf32, #tpu.memory_space<vmem>>, vector<8x4096xf32>
    %c120_i32 = arith.constant 120 : i32
    %173 = tpu.dynamic_rotate %172 by %c120_i32 dim 1 : vector<8x4096xf32>, i32 -> vector<8x4096xf32>
    %174 = vector.extract_strided_slice %173 {offsets = [0, 384], sizes = [8, 2048], strides = [1, 1]} : vector<8x4096xf32> to vector<8x2048xf32>
    %cst_109 = arith.constant 2.24495438E-4 : f32
    %175 = vector.broadcast %cst_109 : f32 to vector<8x2048xf32>
    %176 = arith.mulf %175, %174 : vector<8x2048xf32>
    %177 = arith.addf %161, %176 : vector<8x2048xf32>
    %cst_110 = arith.constant 0.000000e+00 : f32
    %178 = vector.broadcast %cst_110 : f32 to vector<8x2xf32>
    %c0_111 = arith.constant 0 : index
    %c3974 = arith.constant 3974 : index
    %179 = vector.load %arg3[%c0_111, %c3974] : memref<8x4096xf32, #tpu.memory_space<vmem>>, vector<8x2xf32>
    tpu.vector_store %arg3[%c0_111, %c3974], %178 {strides = array<i32>} : memref<8x4096xf32, #tpu.memory_space<vmem>>, vector<8x2xf32>,
    %c0_112 = arith.constant 0 : index
    %c0_113 = arith.constant 0 : index
    %180 = vector.load %arg3[%c0_112, %c0_113] : memref<8x4096xf32, #tpu.memory_space<vmem>>, vector<8x4096xf32>
    %c122_i32 = arith.constant 122 : i32
    %181 = tpu.dynamic_rotate %180 by %c122_i32 dim 1 : vector<8x4096xf32>, i32 -> vector<8x4096xf32>
    %182 = vector.extract_strided_slice %181 {offsets = [0, 1408], sizes = [8, 2048], strides = [1, 1]} : vector<8x4096xf32> to vector<8x2048xf32>
    %cst_114 = arith.constant 5.01278788E-4 : f32
    %183 = vector.broadcast %cst_114 : f32 to vector<8x2048xf32>
    %184 = arith.mulf %183, %182 : vector<8x2048xf32>
    %185 = arith.addf %169, %184 : vector<8x2048xf32>
    %186 = arith.addf %177, %185 : vector<8x2048xf32>
    %c0_115 = arith.constant 0 : index
    %c0_116 = arith.constant 0 : index
    %187 = vector.load %arg2[%c0_115, %c0_116] : memref<8x2048xf32, #tpu.memory_space<vmem>>, vector<8x2048xf32>
    tpu.vector_store %arg2[%c0_115, %c0_116], %186 {strides = array<i32>} : memref<8x2048xf32, #tpu.memory_space<vmem>>, vector<8x2048xf32>,
    return
  }
  func.func @transform_0(%arg0: i32) -> (i32, i32) {
    %c0_i32 = arith.constant 0 : i32
    %c0_i32_0 = arith.constant 0 : i32
    return %arg0, %c0_i32 : i32, i32
  }
  func.func @transform_1(%arg0: i32) -> (i32, i32) {
    %c0_i32 = arith.constant 0 : i32
    %c0_i32_0 = arith.constant 0 : i32
    return %arg0, %c0_i32 : i32, i32
  }
}

</mosaic_0001>

<llo_original>
// kernel: tpu_custom_call.1
$region0: #{tpu_custom_call.1}
  #allocation0 [shape = 'u32[]', space=smem, size = 0x4, offset = 0x4, fixed_abs, tag = 'smem constant byte address 0x4 - core index']
  #allocation1 [shape = 'u32[144,128]{1,0:T(1,128)}', space=vmem, size = 0x12000, scoped, tag = 'internal scratch']
  #allocation2 [shape = 'f32[8,4096]{1,0:T(8,128)}', space=vmem, size = 0x20000, scoped, tag = 'scratch operand']
  %s0 = inlined_call_operand.hbm [shape: f32[16,2048], index: 0, kind: input, shape index: {}, may-alias: {0,1}]
  %s1 = inlined_call_operand.hbm [shape: f32[16,2048], index: 1, kind: output, shape index: {}, may-alias: {0,1}]
  %s2 = sld [smem:[#allocation0]]
  $region41: #{tpu_custom_call.1} parent=0
    _
  %s4 = ssub.s32 1, %s2
  %s5 = scalar_select 0, %s4, %s2
  $region1: #{tpu_custom_call.1} parent=0
    #allocation3 [shape = 'u8[131072]{0}', space=vmem, size = 0x20000, scoped, tag = 'input window, operand 0']
    #allocation4 [shape = 's32[2]{0}', space=sflag, size = 0x8, scoped, tag = 'scoped memory for tpu_custom_call.1']
    #allocation5 [shape = 's32[2]{0}', space=sflag, size = 0x8, scoped, tag = 'scoped memory for tpu_custom_call.1']
    #allocation6 [shape = 'u8[131072]{0}', space=vmem, size = 0x20000, scoped, tag = 'output window, operand 0']
    %6 = vsyncpa [#allocation4], 0
    %s7 = scalar_lea.sflag [#allocation4], 1
    %8 = vsyncpa %s7, 0
    %9 = vsyncpa [#allocation5], 0
    %s10 = scalar_lea.sflag [#allocation5], 1
    %11 = vsyncpa %s10, 0
    loop: start=0, step=1, limit=4
    $region2: #{tpu_custom_call.1} parent=1 // loop_pre_header
      _
    $region3: #{tpu_custom_call.1} parent=1 // loop_header
      %s13 = sphi 0, %s17
      %p14 = scmp.ge.s32.totalorder %s13, 4
      %s23 = sphi 0, %s25
      %s26 = sphi 0, %s23
      %s27 = sphi 0, %s26
      %s43 = sphi 0, %s27
      %s49 = sphi 0, %s51
      %s52 = sphi 0, %s49
      %s53 = sphi 0, %s52
      %s69 = sphi 0, %s53
    $region4: #{tpu_custom_call.1} parent=1 // loop_header_branch
      %16 = sbr.rel (%p14) target = $region8
    $region5: #{tpu_custom_call.1} parent=1 // loop_body
      %s18 = ssub.s32 %s13, 1
      %s19 = ssub.s32 %s13, 2
      %s20 = sadd.s32 %s13, 1
      %s21 = ssub.s32 %s13, %s20
      %p22 = scmp.eq.s32.totalorder %s21, 0
      %s24 = sadd.s32 %s23, 1
      %s25 = scalar_select %p22, %s23, %s24
      %p28 = pneg %p22
      %p29 = scmp.eq.s32.totalorder %s13, 1
      %p30 = por %p28, %p29
      %p31 = scmp.ne.s32.totalorder %s23, %s26
      %p32 = scmp.eq.s32.totalorder %s13, 0
      %p33 = por %p31, %p32
      %p34 = scmp.ne.s32.totalorder %s23, %s26
      %p35 = scmp.eq.s32.totalorder %s18, 1
      %p36 = por %p34, %p35
      %p37 = scmp.ne.s32.totalorder %s26, %s27
      %p38 = scmp.eq.s32.totalorder %s18, 0
      %p39 = por %p37, %p38
      %p40 = scmp.ne.s32.totalorder %s26, %s27
      %p41 = scmp.eq.s32.totalorder %s19, 1
      %p42 = por %p40, %p41
      %p44 = scmp.ne.s32.totalorder %s27, %s43
      %p45 = scmp.eq.s32.totalorder %s19, 0
      %p46 = por %p44, %p45
      %s47 = ssub.s32 %s13, %s20
      %p48 = scmp.eq.s32.totalorder %s47, 0
      %s50 = sadd.s32 %s49, 1
      %s51 = scalar_select %p48, %s49, %s50
      %p54 = pneg %p48
      %p55 = scmp.eq.s32.totalorder %s13, 1
      %p56 = por %p54, %p55
      %p57 = scmp.ne.s32.totalorder %s49, %s52
      %p58 = scmp.eq.s32.totalorder %s13, 0
      %p59 = por %p57, %p58
      %p60 = scmp.ne.s32.totalorder %s49, %s52
      %p61 = scmp.eq.s32.totalorder %s18, 1
      %p62 = por %p60, %p61
      %p63 = scmp.ne.s32.totalorder %s52, %s53
      %p64 = scmp.eq.s32.totalorder %s18, 0
      %p65 = por %p63, %p64
      %p66 = scmp.ne.s32.totalorder %s52, %s53
      %p67 = scmp.eq.s32.totalorder %s19, 1
      %p68 = por %p66, %p67
      %p70 = scmp.ne.s32.totalorder %s53, %s69
      %p71 = scmp.eq.s32.totalorder %s19, 0
      %p72 = por %p70, %p71
      %p73 = scmp.le.s32.totalorder 1, %s13
      %p74 = scmp.lt.s32.totalorder %s13, 3
      %p75 = pnand %p73, %p74
      %p76 = pneg %p75
      // Predicated region
      $region9: #{tpu_custom_call.1} parent=5 // pred_check
        _
      $region10: #{tpu_custom_call.1} parent=5 // pred_check_branch
        %78 = sbr.rel (%p75) target = $region12
      $region11: #{tpu_custom_call.1} parent=5 // pred_region
        %s79 = ssub.s32 %s13, 1
      $region12: #{tpu_custom_call.1} parent=5 // pred_fallthru
        _
      %p80 = scmp.lt.s32.totalorder %s13, 2
      // Predicated region
      $region13: #{tpu_custom_call.1} parent=5 // pred_check
        %p81 = pneg %p80
      $region14: #{tpu_custom_call.1} parent=5 // pred_check_branch
        %83 = sbr.rel (%p81) target = $region16
      $region15: #{tpu_custom_call.1} parent=5 // pred_region
        // Predicated region
        $region17: #{tpu_custom_call.1} parent=15 // pred_check
          %p84 = pneg %p33
        $region18: #{tpu_custom_call.1} parent=15 // pred_check_branch
          %86 = sbr.rel (%p84) target = $region20
        $region19: #{tpu_custom_call.1} parent=15 // pred_region
          %s87 = sand.u32 %s23, 1
          %s88 = scalar_lea.sflag [#allocation4], %s87
          %s89 = sand.u32 %s23, 1
          %s90 = smul.addr %s89, 128
          %s91 = scalar_lea.vmem [#allocation3], %s90
          %s93 = ssub.s32 2048, 2048
          %94 = vsyncadd %s88, %s93
          %s95 = smul.addr %s13, 16
          %s96 = smul.addr %s95, 128
          %s97 = scalar_lea.hbm %s0, %s96
          %s99 = sshll.u32 %s91, 4
          %s100 = int_to_ptr.vmem [resolvable:$true] %s99
          %102 = dma.hbm_to_vmem [thread:$0]  %s97, 2048, %s100, %s88
        $region20: #{tpu_custom_call.1} parent=15 // pred_fallthru
          _
      $region16: #{tpu_custom_call.1} parent=5 // pred_fallthru
        _
      %p103 = scmp.le.s32.totalorder 1, %s13
      %p104 = scmp.lt.s32.totalorder %s13, 3
      %p105 = pnand %p103, %p104
      %p106 = pneg %p105
      // Predicated region
      $region21: #{tpu_custom_call.1} parent=5 // pred_check
        _
      $region22: #{tpu_custom_call.1} parent=5 // pred_check_branch
        %108 = sbr.rel (%p105) target = $region24
      $region23: #{tpu_custom_call.1} parent=5 // pred_region
        %s109 = ssub.s32 %s13, 1
        %s110 = sand.u32 %s26, 1
        %s111 = scalar_lea.sflag [#allocation4], %s110
        %s112 = sand.u32 %s26, 1
        %s113 = smul.addr %s112, 128
        %s114 = scalar_lea.vmem [#allocation3], %s113
        // Predicated region
        $region25: #{tpu_custom_call.1} parent=23 // pred_check
          %p115 = pneg %p39
        $region26: #{tpu_custom_call.1} parent=23 // pred_check_branch
          %117 = sbr.rel (%p115) target = $region28
        $region27: #{tpu_custom_call.1} parent=23 // pred_region
          %118 = dma.done %s111, 2048
        $region28: #{tpu_custom_call.1} parent=23 // pred_fallthru
          _
        %s119 = sand.u32 %s26, 1
        %s120 = scalar_lea.sflag [#allocation4], %s119
        %s121 = sand.u32 %s26, 1
        %s122 = smul.addr %s121, 128
        %s123 = scalar_lea.vmem [#allocation3], %s122
        %p124 = pneg %p39
        %p125 = pneg %p36
        %p126 = pneg %p65
        %p127 = pneg %p62
        %s128 = sand.u32 %s52, 1
        %s129 = scalar_lea.sflag [#allocation5], %s128
        %s130 = sand.u32 %s52, 1
        %s131 = smul.addr %s130, 128
        %s132 = scalar_lea.vmem [#allocation6], %s131
        %v133 = vld [vmem:[%s114] sm:$0xff]
        %v134 = vld [vmem:[%s114 + $0x8] sm:$0xff]
        %v135 = vld [vmem:[%s114 + $0x10] sm:$0xff]
        %v136 = vld [vmem:[%s114 + $0x18] sm:$0xff]
        %v137 = vld [vmem:[%s114 + $0x20] sm:$0xff]
        %v138 = vld [vmem:[%s114 + $0x28] sm:$0xff]
        %v139 = vld [vmem:[%s114 + $0x30] sm:$0xff]
        %v140 = vld [vmem:[%s114 + $0x38] sm:$0xff]
        %v141 = vld [vmem:[%s114 + $0x40] sm:$0xff]
        %v142 = vld [vmem:[%s114 + $0x48] sm:$0xff]
        %v143 = vld [vmem:[%s114 + $0x50] sm:$0xff]
        %v144 = vld [vmem:[%s114 + $0x58] sm:$0xff]
        %v145 = vld [vmem:[%s114 + $0x60] sm:$0xff]
        %v146 = vld [vmem:[%s114 + $0x68] sm:$0xff]
        %v147 = vld [vmem:[%s114 + $0x70] sm:$0xff]
        %v148 = vld [vmem:[%s114 + $0x78] sm:$0xff]
        %149 = vst [vmem:[#allocation2] sm:$0xff] 0.0
        %150 = vst [vmem:[#allocation2 + $0x8] sm:$0xff] 0.0
        %151 = vst [vmem:[#allocation2 + $0x10] sm:$0xff] 0.0
        %152 = vst [vmem:[#allocation2 + $0x18] sm:$0xff] 0.0
        %153 = vst [vmem:[#allocation2 + $0x20] sm:$0xff] 0.0
        %154 = vst [vmem:[#allocation2 + $0x28] sm:$0xff] 0.0
        %155 = vst [vmem:[#allocation2 + $0x30] sm:$0xff] 0.0
        %156 = vst [vmem:[#allocation2 + $0x38] sm:$0xff] 0.0
        %157 = vst [vmem:[#allocation2 + $0x40] sm:$0xff] 0.0
        %158 = vst [vmem:[#allocation2 + $0x48] sm:$0xff] 0.0
        %159 = vst [vmem:[#allocation2 + $0x50] sm:$0xff] 0.0
        %160 = vst [vmem:[#allocation2 + $0x58] sm:$0xff] 0.0
        %161 = vst [vmem:[#allocation2 + $0x60] sm:$0xff] 0.0
        %162 = vst [vmem:[#allocation2 + $0x68] sm:$0xff] 0.0
        %163 = vst [vmem:[#allocation2 + $0x70] sm:$0xff] 0.0
        %164 = vst [vmem:[#allocation2 + $0x78] sm:$0xff] 0.0
        %165 = vst [vmem:[#allocation2 + $0x80] sm:$0xff] %v133
        %166 = vst [vmem:[#allocation2 + $0x88] sm:$0xff] %v134
        %167 = vst [vmem:[#allocation2 + $0x90] sm:$0xff] %v135
        %168 = vst [vmem:[#allocation2 + $0x98] sm:$0xff] %v136
        %169 = vst [vmem:[#allocation2 + $0xa0] sm:$0xff] %v137
        %170 = vst [vmem:[#allocation2 + $0xa8] sm:$0xff] %v138
        %171 = vst [vmem:[#allocation2 + $0xb0] sm:$0xff] %v139
        %172 = vst [vmem:[#allocation2 + $0xb8] sm:$0xff] %v140
        %173 = vst [vmem:[#allocation2 + $0xc0] sm:$0xff] %v141
        %174 = vst [vmem:[#allocation2 + $0xc8] sm:$0xff] %v142
        %175 = vst [vmem:[#allocation2 + $0xd0] sm:$0xff] %v143
        %176 = vst [vmem:[#allocation2 + $0xd8] sm:$0xff] %v144
        %177 = vst [vmem:[#allocation2 + $0xe0] sm:$0xff] %v145
        %178 = vst [vmem:[#allocation2 + $0xe8] sm:$0xff] %v146
        %179 = vst [vmem:[#allocation2 + $0xf0] sm:$0xff] %v147
        %180 = vst [vmem:[#allocation2 + $0xf8] sm:$0xff] %v148
        %v181 = vld [vmem:[#allocation2 + $0x70] sm:$0xff]
        %v182 = vld [vmem:[#allocation2 + $0x78] sm:$0xff]
        %v183 = vld [vmem:[#allocation2 + $0x80] sm:$0xff]
        %v184 = vld [vmem:[#allocation2 + $0x88] sm:$0xff]
        %v185 = vld [vmem:[#allocation2 + $0x90] sm:$0xff]
        %v186 = vld [vmem:[#allocation2 + $0x98] sm:$0xff]
        %v187 = vld [vmem:[#allocation2 + $0xa0] sm:$0xff]
        %v188 = vld [vmem:[#allocation2 + $0xa8] sm:$0xff]
        %v189 = vld [vmem:[#allocation2 + $0xb0] sm:$0xff]
        %v190 = vld [vmem:[#allocation2 + $0xb8] sm:$0xff]
        %v191 = vld [vmem:[#allocation2 + $0xc0] sm:$0xff]
        %v192 = vld [vmem:[#allocation2 + $0xc8] sm:$0xff]
        %v193 = vld [vmem:[#allocation2 + $0xd0] sm:$0xff]
        %v194 = vld [vmem:[#allocation2 + $0xd8] sm:$0xff]
        %v195 = vld [vmem:[#allocation2 + $0xe0] sm:$0xff]
        %v196 = vld [vmem:[#allocation2 + $0xe8] sm:$0xff]
        %v197 = vmul.f32 %v181, 0.00075032265
        %v198 = vmul.f32 %v182, 0.00075032265
        %v199 = vmul.f32 %v183, 0.00075032265
        %v200 = vmul.f32 %v184, 0.00075032265
        %v201 = vmul.f32 %v185, 0.00075032265
        %v202 = vmul.f32 %v186, 0.00075032265
        %v203 = vmul.f32 %v187, 0.00075032265
        %v204 = vmul.f32 %v188, 0.00075032265
        %v205 = vmul.f32 %v189, 0.00075032265
        %v206 = vmul.f32 %v190, 0.00075032265
        %v207 = vmul.f32 %v191, 0.00075032265
        %v208 = vmul.f32 %v192, 0.00075032265
        %v209 = vmul.f32 %v193, 0.00075032265
        %v210 = vmul.f32 %v194, 0.00075032265
        %v211 = vmul.f32 %v195, 0.00075032265
        %v212 = vmul.f32 %v196, 0.00075032265
        %v213 = vadd.f32 %v133, %v197
        %v214 = vadd.f32 %v134, %v198
        %v215 = vadd.f32 %v135, %v199
        %v216 = vadd.f32 %v136, %v200
        %v217 = vadd.f32 %v137, %v201
        %v218 = vadd.f32 %v138, %v202
        %v219 = vadd.f32 %v139, %v203
        %v220 = vadd.f32 %v140, %v204
        %v221 = vadd.f32 %v141, %v205
        %v222 = vadd.f32 %v142, %v206
        %v223 = vadd.f32 %v143, %v207
        %v224 = vadd.f32 %v144, %v208
        %v225 = vadd.f32 %v145, %v209
        %v226 = vadd.f32 %v146, %v210
        %v227 = vadd.f32 %v147, %v211
        %v228 = vadd.f32 %v148, %v212
        %vm229 = vcmask 1048544
        %230 = vst.msk [vmem:[#allocation2 + $0xf8] sm:$0xff] %vm229, 0.0
        %v231 = vld [vmem:[#allocation2 + $0x68] sm:$0xff]
        %v232 = vld [vmem:[#allocation2 + $0x70] sm:$0xff]
        %v233 = vld [vmem:[#allocation2 + $0x78] sm:$0xff]
        %v234 = vld [vmem:[#allocation2 + $0x80] sm:$0xff]
        %v235 = vld [vmem:[#allocation2 + $0x88] sm:$0xff]
        %v236 = vld [vmem:[#allocation2 + $0x90] sm:$0xff]
        %v237 = vld [vmem:[#allocation2 + $0x98] sm:$0xff]
        %v238 = vld [vmem:[#allocation2 + $0xa0] sm:$0xff]
        %v239 = vld [vmem:[#allocation2 + $0xa8] sm:$0xff]
        %v240 = vld [vmem:[#allocation2 + $0xb0] sm:$0xff]
        %v241 = vld [vmem:[#allocation2 + $0xb8] sm:$0xff]
        %v242 = vld [vmem:[#allocation2 + $0xc0] sm:$0xff]
        %v243 = vld [vmem:[#allocation2 + $0xc8] sm:$0xff]
        %v244 = vld [vmem:[#allocation2 + $0xd0] sm:$0xff]
        %v245 = vld [vmem:[#allocation2 + $0xd8] sm:$0xff]
        %v246 = vld [vmem:[#allocation2 + $0xe0] sm:$0xff]
        %v247 = vld [vmem:[#allocation2 + $0xe8] sm:$0xff]
        %248 = vrot.lane.b32.xlu0 %v231, 4
        %v249 = vpop.permute.xlu0 %248
        %250 = vrot.lane.b32.xlu0 %v232, 4
        %v251 = vpop.permute.xlu0 %250
        %252 = vrot.lane.b32.xlu0 %v233, 4
        %v253 = vpop.permute.xlu0 %252
        %254 = vrot.lane.b32.xlu0 %v234, 4
        %v255 = vpop.permute.xlu0 %254
        %256 = vrot.lane.b32.xlu0 %v235, 4
        %v257 = vpop.permute.xlu0 %256
        %258 = vrot.lane.b32.xlu0 %v236, 4
        %v259 = vpop.permute.xlu0 %258
        %260 = vrot.lane.b32.xlu0 %v237, 4
        %v261 = vpop.permute.xlu0 %260
        %262 = vrot.lane.b32.xlu0 %v238, 4
        %v263 = vpop.permute.xlu0 %262
        %264 = vrot.lane.b32.xlu0 %v239, 4
        %v265 = vpop.permute.xlu0 %264
        %266 = vrot.lane.b32.xlu0 %v240, 4
        %v267 = vpop.permute.xlu0 %266
        %268 = vrot.lane.b32.xlu0 %v241, 4
        %v269 = vpop.permute.xlu0 %268
        %270 = vrot.lane.b32.xlu0 %v242, 4
        %v271 = vpop.permute.xlu0 %270
        %272 = vrot.lane.b32.xlu0 %v243, 4
        %v273 = vpop.permute.xlu0 %272
        %274 = vrot.lane.b32.xlu0 %v244, 4
        %v275 = vpop.permute.xlu0 %274
        %276 = vrot.lane.b32.xlu0 %v245, 4
        %v277 = vpop.permute.xlu0 %276
        %278 = vrot.lane.b32.xlu0 %v246, 4
        %v279 = vpop.permute.xlu0 %278
        %280 = vrot.lane.b32.xlu0 %v247, 4
        %v281 = vpop.permute.xlu0 %280
        %v282 = vlaneseq
        %v283 = vand.u32 %v282, 127
        %vm284 = vcmp.lt.s32.totalorder %v283, 4
        %v285 = vsel %vm284, %v279, %v281
        %v286 = vsel %vm284, %v277, %v279
        %v287 = vsel %vm284, %v275, %v277
        %v288 = vsel %vm284, %v273, %v275
        %v289 = vsel %vm284, %v271, %v273
        %v290 = vsel %vm284, %v269, %v271
        %v291 = vsel %vm284, %v267, %v269
        %v292 = vsel %vm284, %v265, %v267
        %v293 = vsel %vm284, %v263, %v265
        %v294 = vsel %vm284, %v261, %v263
        %v295 = vsel %vm284, %v259, %v261
        %v296 = vsel %vm284, %v257, %v259
        %v297 = vsel %vm284, %v255, %v257
        %v298 = vsel %vm284, %v253, %v255
        %v299 = vsel %vm284, %v251, %v253
        %v300 = vsel %vm284, %v249, %v251
        %v301 = vmul.f32 %v300, 0.00075032265
        %v302 = vmul.f32 %v299, 0.00075032265
        %v303 = vmul.f32 %v298, 0.00075032265
        %v304 = vmul.f32 %v297, 0.00075032265
        %v305 = vmul.f32 %v296, 0.00075032265
        %v306 = vmul.f32 %v295, 0.00075032265
        %v307 = vmul.f32 %v294, 0.00075032265
        %v308 = vmul.f32 %v293, 0.00075032265
        %v309 = vmul.f32 %v292, 0.00075032265
        %v310 = vmul.f32 %v291, 0.00075032265
        %v311 = vmul.f32 %v290, 0.00075032265
        %v312 = vmul.f32 %v289, 0.00075032265
        %v313 = vmul.f32 %v288, 0.00075032265
        %v314 = vmul.f32 %v287, 0.00075032265
        %v315 = vmul.f32 %v286, 0.00075032265
        %v316 = vmul.f32 %v285, 0.00075032265
        %v317 = vadd.f32 %v301, 0.0
        %v318 = vadd.f32 %v302, 0.0
        %v319 = vadd.f32 %v303, 0.0
        %v320 = vadd.f32 %v304, 0.0
        %v321 = vadd.f32 %v305, 0.0
        %v322 = vadd.f32 %v306, 0.0
        %v323 = vadd.f32 %v307, 0.0
        %v324 = vadd.f32 %v308, 0.0
        %v325 = vadd.f32 %v309, 0.0
        %v326 = vadd.f32 %v310, 0.0
        %v327 = vadd.f32 %v311, 0.0
        %v328 = vadd.f32 %v312, 0.0
        %v329 = vadd.f32 %v313, 0.0
        %v330 = vadd.f32 %v314, 0.0
        %v331 = vadd.f32 %v315, 0.0
        %v332 = vadd.f32 %v316, 0.0
        %vm333 = vcmask 1015768
        %334 = vst.msk [vmem:[#allocation2 + $0xf8] sm:$0xff] %vm333, 0.0
        %v335 = vld [vmem:[#allocation2 + $0x48] sm:$0xff]
        %v336 = vld [vmem:[#allocation2 + $0x50] sm:$0xff]
        %v337 = vld [vmem:[#allocation2 + $0x58] sm:$0xff]
        %v338 = vld [vmem:[#allocation2 + $0x60] sm:$0xff]
        %v339 = vld [vmem:[#allocation2 + $0x68] sm:$0xff]
        %v340 = vld [vmem:[#allocation2 + $0x70] sm:$0xff]
        %v341 = vld [vmem:[#allocation2 + $0x78] sm:$0xff]
        %v342 = vld [vmem:[#allocation2 + $0x80] sm:$0xff]
        %v343 = vld [vmem:[#allocation2 + $0x88] sm:$0xff]
        %v344 = vld [vmem:[#allocation2 + $0x90] sm:$0xff]
        %v345 = vld [vmem:[#allocation2 + $0x98] sm:$0xff]
        %v346 = vld [vmem:[#allocation2 + $0xa0] sm:$0xff]
        %v347 = vld [vmem:[#allocation2 + $0xa8] sm:$0xff]
        %v348 = vld [vmem:[#allocation2 + $0xb0] sm:$0xff]
        %v349 = vld [vmem:[#allocation2 + $0xb8] sm:$0xff]
        %v350 = vld [vmem:[#allocation2 + $0xc0] sm:$0xff]
        %v351 = vld [vmem:[#allocation2 + $0xc8] sm:$0xff]
        %352 = vrot.lane.b32.xlu0 %v335, 5
        %v353 = vpop.permute.xlu0 %352
        %354 = vrot.lane.b32.xlu0 %v336, 5
        %v355 = vpop.permute.xlu0 %354
        %356 = vrot.lane.b32.xlu0 %v337, 5
        %v357 = vpop.permute.xlu0 %356
        %358 = vrot.lane.b32.xlu0 %v338, 5
        %v359 = vpop.permute.xlu0 %358
        %360 = vrot.lane.b32.xlu0 %v339, 5
        %v361 = vpop.permute.xlu0 %360
        %362 = vrot.lane.b32.xlu0 %v340, 5
        %v363 = vpop.permute.xlu0 %362
        %364 = vrot.lane.b32.xlu0 %v341, 5
        %v365 = vpop.permute.xlu0 %364
        %366 = vrot.lane.b32.xlu0 %v342, 5
        %v367 = vpop.permute.xlu0 %366
        %368 = vrot.lane.b32.xlu0 %v343, 5
        %v369 = vpop.permute.xlu0 %368
        %370 = vrot.lane.b32.xlu0 %v344, 5
        %v371 = vpop.permute.xlu0 %370
        %372 = vrot.lane.b32.xlu0 %v345, 5
        %v373 = vpop.permute.xlu0 %372
        %374 = vrot.lane.b32.xlu0 %v346, 5
        %v375 = vpop.permute.xlu0 %374
        %376 = vrot.lane.b32.xlu0 %v347, 5
        %v377 = vpop.permute.xlu0 %376
        %378 = vrot.lane.b32.xlu0 %v348, 5
        %v379 = vpop.permute.xlu0 %378
        %380 = vrot.lane.b32.xlu0 %v349, 5
        %v381 = vpop.permute.xlu0 %380
        %382 = vrot.lane.b32.xlu0 %v350, 5
        %v383 = vpop.permute.xlu0 %382
        %384 = vrot.lane.b32.xlu0 %v351, 5
        %v385 = vpop.permute.xlu0 %384
        %vm386 = vcmp.lt.s32.totalorder %v283, 5
        %v387 = vsel %vm386, %v383, %v385
        %v388 = vsel %vm386, %v381, %v383
        %v389 = vsel %vm386, %v379, %v381
        %v390 = vsel %vm386, %v377, %v379
        %v391 = vsel %vm386, %v375, %v377
        %v392 = vsel %vm386, %v373, %v375
        %v393 = vsel %vm386, %v371, %v373
        %v394 = vsel %vm386, %v369, %v371
        %v395 = vsel %vm386, %v367, %v369
        %v396 = vsel %vm386, %v365, %v367
        %v397 = vsel %vm386, %v363, %v365
        %v398 = vsel %vm386, %v361, %v363
        %v399 = vsel %vm386, %v359, %v361
        %v400 = vsel %vm386, %v357, %v359
        %v401 = vsel %vm386, %v355, %v357
        %v402 = vsel %vm386, %v353, %v355
        %v403 = vmul.f32 %v402, 0.00050314615
        %v404 = vmul.f32 %v401, 0.00050314615
        %v405 = vmul.f32 %v400, 0.00050314615
        %v406 = vmul.f32 %v399, 0.00050314615
        %v407 = vmul.f32 %v398, 0.00050314615
        %v408 = vmul.f32 %v397, 0.00050314615
        %v409 = vmul.f32 %v396, 0.00050314615
        %v410 = vmul.f32 %v395, 0.00050314615
        %v411 = vmul.f32 %v394, 0.00050314615
        %v412 = vmul.f32 %v393, 0.00050314615
        %v413 = vmul.f32 %v392, 0.00050314615
        %v414 = vmul.f32 %v391, 0.00050314615
        %v415 = vmul.f32 %v390, 0.00050314615
        %v416 = vmul.f32 %v389, 0.00050314615
        %v417 = vmul.f32 %v388, 0.00050314615
        %v418 = vmul.f32 %v387, 0.00050314615
        %v419 = vadd.f32 %v213, %v403
        %v420 = vadd.f32 %v214, %v404
        %v421 = vadd.f32 %v215, %v405
        %v422 = vadd.f32 %v216, %v406
        %v423 = vadd.f32 %v217, %v407
        %v424 = vadd.f32 %v218, %v408
        %v425 = vadd.f32 %v219, %v409
        %v426 = vadd.f32 %v220, %v410
        %v427 = vadd.f32 %v221, %v411
        %v428 = vadd.f32 %v222, %v412
        %v429 = vadd.f32 %v223, %v413
        %v430 = vadd.f32 %v224, %v414
        %v431 = vadd.f32 %v225, %v415
        %v432 = vadd.f32 %v226, %v416
        %v433 = vadd.f32 %v227, %v417
        %v434 = vadd.f32 %v228, %v418
        %vm435 = vcmask 1007512
        %436 = vst.msk [vmem:[#allocation2 + $0xf8] sm:$0xff] %vm435, 0.0
        %v437 = vld [vmem:[#allocation2 + $0x58] sm:$0xff]
        %v438 = vld [vmem:[#allocation2 + $0x60] sm:$0xff]
        %v439 = vld [vmem:[#allocation2 + $0x68] sm:$0xff]
        %v440 = vld [vmem:[#allocation2 + $0x70] sm:$0xff]
        %v441 = vld [vmem:[#allocation2 + $0x78] sm:$0xff]
        %v442 = vld [vmem:[#allocation2 + $0x80] sm:$0xff]
        %v443 = vld [vmem:[#allocation2 + $0x88] sm:$0xff]
        %v444 = vld [vmem:[#allocation2 + $0x90] sm:$0xff]
        %v445 = vld [vmem:[#allocation2 + $0x98] sm:$0xff]
        %v446 = vld [vmem:[#allocation2 + $0xa0] sm:$0xff]
        %v447 = vld [vmem:[#allocation2 + $0xa8] sm:$0xff]
        %v448 = vld [vmem:[#allocation2 + $0xb0] sm:$0xff]
        %v449 = vld [vmem:[#allocation2 + $0xb8] sm:$0xff]
        %v450 = vld [vmem:[#allocation2 + $0xc0] sm:$0xff]
        %v451 = vld [vmem:[#allocation2 + $0xc8] sm:$0xff]
        %v452 = vld [vmem:[#allocation2 + $0xd0] sm:$0xff]
        %v453 = vld [vmem:[#allocation2 + $0xd8] sm:$0xff]
        %454 = vrot.lane.b32.xlu0 %v437, 13
        %v455 = vpop.permute.xlu0 %454
        %456 = vrot.lane.b32.xlu0 %v438, 13
        %v457 = vpop.permute.xlu0 %456
        %458 = vrot.lane.b32.xlu0 %v439, 13
        %v459 = vpop.permute.xlu0 %458
        %460 = vrot.lane.b32.xlu0 %v440, 13
        %v461 = vpop.permute.xlu0 %460
        %462 = vrot.lane.b32.xlu0 %v441, 13
        %v463 = vpop.permute.xlu0 %462
        %464 = vrot.lane.b32.xlu0 %v442, 13
        %v465 = vpop.permute.xlu0 %464
        %466 = vrot.lane.b32.xlu0 %v443, 13
        %v467 = vpop.permute.xlu0 %466
        %468 = vrot.lane.b32.xlu0 %v444, 13
        %v469 = vpop.permute.xlu0 %468
        %470 = vrot.lane.b32.xlu0 %v445, 13
        %v471 = vpop.permute.xlu0 %470
        %472 = vrot.lane.b32.xlu0 %v446, 13
        %v473 = vpop.permute.xlu0 %472
        %474 = vrot.lane.b32.xlu0 %v447, 13
        %v475 = vpop.permute.xlu0 %474
        %476 = vrot.lane.b32.xlu0 %v448, 13
        %v477 = vpop.permute.xlu0 %476
        %478 = vrot.lane.b32.xlu0 %v449, 13
        %v479 = vpop.permute.xlu0 %478
        %480 = vrot.lane.b32.xlu0 %v450, 13
        %v481 = vpop.permute.xlu0 %480
        %482 = vrot.lane.b32.xlu0 %v451, 13
        %v483 = vpop.permute.xlu0 %482
        %484 = vrot.lane.b32.xlu0 %v452, 13
        %v485 = vpop.permute.xlu0 %484
        %486 = vrot.lane.b32.xlu0 %v453, 13
        %v487 = vpop.permute.xlu0 %486
        %vm488 = vcmp.lt.s32.totalorder %v283, 13
        %v489 = vsel %vm488, %v485, %v487
        %v490 = vsel %vm488, %v483, %v485
        %v491 = vsel %vm488, %v481, %v483
        %v492 = vsel %vm488, %v479, %v481
        %v493 = vsel %vm488, %v477, %v479
        %v494 = vsel %vm488, %v475, %v477
        %v495 = vsel %vm488, %v473, %v475
        %v496 = vsel %vm488, %v471, %v473
        %v497 = vsel %vm488, %v469, %v471
        %v498 = vsel %vm488, %v467, %v469
        %v499 = vsel %vm488, %v465, %v467
        %v500 = vsel %vm488, %v463, %v465
        %v501 = vsel %vm488, %v461, %v463
        %v502 = vsel %vm488, %v459, %v461
        %v503 = vsel %vm488, %v457, %v459
        %v504 = vsel %vm488, %v455, %v457
        %v505 = vmul.f32 %v504, 0.00061408087
        %v506 = vmul.f32 %v503, 0.00061408087
        %v507 = vmul.f32 %v502, 0.00061408087
        %v508 = vmul.f32 %v501, 0.00061408087
        %v509 = vmul.f32 %v500, 0.00061408087
        %v510 = vmul.f32 %v499, 0.00061408087
        %v511 = vmul.f32 %v498, 0.00061408087
        %v512 = vmul.f32 %v497, 0.00061408087
        %v513 = vmul.f32 %v496, 0.00061408087
        %v514 = vmul.f32 %v495, 0.00061408087
        %v515 = vmul.f32 %v494, 0.00061408087
        %v516 = vmul.f32 %v493, 0.00061408087
        %v517 = vmul.f32 %v492, 0.00061408087
        %v518 = vmul.f32 %v491, 0.00061408087
        %v519 = vmul.f32 %v490, 0.00061408087
        %v520 = vmul.f32 %v489, 0.00061408087
        %v521 = vadd.f32 %v317, %v505
        %v522 = vadd.f32 %v318, %v506
        %v523 = vadd.f32 %v319, %v507
        %v524 = vadd.f32 %v320, %v508
        %v525 = vadd.f32 %v321, %v509
        %v526 = vadd.f32 %v322, %v510
        %v527 = vadd.f32 %v323, %v511
        %v528 = vadd.f32 %v324, %v512
        %v529 = vadd.f32 %v325, %v513
        %v530 = vadd.f32 %v326, %v514
        %v531 = vadd.f32 %v327, %v515
        %v532 = vadd.f32 %v328, %v516
        %v533 = vadd.f32 %v329, %v517
        %v534 = vadd.f32 %v330, %v518
        %v535 = vadd.f32 %v331, %v519
        %v536 = vadd.f32 %v332, %v520
        %vm537 = vcmask 941952
        %538 = vst.msk [vmem:[#allocation2 + $0xf8] sm:$0xff] %vm537, 0.0
        %v539 = vld [vmem:[#allocation2 + $0x58] sm:$0xff]
        %v540 = vld [vmem:[#allocation2 + $0x60] sm:$0xff]
        %v541 = vld [vmem:[#allocation2 + $0x68] sm:$0xff]
        %v542 = vld [vmem:[#allocation2 + $0x70] sm:$0xff]
        %v543 = vld [vmem:[#allocation2 + $0x78] sm:$0xff]
        %v544 = vld [vmem:[#allocation2 + $0x80] sm:$0xff]
        %v545 = vld [vmem:[#allocation2 + $0x88] sm:$0xff]
        %v546 = vld [vmem:[#allocation2 + $0x90] sm:$0xff]
        %v547 = vld [vmem:[#allocation2 + $0x98] sm:$0xff]
        %v548 = vld [vmem:[#allocation2 + $0xa0] sm:$0xff]
        %v549 = vld [vmem:[#allocation2 + $0xa8] sm:$0xff]
        %v550 = vld [vmem:[#allocation2 + $0xb0] sm:$0xff]
        %v551 = vld [vmem:[#allocation2 + $0xb8] sm:$0xff]
        %v552 = vld [vmem:[#allocation2 + $0xc0] sm:$0xff]
        %v553 = vld [vmem:[#allocation2 + $0xc8] sm:$0xff]
        %v554 = vld [vmem:[#allocation2 + $0xd0] sm:$0xff]
        %v555 = vld [vmem:[#allocation2 + $0xd8] sm:$0xff]
        %556 = vrot.lane.b32.xlu0 %v539, 16
        %v557 = vpop.permute.xlu0 %556
        %558 = vrot.lane.b32.xlu0 %v540, 16
        %v559 = vpop.permute.xlu0 %558
        %560 = vrot.lane.b32.xlu0 %v541, 16
        %v561 = vpop.permute.xlu0 %560
        %562 = vrot.lane.b32.xlu0 %v542, 16
        %v563 = vpop.permute.xlu0 %562
        %564 = vrot.lane.b32.xlu0 %v543, 16
        %v565 = vpop.permute.xlu0 %564
        %566 = vrot.lane.b32.xlu0 %v544, 16
        %v567 = vpop.permute.xlu0 %566
        %568 = vrot.lane.b32.xlu0 %v545, 16
        %v569 = vpop.permute.xlu0 %568
        %570 = vrot.lane.b32.xlu0 %v546, 16
        %v571 = vpop.permute.xlu0 %570
        %572 = vrot.lane.b32.xlu0 %v547, 16
        %v573 = vpop.permute.xlu0 %572
        %574 = vrot.lane.b32.xlu0 %v548, 16
        %v575 = vpop.permute.xlu0 %574
        %576 = vrot.lane.b32.xlu0 %v549, 16
        %v577 = vpop.permute.xlu0 %576
        %578 = vrot.lane.b32.xlu0 %v550, 16
        %v579 = vpop.permute.xlu0 %578
        %580 = vrot.lane.b32.xlu0 %v551, 16
        %v581 = vpop.permute.xlu0 %580
        %582 = vrot.lane.b32.xlu0 %v552, 16
        %v583 = vpop.permute.xlu0 %582
        %584 = vrot.lane.b32.xlu0 %v553, 16
        %v585 = vpop.permute.xlu0 %584
        %586 = vrot.lane.b32.xlu0 %v554, 16
        %v587 = vpop.permute.xlu0 %586
        %588 = vrot.lane.b32.xlu0 %v555, 16
        %v589 = vpop.permute.xlu0 %588
        %vm590 = vcmp.lt.s32.totalorder %v283, 16
        %v591 = vsel %vm590, %v587, %v589
        %v592 = vsel %vm590, %v585, %v587
        %v593 = vsel %vm590, %v583, %v585
        %v594 = vsel %vm590, %v581, %v583
        %v595 = vsel %vm590, %v579, %v581
        %v596 = vsel %vm590, %v577, %v579
        %v597 = vsel %vm590, %v575, %v577
        %v598 = vsel %vm590, %v573, %v575
        %v599 = vsel %vm590, %v571, %v573
        %v600 = vsel %vm590, %v569, %v571
        %v601 = vsel %vm590, %v567, %v569
        %v602 = vsel %vm590, %v565, %v567
        %v603 = vsel %vm590, %v563, %v565
        %v604 = vsel %vm590, %v561, %v563
        %v605 = vsel %vm590, %v559, %v561
        %v606 = vsel %vm590, %v557, %v559
        %v607 = vmul.f32 %v606, 0.00060705695
        %v608 = vmul.f32 %v605, 0.00060705695
        %v609 = vmul.f32 %v604, 0.00060705695
        %v610 = vmul.f32 %v603, 0.00060705695
        %v611 = vmul.f32 %v602, 0.00060705695
        %v612 = vmul.f32 %v601, 0.00060705695
        %v613 = vmul.f32 %v600, 0.00060705695
        %v614 = vmul.f32 %v599, 0.00060705695
        %v615 = vmul.f32 %v598, 0.00060705695
        %v616 = vmul.f32 %v597, 0.00060705695
        %v617 = vmul.f32 %v596, 0.00060705695
        %v618 = vmul.f32 %v595, 0.00060705695
        %v619 = vmul.f32 %v594, 0.00060705695
        %v620 = vmul.f32 %v593, 0.00060705695
        %v621 = vmul.f32 %v592, 0.00060705695
        %v622 = vmul.f32 %v591, 0.00060705695
        %v623 = vadd.f32 %v419, %v607
        %v624 = vadd.f32 %v420, %v608
        %v625 = vadd.f32 %v421, %v609
        %v626 = vadd.f32 %v422, %v610
        %v627 = vadd.f32 %v423, %v611
        %v628 = vadd.f32 %v424, %v612
        %v629 = vadd.f32 %v425, %v613
        %v630 = vadd.f32 %v426, %v614
        %v631 = vadd.f32 %v427, %v615
        %v632 = vadd.f32 %v428, %v616
        %v633 = vadd.f32 %v429, %v617
        %v634 = vadd.f32 %v430, %v618
        %v635 = vadd.f32 %v431, %v619
        %v636 = vadd.f32 %v432, %v620
        %v637 = vadd.f32 %v433, %v621
        %v638 = vadd.f32 %v434, %v622
        %vm639 = vcmask 917232
        %640 = vst.msk [vmem:[#allocation2 + $0xf8] sm:$0xff] %vm639, 0.0
        %v641 = vld [vmem:[#allocation2] sm:$0xff]
        %v642 = vld [vmem:[#allocation2 + $0x8] sm:$0xff]
        %v643 = vld [vmem:[#allocation2 + $0x10] sm:$0xff]
        %v644 = vld [vmem:[#allocation2 + $0x18] sm:$0xff]
        %v645 = vld [vmem:[#allocation2 + $0x20] sm:$0xff]
        %v646 = vld [vmem:[#allocation2 + $0x28] sm:$0xff]
        %v647 = vld [vmem:[#allocation2 + $0x30] sm:$0xff]
        %v648 = vld [vmem:[#allocation2 + $0x38] sm:$0xff]
        %v649 = vld [vmem:[#allocation2 + $0x40] sm:$0xff]
        %v650 = vld [vmem:[#allocation2 + $0x48] sm:$0xff]
        %v651 = vld [vmem:[#allocation2 + $0x50] sm:$0xff]
        %v652 = vld [vmem:[#allocation2 + $0x58] sm:$0xff]
        %v653 = vld [vmem:[#allocation2 + $0x60] sm:$0xff]
        %v654 = vld [vmem:[#allocation2 + $0x68] sm:$0xff]
        %v655 = vld [vmem:[#allocation2 + $0x70] sm:$0xff]
        %v656 = vld [vmem:[#allocation2 + $0x78] sm:$0xff]
        %v657 = vld [vmem:[#allocation2 + $0x80] sm:$0xff]
        %658 = vrot.lane.b32.xlu0 %v641, 34
        %v659 = vpop.permute.xlu0 %658
        %660 = vrot.lane.b32.xlu0 %v642, 34
        %v661 = vpop.permute.xlu0 %660
        %662 = vrot.lane.b32.xlu0 %v643, 34
        %v663 = vpop.permute.xlu0 %662
        %664 = vrot.lane.b32.xlu0 %v644, 34
        %v665 = vpop.permute.xlu0 %664
        %666 = vrot.lane.b32.xlu0 %v645, 34
        %v667 = vpop.permute.xlu0 %666
        %668 = vrot.lane.b32.xlu0 %v646, 34
        %v669 = vpop.permute.xlu0 %668
        %670 = vrot.lane.b32.xlu0 %v647, 34
        %v671 = vpop.permute.xlu0 %670
        %672 = vrot.lane.b32.xlu0 %v648, 34
        %v673 = vpop.permute.xlu0 %672
        %674 = vrot.lane.b32.xlu0 %v649, 34
        %v675 = vpop.permute.xlu0 %674
        %676 = vrot.lane.b32.xlu0 %v650, 34
        %v677 = vpop.permute.xlu0 %676
        %678 = vrot.lane.b32.xlu0 %v651, 34
        %v679 = vpop.permute.xlu0 %678
        %680 = vrot.lane.b32.xlu0 %v652, 34
        %v681 = vpop.permute.xlu0 %680
        %682 = vrot.lane.b32.xlu0 %v653, 34
        %v683 = vpop.permute.xlu0 %682
        %684 = vrot.lane.b32.xlu0 %v654, 34
        %v685 = vpop.permute.xlu0 %684
        %686 = vrot.lane.b32.xlu0 %v655, 34
        %v687 = vpop.permute.xlu0 %686
        %688 = vrot.lane.b32.xlu0 %v656, 34
        %v689 = vpop.permute.xlu0 %688
        %690 = vrot.lane.b32.xlu0 %v657, 34
        %v691 = vpop.permute.xlu0 %690
        %vm692 = vcmp.lt.s32.totalorder %v283, 34
        %v693 = vsel %vm692, %v689, %v691
        %v694 = vsel %vm692, %v687, %v689
        %v695 = vsel %vm692, %v685, %v687
        %v696 = vsel %vm692, %v683, %v685
        %v697 = vsel %vm692, %v681, %v683
        %v698 = vsel %vm692, %v679, %v681
        %v699 = vsel %vm692, %v677, %v679
        %v700 = vsel %vm692, %v675, %v677
        %v701 = vsel %vm692, %v673, %v675
        %v702 = vsel %vm692, %v671, %v673
        %v703 = vsel %vm692, %v669, %v671
        %v704 = vsel %vm692, %v667, %v669
        %v705 = vsel %vm692, %v665, %v667
        %v706 = vsel %vm692, %v663, %v665
        %v707 = vsel %vm692, %v661, %v663
        %v708 = vsel %vm692, %v659, %v661
        %v709 = vmul.f32 %v708, 0.00017897146
        %v710 = vmul.f32 %v707, 0.00017897146
        %v711 = vmul.f32 %v706, 0.00017897146
        %v712 = vmul.f32 %v705, 0.00017897146
        %v713 = vmul.f32 %v704, 0.00017897146
        %v714 = vmul.f32 %v703, 0.00017897146
        %v715 = vmul.f32 %v702, 0.00017897146
        %v716 = vmul.f32 %v701, 0.00017897146
        %v717 = vmul.f32 %v700, 0.00017897146
        %v718 = vmul.f32 %v699, 0.00017897146
        %v719 = vmul.f32 %v698, 0.00017897146
        %v720 = vmul.f32 %v697, 0.00017897146
        %v721 = vmul.f32 %v696, 0.00017897146
        %v722 = vmul.f32 %v695, 0.00017897146
        %v723 = vmul.f32 %v694, 0.00017897146
        %v724 = vmul.f32 %v693, 0.00017897146
        %v725 = vadd.f32 %v521, %v709
        %v726 = vadd.f32 %v522, %v710
        %v727 = vadd.f32 %v523, %v711
        %v728 = vadd.f32 %v524, %v712
        %v729 = vadd.f32 %v525, %v713
        %v730 = vadd.f32 %v526, %v714
        %v731 = vadd.f32 %v527, %v715
        %v732 = vadd.f32 %v528, %v716
        %v733 = vadd.f32 %v529, %v717
        %v734 = vadd.f32 %v530, %v718
        %v735 = vadd.f32 %v531, %v719
        %v736 = vadd.f32 %v532, %v720
        %v737 = vadd.f32 %v533, %v721
        %v738 = vadd.f32 %v534, %v722
        %v739 = vadd.f32 %v535, %v723
        %v740 = vadd.f32 %v536, %v724
        %vm741 = vcmask 769648
        %742 = vst.msk [vmem:[#allocation2 + $0xf8] sm:$0xff] %vm741, 0.0
        %v743 = vld [vmem:[#allocation2 + $0x10] sm:$0xff]
        %v744 = vld [vmem:[#allocation2 + $0x18] sm:$0xff]
        %v745 = vld [vmem:[#allocation2 + $0x20] sm:$0xff]
        %v746 = vld [vmem:[#allocation2 + $0x28] sm:$0xff]
        %v747 = vld [vmem:[#allocation2 + $0x30] sm:$0xff]
        %v748 = vld [vmem:[#allocation2 + $0x38] sm:$0xff]
        %v749 = vld [vmem:[#allocation2 + $0x40] sm:$0xff]
        %v750 = vld [vmem:[#allocation2 + $0x48] sm:$0xff]
        %v751 = vld [vmem:[#allocation2 + $0x50] sm:$0xff]
        %v752 = vld [vmem:[#allocation2 + $0x58] sm:$0xff]
        %v753 = vld [vmem:[#allocation2 + $0x60] sm:$0xff]
        %v754 = vld [vmem:[#allocation2 + $0x68] sm:$0xff]
        %v755 = vld [vmem:[#allocation2 + $0x70] sm:$0xff]
        %v756 = vld [vmem:[#allocation2 + $0x78] sm:$0xff]
        %v757 = vld [vmem:[#allocation2 + $0x80] sm:$0xff]
        %v758 = vld [vmem:[#allocation2 + $0x88] sm:$0xff]
        %v759 = vld [vmem:[#allocation2 + $0x90] sm:$0xff]
        %760 = vrot.lane.b32.xlu0 %v743, 50
        %v761 = vpop.permute.xlu0 %760
        %762 = vrot.lane.b32.xlu0 %v744, 50
        %v763 = vpop.permute.xlu0 %762
        %764 = vrot.lane.b32.xlu0 %v745, 50
        %v765 = vpop.permute.xlu0 %764
        %766 = vrot.lane.b32.xlu0 %v746, 50
        %v767 = vpop.permute.xlu0 %766
        %768 = vrot.lane.b32.xlu0 %v747, 50
        %v769 = vpop.permute.xlu0 %768
        %770 = vrot.lane.b32.xlu0 %v748, 50
        %v771 = vpop.permute.xlu0 %770
        %772 = vrot.lane.b32.xlu0 %v749, 50
        %v773 = vpop.permute.xlu0 %772
        %774 = vrot.lane.b32.xlu0 %v750, 50
        %v775 = vpop.permute.xlu0 %774
        %776 = vrot.lane.b32.xlu0 %v751, 50
        %v777 = vpop.permute.xlu0 %776
        %778 = vrot.lane.b32.xlu0 %v752, 50
        %v779 = vpop.permute.xlu0 %778
        %780 = vrot.lane.b32.xlu0 %v753, 50
        %v781 = vpop.permute.xlu0 %780
        %782 = vrot.lane.b32.xlu0 %v754, 50
        %v783 = vpop.permute.xlu0 %782
        %784 = vrot.lane.b32.xlu0 %v755, 50
        %v785 = vpop.permute.xlu0 %784
        %786 = vrot.lane.b32.xlu0 %v756, 50
        %v787 = vpop.permute.xlu0 %786
        %788 = vrot.lane.b32.xlu0 %v757, 50
        %v789 = vpop.permute.xlu0 %788
        %790 = vrot.lane.b32.xlu0 %v758, 50
        %v791 = vpop.permute.xlu0 %790
        %792 = vrot.lane.b32.xlu0 %v759, 50
        %v793 = vpop.permute.xlu0 %792
        %vm794 = vcmp.lt.s32.totalorder %v283, 50
        %v795 = vsel %vm794, %v791, %v793
        %v796 = vsel %vm794, %v789, %v791
        %v797 = vsel %vm794, %v787, %v789
        %v798 = vsel %vm794, %v785, %v787
        %v799 = vsel %vm794, %v783, %v785
        %v800 = vsel %vm794, %v781, %v783
        %v801 = vsel %vm794, %v779, %v781
        %v802 = vsel %vm794, %v777, %v779
        %v803 = vsel %vm794, %v775, %v777
        %v804 = vsel %vm794, %v773, %v775
        %v805 = vsel %vm794, %v771, %v773
        %v806 = vsel %vm794, %v769, %v771
        %v807 = vsel %vm794, %v767, %v769
        %v808 = vsel %vm794, %v765, %v767
        %v809 = vsel %vm794, %v763, %v765
        %v810 = vsel %vm794, %v761, %v763
        %v811 = vmul.f32 %v810, 0.00021715398
        %v812 = vmul.f32 %v809, 0.00021715398
        %v813 = vmul.f32 %v808, 0.00021715398
        %v814 = vmul.f32 %v807, 0.00021715398
        %v815 = vmul.f32 %v806, 0.00021715398
        %v816 = vmul.f32 %v805, 0.00021715398
        %v817 = vmul.f32 %v804, 0.00021715398
        %v818 = vmul.f32 %v803, 0.00021715398
        %v819 = vmul.f32 %v802, 0.00021715398
        %v820 = vmul.f32 %v801, 0.00021715398
        %v821 = vmul.f32 %v800, 0.00021715398
        %v822 = vmul.f32 %v799, 0.00021715398
        %v823 = vmul.f32 %v798, 0.00021715398
        %v824 = vmul.f32 %v797, 0.00021715398
        %v825 = vmul.f32 %v796, 0.00021715398
        %v826 = vmul.f32 %v795, 0.00021715398
        %v827 = vadd.f32 %v623, %v811
        %v828 = vadd.f32 %v624, %v812
        %v829 = vadd.f32 %v625, %v813
        %v830 = vadd.f32 %v626, %v814
        %v831 = vadd.f32 %v627, %v815
        %v832 = vadd.f32 %v628, %v816
        %v833 = vadd.f32 %v629, %v817
        %v834 = vadd.f32 %v630, %v818
        %v835 = vadd.f32 %v631, %v819
        %v836 = vadd.f32 %v632, %v820
        %v837 = vadd.f32 %v633, %v821
        %v838 = vadd.f32 %v634, %v822
        %v839 = vadd.f32 %v635, %v823
        %v840 = vadd.f32 %v636, %v824
        %v841 = vadd.f32 %v637, %v825
        %v842 = vadd.f32 %v638, %v826
        %vm843 = vcmask 638496
        %844 = vst.msk [vmem:[#allocation2 + $0xf8] sm:$0xff] %vm843, 0.0
        %v845 = vld [vmem:[#allocation2 + $0x10] sm:$0xff]
        %v846 = vld [vmem:[#allocation2 + $0x18] sm:$0xff]
        %v847 = vld [vmem:[#allocation2 + $0x20] sm:$0xff]
        %v848 = vld [vmem:[#allocation2 + $0x28] sm:$0xff]
        %v849 = vld [vmem:[#allocation2 + $0x30] sm:$0xff]
        %v850 = vld [vmem:[#allocation2 + $0x38] sm:$0xff]
        %v851 = vld [vmem:[#allocation2 + $0x40] sm:$0xff]
        %v852 = vld [vmem:[#allocation2 + $0x48] sm:$0xff]
        %v853 = vld [vmem:[#allocation2 + $0x50] sm:$0xff]
        %v854 = vld [vmem:[#allocation2 + $0x58] sm:$0xff]
        %v855 = vld [vmem:[#allocation2 + $0x60] sm:$0xff]
        %v856 = vld [vmem:[#allocation2 + $0x68] sm:$0xff]
        %v857 = vld [vmem:[#allocation2 + $0x70] sm:$0xff]
        %v858 = vld [vmem:[#allocation2 + $0x78] sm:$0xff]
        %v859 = vld [vmem:[#allocation2 + $0x80] sm:$0xff]
        %v860 = vld [vmem:[#allocation2 + $0x88] sm:$0xff]
        %v861 = vld [vmem:[#allocation2 + $0x90] sm:$0xff]
        %862 = vrot.lane.b32.xlu0 %v845, 60
        %v863 = vpop.permute.xlu0 %862
        %864 = vrot.lane.b32.xlu0 %v846, 60
        %v865 = vpop.permute.xlu0 %864
        %866 = vrot.lane.b32.xlu0 %v847, 60
        %v867 = vpop.permute.xlu0 %866
        %868 = vrot.lane.b32.xlu0 %v848, 60
        %v869 = vpop.permute.xlu0 %868
        %870 = vrot.lane.b32.xlu0 %v849, 60
        %v871 = vpop.permute.xlu0 %870
        %872 = vrot.lane.b32.xlu0 %v850, 60
        %v873 = vpop.permute.xlu0 %872
        %874 = vrot.lane.b32.xlu0 %v851, 60
        %v875 = vpop.permute.xlu0 %874
        %876 = vrot.lane.b32.xlu0 %v852, 60
        %v877 = vpop.permute.xlu0 %876
        %878 = vrot.lane.b32.xlu0 %v853, 60
        %v879 = vpop.permute.xlu0 %878
        %880 = vrot.lane.b32.xlu0 %v854, 60
        %v881 = vpop.permute.xlu0 %880
        %882 = vrot.lane.b32.xlu0 %v855, 60
        %v883 = vpop.permute.xlu0 %882
        %884 = vrot.lane.b32.xlu0 %v856, 60
        %v885 = vpop.permute.xlu0 %884
        %886 = vrot.lane.b32.xlu0 %v857, 60
        %v887 = vpop.permute.xlu0 %886
        %888 = vrot.lane.b32.xlu0 %v858, 60
        %v889 = vpop.permute.xlu0 %888
        %890 = vrot.lane.b32.xlu0 %v859, 60
        %v891 = vpop.permute.xlu0 %890
        %892 = vrot.lane.b32.xlu0 %v860, 60
        %v893 = vpop.permute.xlu0 %892
        %894 = vrot.lane.b32.xlu0 %v861, 60
        %v895 = vpop.permute.xlu0 %894
        %vm896 = vcmp.lt.s32.totalorder %v283, 60
        %v897 = vsel %vm896, %v893, %v895
        %v898 = vsel %vm896, %v891, %v893
        %v899 = vsel %vm896, %v889, %v891
        %v900 = vsel %vm896, %v887, %v889
        %v901 = vsel %vm896, %v885, %v887
        %v902 = vsel %vm896, %v883, %v885
        %v903 = vsel %vm896, %v881, %v883
        %v904 = vsel %vm896, %v879, %v881
        %v905 = vsel %vm896, %v877, %v879
        %v906 = vsel %vm896, %v875, %v877
        %v907 = vsel %vm896, %v873, %v875
        %v908 = vsel %vm896, %v871, %v873
        %v909 = vsel %vm896, %v869, %v871
        %v910 = vsel %vm896, %v867, %v869
        %v911 = vsel %vm896, %v865, %v867
        %v912 = vsel %vm896, %v863, %v865
        %v913 = vmul.f32 %v912, 0.0002285603
        %v914 = vmul.f32 %v911, 0.0002285603
        %v915 = vmul.f32 %v910, 0.0002285603
        %v916 = vmul.f32 %v909, 0.0002285603
        %v917 = vmul.f32 %v908, 0.0002285603
        %v918 = vmul.f32 %v907, 0.0002285603
        %v919 = vmul.f32 %v906, 0.0002285603
        %v920 = vmul.f32 %v905, 0.0002285603
        %v921 = vmul.f32 %v904, 0.0002285603
        %v922 = vmul.f32 %v903, 0.0002285603
        %v923 = vmul.f32 %v902, 0.0002285603
        %v924 = vmul.f32 %v901, 0.0002285603
        %v925 = vmul.f32 %v900, 0.0002285603
        %v926 = vmul.f32 %v899, 0.0002285603
        %v927 = vmul.f32 %v898, 0.0002285603
        %v928 = vmul.f32 %v897, 0.0002285603
        %v929 = vadd.f32 %v725, %v913
        %v930 = vadd.f32 %v726, %v914
        %v931 = vadd.f32 %v727, %v915
        %v932 = vadd.f32 %v728, %v916
        %v933 = vadd.f32 %v729, %v917
        %v934 = vadd.f32 %v730, %v918
        %v935 = vadd.f32 %v731, %v919
        %v936 = vadd.f32 %v732, %v920
        %v937 = vadd.f32 %v733, %v921
        %v938 = vadd.f32 %v734, %v922
        %v939 = vadd.f32 %v735, %v923
        %v940 = vadd.f32 %v736, %v924
        %v941 = vadd.f32 %v737, %v925
        %v942 = vadd.f32 %v738, %v926
        %v943 = vadd.f32 %v739, %v927
        %v944 = vadd.f32 %v740, %v928
        %vm945 = vcmask 556512
        %946 = vst.msk [vmem:[#allocation2 + $0xf8] sm:$0xff] %vm945, 0.0
        %v947 = vld [vmem:[#allocation2] sm:$0xff]
        %v948 = vld [vmem:[#allocation2 + $0x8] sm:$0xff]
        %v949 = vld [vmem:[#allocation2 + $0x10] sm:$0xff]
        %v950 = vld [vmem:[#allocation2 + $0x18] sm:$0xff]
        %v951 = vld [vmem:[#allocation2 + $0x20] sm:$0xff]
        %v952 = vld [vmem:[#allocation2 + $0x28] sm:$0xff]
        %v953 = vld [vmem:[#allocation2 + $0x30] sm:$0xff]
        %v954 = vld [vmem:[#allocation2 + $0x38] sm:$0xff]
        %v955 = vld [vmem:[#allocation2 + $0x40] sm:$0xff]
        %v956 = vld [vmem:[#allocation2 + $0x48] sm:$0xff]
        %v957 = vld [vmem:[#allocation2 + $0x50] sm:$0xff]
        %v958 = vld [vmem:[#allocation2 + $0x58] sm:$0xff]
        %v959 = vld [vmem:[#allocation2 + $0x60] sm:$0xff]
        %v960 = vld [vmem:[#allocation2 + $0x68] sm:$0xff]
        %v961 = vld [vmem:[#allocation2 + $0x70] sm:$0xff]
        %v962 = vld [vmem:[#allocation2 + $0x78] sm:$0xff]
        %v963 = vld [vmem:[#allocation2 + $0x80] sm:$0xff]
        %964 = vrot.lane.b32.xlu0 %v947, 68
        %v965 = vpop.permute.xlu0 %964
        %966 = vrot.lane.b32.xlu0 %v948, 68
        %v967 = vpop.permute.xlu0 %966
        %968 = vrot.lane.b32.xlu0 %v949, 68
        %v969 = vpop.permute.xlu0 %968
        %970 = vrot.lane.b32.xlu0 %v950, 68
        %v971 = vpop.permute.xlu0 %970
        %972 = vrot.lane.b32.xlu0 %v951, 68
        %v973 = vpop.permute.xlu0 %972
        %974 = vrot.lane.b32.xlu0 %v952, 68
        %v975 = vpop.permute.xlu0 %974
        %976 = vrot.lane.b32.xlu0 %v953, 68
        %v977 = vpop.permute.xlu0 %976
        %978 = vrot.lane.b32.xlu0 %v954, 68
        %v979 = vpop.permute.xlu0 %978
        %980 = vrot.lane.b32.xlu0 %v955, 68
        %v981 = vpop.permute.xlu0 %980
        %982 = vrot.lane.b32.xlu0 %v956, 68
        %v983 = vpop.permute.xlu0 %982
        %984 = vrot.lane.b32.xlu0 %v957, 68
        %v985 = vpop.permute.xlu0 %984
        %986 = vrot.lane.b32.xlu0 %v958, 68
        %v987 = vpop.permute.xlu0 %986
        %988 = vrot.lane.b32.xlu0 %v959, 68
        %v989 = vpop.permute.xlu0 %988
        %990 = vrot.lane.b32.xlu0 %v960, 68
        %v991 = vpop.permute.xlu0 %990
        %992 = vrot.lane.b32.xlu0 %v961, 68
        %v993 = vpop.permute.xlu0 %992
        %994 = vrot.lane.b32.xlu0 %v962, 68
        %v995 = vpop.permute.xlu0 %994
        %996 = vrot.lane.b32.xlu0 %v963, 68
        %v997 = vpop.permute.xlu0 %996
        %vm998 = vcmp.lt.s32.totalorder %v283, 68
        %v999 = vsel %vm998, %v995, %v997
        %v1000 = vsel %vm998, %v993, %v995
        %v1001 = vsel %vm998, %v991, %v993
        %v1002 = vsel %vm998, %v989, %v991
        %v1003 = vsel %vm998, %v987, %v989
        %v1004 = vsel %vm998, %v985, %v987
        %v1005 = vsel %vm998, %v983, %v985
        %v1006 = vsel %vm998, %v981, %v983
        %v1007 = vsel %vm998, %v979, %v981
        %v1008 = vsel %vm998, %v977, %v979
        %v1009 = vsel %vm998, %v975, %v977
        %v1010 = vsel %vm998, %v973, %v975
        %v1011 = vsel %vm998, %v971, %v973
        %v1012 = vsel %vm998, %v969, %v971
        %v1013 = vsel %vm998, %v967, %v969
        %v1014 = vsel %vm998, %v965, %v967
        %v1015 = vmul.f32 %v1014, 0.00018558222
        %v1016 = vmul.f32 %v1013, 0.00018558222
        %v1017 = vmul.f32 %v1012, 0.00018558222
        %v1018 = vmul.f32 %v1011, 0.00018558222
        %v1019 = vmul.f32 %v1010, 0.00018558222
        %v1020 = vmul.f32 %v1009, 0.00018558222
        %v1021 = vmul.f32 %v1008, 0.00018558222
        %v1022 = vmul.f32 %v1007, 0.00018558222
        %v1023 = vmul.f32 %v1006, 0.00018558222
        %v1024 = vmul.f32 %v1005, 0.00018558222
        %v1025 = vmul.f32 %v1004, 0.00018558222
        %v1026 = vmul.f32 %v1003, 0.00018558222
        %v1027 = vmul.f32 %v1002, 0.00018558222
        %v1028 = vmul.f32 %v1001, 0.00018558222
        %v1029 = vmul.f32 %v1000, 0.00018558222
        %v1030 = vmul.f32 %v999, 0.00018558222
        %v1031 = vadd.f32 %v827, %v1015
        %v1032 = vadd.f32 %v828, %v1016
        %v1033 = vadd.f32 %v829, %v1017
        %v1034 = vadd.f32 %v830, %v1018
        %v1035 = vadd.f32 %v831, %v1019
        %v1036 = vadd.f32 %v832, %v1020
        %v1037 = vadd.f32 %v833, %v1021
        %v1038 = vadd.f32 %v834, %v1022
        %v1039 = vadd.f32 %v835, %v1023
        %v1040 = vadd.f32 %v836, %v1024
        %v1041 = vadd.f32 %v837, %v1025
        %v1042 = vadd.f32 %v838, %v1026
        %v1043 = vadd.f32 %v839, %v1027
        %v1044 = vadd.f32 %v840, %v1028
        %v1045 = vadd.f32 %v841, %v1029
        %v1046 = vadd.f32 %v842, %v1030
        %vm1047 = vcmask 490960
        %1048 = vst.msk [vmem:[#allocation2 + $0xf8] sm:$0xff] %vm1047, 0.0
        %v1049 = vld [vmem:[#allocation2 + $0x40] sm:$0xff]
        %v1050 = vld [vmem:[#allocation2 + $0x48] sm:$0xff]
        %v1051 = vld [vmem:[#allocation2 + $0x50] sm:$0xff]
        %v1052 = vld [vmem:[#allocation2 + $0x58] sm:$0xff]
        %v1053 = vld [vmem:[#allocation2 + $0x60] sm:$0xff]
        %v1054 = vld [vmem:[#allocation2 + $0x68] sm:$0xff]
        %v1055 = vld [vmem:[#allocation2 + $0x70] sm:$0xff]
        %v1056 = vld [vmem:[#allocation2 + $0x78] sm:$0xff]
        %v1057 = vld [vmem:[#allocation2 + $0x80] sm:$0xff]
        %v1058 = vld [vmem:[#allocation2 + $0x88] sm:$0xff]
        %v1059 = vld [vmem:[#allocation2 + $0x90] sm:$0xff]
        %v1060 = vld [vmem:[#allocation2 + $0x98] sm:$0xff]
        %v1061 = vld [vmem:[#allocation2 + $0xa0] sm:$0xff]
        %v1062 = vld [vmem:[#allocation2 + $0xa8] sm:$0xff]
        %v1063 = vld [vmem:[#allocation2 + $0xb0] sm:$0xff]
        %v1064 = vld [vmem:[#allocation2 + $0xb8] sm:$0xff]
        %v1065 = vld [vmem:[#allocation2 + $0xc0] sm:$0xff]
        %1066 = vrot.lane.b32.xlu0 %v1049, 70
        %v1067 = vpop.permute.xlu0 %1066
        %1068 = vrot.lane.b32.xlu0 %v1050, 70
        %v1069 = vpop.permute.xlu0 %1068
        %1070 = vrot.lane.b32.xlu0 %v1051, 70
        %v1071 = vpop.permute.xlu0 %1070
        %1072 = vrot.lane.b32.xlu0 %v1052, 70
        %v1073 = vpop.permute.xlu0 %1072
        %1074 = vrot.lane.b32.xlu0 %v1053, 70
        %v1075 = vpop.permute.xlu0 %1074
        %1076 = vrot.lane.b32.xlu0 %v1054, 70
        %v1077 = vpop.permute.xlu0 %1076
        %1078 = vrot.lane.b32.xlu0 %v1055, 70
        %v1079 = vpop.permute.xlu0 %1078
        %1080 = vrot.lane.b32.xlu0 %v1056, 70
        %v1081 = vpop.permute.xlu0 %1080
        %1082 = vrot.lane.b32.xlu0 %v1057, 70
        %v1083 = vpop.permute.xlu0 %1082
        %1084 = vrot.lane.b32.xlu0 %v1058, 70
        %v1085 = vpop.permute.xlu0 %1084
        %1086 = vrot.lane.b32.xlu0 %v1059, 70
        %v1087 = vpop.permute.xlu0 %1086
        %1088 = vrot.lane.b32.xlu0 %v1060, 70
        %v1089 = vpop.permute.xlu0 %1088
        %1090 = vrot.lane.b32.xlu0 %v1061, 70
        %v1091 = vpop.permute.xlu0 %1090
        %1092 = vrot.lane.b32.xlu0 %v1062, 70
        %v1093 = vpop.permute.xlu0 %1092
        %1094 = vrot.lane.b32.xlu0 %v1063, 70
        %v1095 = vpop.permute.xlu0 %1094
        %1096 = vrot.lane.b32.xlu0 %v1064, 70
        %v1097 = vpop.permute.xlu0 %1096
        %1098 = vrot.lane.b32.xlu0 %v1065, 70
        %v1099 = vpop.permute.xlu0 %1098
        %vm1100 = vcmp.lt.s32.totalorder %v283, 70
        %v1101 = vsel %vm1100, %v1097, %v1099
        %v1102 = vsel %vm1100, %v1095, %v1097
        %v1103 = vsel %vm1100, %v1093, %v1095
        %v1104 = vsel %vm1100, %v1091, %v1093
        %v1105 = vsel %vm1100, %v1089, %v1091
        %v1106 = vsel %vm1100, %v1087, %v1089
        %v1107 = vsel %vm1100, %v1085, %v1087
        %v1108 = vsel %vm1100, %v1083, %v1085
        %v1109 = vsel %vm1100, %v1081, %v1083
        %v1110 = vsel %vm1100, %v1079, %v1081
        %v1111 = vsel %vm1100, %v1077, %v1079
        %v1112 = vsel %vm1100, %v1075, %v1077
        %v1113 = vsel %vm1100, %v1073, %v1075
        %v1114 = vsel %vm1100, %v1071, %v1073
        %v1115 = vsel %vm1100, %v1069, %v1071
        %v1116 = vsel %vm1100, %v1067, %v1069
        %v1117 = vmul.f32 %v1116, 0.00040089496
        %v1118 = vmul.f32 %v1115, 0.00040089496
        %v1119 = vmul.f32 %v1114, 0.00040089496
        %v1120 = vmul.f32 %v1113, 0.00040089496
        %v1121 = vmul.f32 %v1112, 0.00040089496
        %v1122 = vmul.f32 %v1111, 0.00040089496
        %v1123 = vmul.f32 %v1110, 0.00040089496
        %v1124 = vmul.f32 %v1109, 0.00040089496
        %v1125 = vmul.f32 %v1108, 0.00040089496
        %v1126 = vmul.f32 %v1107, 0.00040089496
        %v1127 = vmul.f32 %v1106, 0.00040089496
        %v1128 = vmul.f32 %v1105, 0.00040089496
        %v1129 = vmul.f32 %v1104, 0.00040089496
        %v1130 = vmul.f32 %v1103, 0.00040089496
        %v1131 = vmul.f32 %v1102, 0.00040089496
        %v1132 = vmul.f32 %v1101, 0.00040089496
        %v1133 = vadd.f32 %v929, %v1117
        %v1134 = vadd.f32 %v930, %v1118
        %v1135 = vadd.f32 %v931, %v1119
        %v1136 = vadd.f32 %v932, %v1120
        %v1137 = vadd.f32 %v933, %v1121
        %v1138 = vadd.f32 %v934, %v1122
        %v1139 = vadd.f32 %v935, %v1123
        %v1140 = vadd.f32 %v936, %v1124
        %v1141 = vadd.f32 %v937, %v1125
        %v1142 = vadd.f32 %v938, %v1126
        %v1143 = vadd.f32 %v939, %v1127
        %v1144 = vadd.f32 %v940, %v1128
        %v1145 = vadd.f32 %v941, %v1129
        %v1146 = vadd.f32 %v942, %v1130
        %v1147 = vadd.f32 %v943, %v1131
        %v1148 = vadd.f32 %v944, %v1132
        %vm1149 = vcmask 474528
        %1150 = vst.msk [vmem:[#allocation2 + $0xf8] sm:$0xff] %vm1149, 0.0
        %v1151 = vld [vmem:[#allocation2 + $0x20] sm:$0xff]
        %v1152 = vld [vmem:[#allocation2 + $0x28] sm:$0xff]
        %v1153 = vld [vmem:[#allocation2 + $0x30] sm:$0xff]
        %v1154 = vld [vmem:[#allocation2 + $0x38] sm:$0xff]
        %v1155 = vld [vmem:[#allocation2 + $0x40] sm:$0xff]
        %v1156 = vld [vmem:[#allocation2 + $0x48] sm:$0xff]
        %v1157 = vld [vmem:[#allocation2 + $0x50] sm:$0xff]
        %v1158 = vld [vmem:[#allocation2 + $0x58] sm:$0xff]
        %v1159 = vld [vmem:[#allocation2 + $0x60] sm:$0xff]
        %v1160 = vld [vmem:[#allocation2 + $0x68] sm:$0xff]
        %v1161 = vld [vmem:[#allocation2 + $0x70] sm:$0xff]
        %v1162 = vld [vmem:[#allocation2 + $0x78] sm:$0xff]
        %v1163 = vld [vmem:[#allocation2 + $0x80] sm:$0xff]
        %v1164 = vld [vmem:[#allocation2 + $0x88] sm:$0xff]
        %v1165 = vld [vmem:[#allocation2 + $0x90] sm:$0xff]
        %v1166 = vld [vmem:[#allocation2 + $0x98] sm:$0xff]
        %v1167 = vld [vmem:[#allocation2 + $0xa0] sm:$0xff]
        %1168 = vrot.lane.b32.xlu0 %v1151, 76
        %v1169 = vpop.permute.xlu0 %1168
        %1170 = vrot.lane.b32.xlu0 %v1152, 76
        %v1171 = vpop.permute.xlu0 %1170
        %1172 = vrot.lane.b32.xlu0 %v1153, 76
        %v1173 = vpop.permute.xlu0 %1172
        %1174 = vrot.lane.b32.xlu0 %v1154, 76
        %v1175 = vpop.permute.xlu0 %1174
        %1176 = vrot.lane.b32.xlu0 %v1155, 76
        %v1177 = vpop.permute.xlu0 %1176
        %1178 = vrot.lane.b32.xlu0 %v1156, 76
        %v1179 = vpop.permute.xlu0 %1178
        %1180 = vrot.lane.b32.xlu0 %v1157, 76
        %v1181 = vpop.permute.xlu0 %1180
        %1182 = vrot.lane.b32.xlu0 %v1158, 76
        %v1183 = vpop.permute.xlu0 %1182
        %1184 = vrot.lane.b32.xlu0 %v1159, 76
        %v1185 = vpop.permute.xlu0 %1184
        %1186 = vrot.lane.b32.xlu0 %v1160, 76
        %v1187 = vpop.permute.xlu0 %1186
        %1188 = vrot.lane.b32.xlu0 %v1161, 76
        %v1189 = vpop.permute.xlu0 %1188
        %1190 = vrot.lane.b32.xlu0 %v1162, 76
        %v1191 = vpop.permute.xlu0 %1190
        %1192 = vrot.lane.b32.xlu0 %v1163, 76
        %v1193 = vpop.permute.xlu0 %1192
        %1194 = vrot.lane.b32.xlu0 %v1164, 76
        %v1195 = vpop.permute.xlu0 %1194
        %1196 = vrot.lane.b32.xlu0 %v1165, 76
        %v1197 = vpop.permute.xlu0 %1196
        %1198 = vrot.lane.b32.xlu0 %v1166, 76
        %v1199 = vpop.permute.xlu0 %1198
        %1200 = vrot.lane.b32.xlu0 %v1167, 76
        %v1201 = vpop.permute.xlu0 %1200
        %vm1202 = vcmp.lt.s32.totalorder %v283, 76
        %v1203 = vsel %vm1202, %v1199, %v1201
        %v1204 = vsel %vm1202, %v1197, %v1199
        %v1205 = vsel %vm1202, %v1195, %v1197
        %v1206 = vsel %vm1202, %v1193, %v1195
        %v1207 = vsel %vm1202, %v1191, %v1193
        %v1208 = vsel %vm1202, %v1189, %v1191
        %v1209 = vsel %vm1202, %v1187, %v1189
        %v1210 = vsel %vm1202, %v1185, %v1187
        %v1211 = vsel %vm1202, %v1183, %v1185
        %v1212 = vsel %vm1202, %v1181, %v1183
        %v1213 = vsel %vm1202, %v1179, %v1181
        %v1214 = vsel %vm1202, %v1177, %v1179
        %v1215 = vsel %vm1202, %v1175, %v1177
        %v1216 = vsel %vm1202, %v1173, %v1175
        %v1217 = vsel %vm1202, %v1171, %v1173
        %v1218 = vsel %vm1202, %v1169, %v1171
        %v1219 = vmul.f32 %v1218, 0.00026666003
        %v1220 = vmul.f32 %v1217, 0.00026666003
        %v1221 = vmul.f32 %v1216, 0.00026666003
        %v1222 = vmul.f32 %v1215, 0.00026666003
        %v1223 = vmul.f32 %v1214, 0.00026666003
        %v1224 = vmul.f32 %v1213, 0.00026666003
        %v1225 = vmul.f32 %v1212, 0.00026666003
        %v1226 = vmul.f32 %v1211, 0.00026666003
        %v1227 = vmul.f32 %v1210, 0.00026666003
        %v1228 = vmul.f32 %v1209, 0.00026666003
        %v1229 = vmul.f32 %v1208, 0.00026666003
        %v1230 = vmul.f32 %v1207, 0.00026666003
        %v1231 = vmul.f32 %v1206, 0.00026666003
        %v1232 = vmul.f32 %v1205, 0.00026666003
        %v1233 = vmul.f32 %v1204, 0.00026666003
        %v1234 = vmul.f32 %v1203, 0.00026666003
        %v1235 = vadd.f32 %v1031, %v1219
        %v1236 = vadd.f32 %v1032, %v1220
        %v1237 = vadd.f32 %v1033, %v1221
        %v1238 = vadd.f32 %v1034, %v1222
        %v1239 = vadd.f32 %v1035, %v1223
        %v1240 = vadd.f32 %v1036, %v1224
        %v1241 = vadd.f32 %v1037, %v1225
        %v1242 = vadd.f32 %v1038, %v1226
        %v1243 = vadd.f32 %v1039, %v1227
        %v1244 = vadd.f32 %v1040, %v1228
        %v1245 = vadd.f32 %v1041, %v1229
        %v1246 = vadd.f32 %v1042, %v1230
        %v1247 = vadd.f32 %v1043, %v1231
        %v1248 = vadd.f32 %v1044, %v1232
        %v1249 = vadd.f32 %v1045, %v1233
        %v1250 = vadd.f32 %v1046, %v1234
        %vm1251 = vcmask 425336
        %1252 = vst.msk [vmem:[#allocation2 + $0xf8] sm:$0xff] %vm1251, 0.0
        %v1253 = vld [vmem:[#allocation2 + $0x20] sm:$0xff]
        %v1254 = vld [vmem:[#allocation2 + $0x28] sm:$0xff]
        %v1255 = vld [vmem:[#allocation2 + $0x30] sm:$0xff]
        %v1256 = vld [vmem:[#allocation2 + $0x38] sm:$0xff]
        %v1257 = vld [vmem:[#allocation2 + $0x40] sm:$0xff]
        %v1258 = vld [vmem:[#allocation2 + $0x48] sm:$0xff]
        %v1259 = vld [vmem:[#allocation2 + $0x50] sm:$0xff]
        %v1260 = vld [vmem:[#allocation2 + $0x58] sm:$0xff]
        %v1261 = vld [vmem:[#allocation2 + $0x60] sm:$0xff]
        %v1262 = vld [vmem:[#allocation2 + $0x68] sm:$0xff]
        %v1263 = vld [vmem:[#allocation2 + $0x70] sm:$0xff]
        %v1264 = vld [vmem:[#allocation2 + $0x78] sm:$0xff]
        %v1265 = vld [vmem:[#allocation2 + $0x80] sm:$0xff]
        %v1266 = vld [vmem:[#allocation2 + $0x88] sm:$0xff]
        %v1267 = vld [vmem:[#allocation2 + $0x90] sm:$0xff]
        %v1268 = vld [vmem:[#allocation2 + $0x98] sm:$0xff]
        %v1269 = vld [vmem:[#allocation2 + $0xa0] sm:$0xff]
        %v1270 = vld [vmem:[#allocation2 + $0xa8] sm:$0xff]
        %v1271 = vld [vmem:[#allocation2 + $0xb0] sm:$0xff]
        %1272 = vrot.lane.b32.xlu0 %v1253, 81
        %v1273 = vpop.permute.xlu0 %1272
        %1274 = vrot.lane.b32.xlu0 %v1254, 81
        %v1275 = vpop.permute.xlu0 %1274
        %1276 = vrot.lane.b32.xlu0 %v1255, 81
        %v1277 = vpop.permute.xlu0 %1276
        %1278 = vrot.lane.b32.xlu0 %v1256, 81
        %v1279 = vpop.permute.xlu0 %1278
        %1280 = vrot.lane.b32.xlu0 %v1257, 81
        %v1281 = vpop.permute.xlu0 %1280
        %1282 = vrot.lane.b32.xlu0 %v1258, 81
        %v1283 = vpop.permute.xlu0 %1282
        %1284 = vrot.lane.b32.xlu0 %v1259, 81
        %v1285 = vpop.permute.xlu0 %1284
        %1286 = vrot.lane.b32.xlu0 %v1260, 81
        %v1287 = vpop.permute.xlu0 %1286
        %1288 = vrot.lane.b32.xlu0 %v1261, 81
        %v1289 = vpop.permute.xlu0 %1288
        %1290 = vrot.lane.b32.xlu0 %v1262, 81
        %v1291 = vpop.permute.xlu0 %1290
        %1292 = vrot.lane.b32.xlu0 %v1263, 81
        %v1293 = vpop.permute.xlu0 %1292
        %1294 = vrot.lane.b32.xlu0 %v1264, 81
        %v1295 = vpop.permute.xlu0 %1294
        %1296 = vrot.lane.b32.xlu0 %v1265, 81
        %v1297 = vpop.permute.xlu0 %1296
        %1298 = vrot.lane.b32.xlu0 %v1266, 81
        %v1299 = vpop.permute.xlu0 %1298
        %1300 = vrot.lane.b32.xlu0 %v1267, 81
        %v1301 = vpop.permute.xlu0 %1300
        %1302 = vrot.lane.b32.xlu0 %v1268, 81
        %v1303 = vpop.permute.xlu0 %1302
        %1304 = vrot.lane.b32.xlu0 %v1269, 81
        %v1305 = vpop.permute.xlu0 %1304
        %1306 = vrot.lane.b32.xlu0 %v1270, 81
        %v1307 = vpop.permute.xlu0 %1306
        %1308 = vrot.lane.b32.xlu0 %v1271, 81
        %v1309 = vpop.permute.xlu0 %1308
        %vm1310 = vcmp.lt.s32.totalorder %v283, 81
        %v1311 = vsel %vm1310, %v1307, %v1309
        %v1312 = vsel %vm1310, %v1305, %v1307
        %v1313 = vsel %vm1310, %v1303, %v1305
        %v1314 = vsel %vm1310, %v1301, %v1303
        %v1315 = vsel %vm1310, %v1299, %v1301
        %v1316 = vsel %vm1310, %v1297, %v1299
        %v1317 = vsel %vm1310, %v1295, %v1297
        %v1318 = vsel %vm1310, %v1293, %v1295
        %v1319 = vsel %vm1310, %v1291, %v1293
        %v1320 = vsel %vm1310, %v1289, %v1291
        %v1321 = vsel %vm1310, %v1287, %v1289
        %v1322 = vsel %vm1310, %v1285, %v1287
        %v1323 = vsel %vm1310, %v1283, %v1285
        %v1324 = vsel %vm1310, %v1281, %v1283
        %v1325 = vsel %vm1310, %v1279, %v1281
        %v1326 = vsel %vm1310, %v1277, %v1279
        %v1327 = vsel %vm1310, %v1275, %v1277
        %v1328 = vsel %vm1310, %v1273, %v1275
        %v1329 = vmul.f32 %v1326, 0.0003405663
        %v1330 = vmul.f32 %v1325, 0.0003405663
        %v1331 = vmul.f32 %v1324, 0.0003405663
        %v1332 = vmul.f32 %v1323, 0.0003405663
        %v1333 = vmul.f32 %v1322, 0.0003405663
        %v1334 = vmul.f32 %v1321, 0.0003405663
        %v1335 = vmul.f32 %v1320, 0.0003405663
        %v1336 = vmul.f32 %v1319, 0.0003405663
        %v1337 = vmul.f32 %v1318, 0.0003405663
        %v1338 = vmul.f32 %v1317, 0.0003405663
        %v1339 = vmul.f32 %v1316, 0.0003405663
        %v1340 = vmul.f32 %v1315, 0.0003405663
        %v1341 = vmul.f32 %v1314, 0.0003405663
        %v1342 = vmul.f32 %v1313, 0.0003405663
        %v1343 = vmul.f32 %v1312, 0.0003405663
        %v1344 = vmul.f32 %v1311, 0.0003405663
        %v1345 = vadd.f32 %v1133, %v1329
        %v1346 = vadd.f32 %v1134, %v1330
        %v1347 = vadd.f32 %v1135, %v1331
        %v1348 = vadd.f32 %v1136, %v1332
        %v1349 = vadd.f32 %v1137, %v1333
        %v1350 = vadd.f32 %v1138, %v1334
        %v1351 = vadd.f32 %v1139, %v1335
        %v1352 = vadd.f32 %v1140, %v1336
        %v1353 = vadd.f32 %v1141, %v1337
        %v1354 = vadd.f32 %v1142, %v1338
        %v1355 = vadd.f32 %v1143, %v1339
        %v1356 = vadd.f32 %v1144, %v1340
        %v1357 = vadd.f32 %v1145, %v1341
        %v1358 = vadd.f32 %v1146, %v1342
        %v1359 = vadd.f32 %v1147, %v1343
        %v1360 = vadd.f32 %v1148, %v1344
        %v1361 = vmul.f32 %v1328, 0.00028098124
        %v1362 = vmul.f32 %v1327, 0.00028098124
        %v1363 = vmul.f32 %v1326, 0.00028098124
        %v1364 = vmul.f32 %v1325, 0.00028098124
        %v1365 = vmul.f32 %v1324, 0.00028098124
        %v1366 = vmul.f32 %v1323, 0.00028098124
        %v1367 = vmul.f32 %v1322, 0.00028098124
        %v1368 = vmul.f32 %v1321, 0.00028098124
        %v1369 = vmul.f32 %v1320, 0.00028098124
        %v1370 = vmul.f32 %v1319, 0.00028098124
        %v1371 = vmul.f32 %v1318, 0.00028098124
        %v1372 = vmul.f32 %v1317, 0.00028098124
        %v1373 = vmul.f32 %v1316, 0.00028098124
        %v1374 = vmul.f32 %v1315, 0.00028098124
        %v1375 = vmul.f32 %v1314, 0.00028098124
        %v1376 = vmul.f32 %v1313, 0.00028098124
        %v1377 = vadd.f32 %v1235, %v1361
        %v1378 = vadd.f32 %v1236, %v1362
        %v1379 = vadd.f32 %v1237, %v1363
        %v1380 = vadd.f32 %v1238, %v1364
        %v1381 = vadd.f32 %v1239, %v1365
        %v1382 = vadd.f32 %v1240, %v1366
        %v1383 = vadd.f32 %v1241, %v1367
        %v1384 = vadd.f32 %v1242, %v1368
        %v1385 = vadd.f32 %v1243, %v1369
        %v1386 = vadd.f32 %v1244, %v1370
        %v1387 = vadd.f32 %v1245, %v1371
        %v1388 = vadd.f32 %v1246, %v1372
        %v1389 = vadd.f32 %v1247, %v1373
        %v1390 = vadd.f32 %v1248, %v1374
        %v1391 = vadd.f32 %v1249, %v1375
        %v1392 = vadd.f32 %v1250, %v1376
        %vm1393 = vcmask 384328
        %1394 = vst.msk [vmem:[#allocation2 + $0xf8] sm:$0xff] %vm1393, 0.0
        %v1395 = vld [vmem:[#allocation2 + $0x30] sm:$0xff]
        %v1396 = vld [vmem:[#allocation2 + $0x38] sm:$0xff]
        %v1397 = vld [vmem:[#allocation2 + $0x40] sm:$0xff]
        %v1398 = vld [vmem:[#allocation2 + $0x48] sm:$0xff]
        %v1399 = vld [vmem:[#allocation2 + $0x50] sm:$0xff]
        %v1400 = vld [vmem:[#allocation2 + $0x58] sm:$0xff]
        %v1401 = vld [vmem:[#allocation2 + $0x60] sm:$0xff]
        %v1402 = vld [vmem:[#allocation2 + $0x68] sm:$0xff]
        %v1403 = vld [vmem:[#allocation2 + $0x70] sm:$0xff]
        %v1404 = vld [vmem:[#allocation2 + $0x78] sm:$0xff]
        %v1405 = vld [vmem:[#allocation2 + $0x80] sm:$0xff]
        %v1406 = vld [vmem:[#allocation2 + $0x88] sm:$0xff]
        %v1407 = vld [vmem:[#allocation2 + $0x90] sm:$0xff]
        %v1408 = vld [vmem:[#allocation2 + $0x98] sm:$0xff]
        %v1409 = vld [vmem:[#allocation2 + $0xa0] sm:$0xff]
        %v1410 = vld [vmem:[#allocation2 + $0xa8] sm:$0xff]
        %v1411 = vld [vmem:[#allocation2 + $0xb0] sm:$0xff]
        %1412 = vrot.lane.b32.xlu0 %v1395, 87
        %v1413 = vpop.permute.xlu0 %1412
        %1414 = vrot.lane.b32.xlu0 %v1396, 87
        %v1415 = vpop.permute.xlu0 %1414
        %1416 = vrot.lane.b32.xlu0 %v1397, 87
        %v1417 = vpop.permute.xlu0 %1416
        %1418 = vrot.lane.b32.xlu0 %v1398, 87
        %v1419 = vpop.permute.xlu0 %1418
        %1420 = vrot.lane.b32.xlu0 %v1399, 87
        %v1421 = vpop.permute.xlu0 %1420
        %1422 = vrot.lane.b32.xlu0 %v1400, 87
        %v1423 = vpop.permute.xlu0 %1422
        %1424 = vrot.lane.b32.xlu0 %v1401, 87
        %v1425 = vpop.permute.xlu0 %1424
        %1426 = vrot.lane.b32.xlu0 %v1402, 87
        %v1427 = vpop.permute.xlu0 %1426
        %1428 = vrot.lane.b32.xlu0 %v1403, 87
        %v1429 = vpop.permute.xlu0 %1428
        %1430 = vrot.lane.b32.xlu0 %v1404, 87
        %v1431 = vpop.permute.xlu0 %1430
        %1432 = vrot.lane.b32.xlu0 %v1405, 87
        %v1433 = vpop.permute.xlu0 %1432
        %1434 = vrot.lane.b32.xlu0 %v1406, 87
        %v1435 = vpop.permute.xlu0 %1434
        %1436 = vrot.lane.b32.xlu0 %v1407, 87
        %v1437 = vpop.permute.xlu0 %1436
        %1438 = vrot.lane.b32.xlu0 %v1408, 87
        %v1439 = vpop.permute.xlu0 %1438
        %1440 = vrot.lane.b32.xlu0 %v1409, 87
        %v1441 = vpop.permute.xlu0 %1440
        %1442 = vrot.lane.b32.xlu0 %v1410, 87
        %v1443 = vpop.permute.xlu0 %1442
        %1444 = vrot.lane.b32.xlu0 %v1411, 87
        %v1445 = vpop.permute.xlu0 %1444
        %vm1446 = vcmp.lt.s32.totalorder %v283, 87
        %v1447 = vsel %vm1446, %v1443, %v1445
        %v1448 = vsel %vm1446, %v1441, %v1443
        %v1449 = vsel %vm1446, %v1439, %v1441
        %v1450 = vsel %vm1446, %v1437, %v1439
        %v1451 = vsel %vm1446, %v1435, %v1437
        %v1452 = vsel %vm1446, %v1433, %v1435
        %v1453 = vsel %vm1446, %v1431, %v1433
        %v1454 = vsel %vm1446, %v1429, %v1431
        %v1455 = vsel %vm1446, %v1427, %v1429
        %v1456 = vsel %vm1446, %v1425, %v1427
        %v1457 = vsel %vm1446, %v1423, %v1425
        %v1458 = vsel %vm1446, %v1421, %v1423
        %v1459 = vsel %vm1446, %v1419, %v1421
        %v1460 = vsel %vm1446, %v1417, %v1419
        %v1461 = vsel %vm1446, %v1415, %v1417
        %v1462 = vsel %vm1446, %v1413, %v1415
        %v1463 = vmul.f32 %v1462, 0.00032923027
        %v1464 = vmul.f32 %v1461, 0.00032923027
        %v1465 = vmul.f32 %v1460, 0.00032923027
        %v1466 = vmul.f32 %v1459, 0.00032923027
        %v1467 = vmul.f32 %v1458, 0.00032923027
        %v1468 = vmul.f32 %v1457, 0.00032923027
        %v1469 = vmul.f32 %v1456, 0.00032923027
        %v1470 = vmul.f32 %v1455, 0.00032923027
        %v1471 = vmul.f32 %v1454, 0.00032923027
        %v1472 = vmul.f32 %v1453, 0.00032923027
        %v1473 = vmul.f32 %v1452, 0.00032923027
        %v1474 = vmul.f32 %v1451, 0.00032923027
        %v1475 = vmul.f32 %v1450, 0.00032923027
        %v1476 = vmul.f32 %v1449, 0.00032923027
        %v1477 = vmul.f32 %v1448, 0.00032923027
        %v1478 = vmul.f32 %v1447, 0.00032923027
        %v1479 = vadd.f32 %v1345, %v1463
        %v1480 = vadd.f32 %v1346, %v1464
        %v1481 = vadd.f32 %v1347, %v1465
        %v1482 = vadd.f32 %v1348, %v1466
        %v1483 = vadd.f32 %v1349, %v1467
        %v1484 = vadd.f32 %v1350, %v1468
        %v1485 = vadd.f32 %v1351, %v1469
        %v1486 = vadd.f32 %v1352, %v1470
        %v1487 = vadd.f32 %v1353, %v1471
        %v1488 = vadd.f32 %v1354, %v1472
        %v1489 = vadd.f32 %v1355, %v1473
        %v1490 = vadd.f32 %v1356, %v1474
        %v1491 = vadd.f32 %v1357, %v1475
        %v1492 = vadd.f32 %v1358, %v1476
        %v1493 = vadd.f32 %v1359, %v1477
        %v1494 = vadd.f32 %v1360, %v1478
        %vm1495 = vcmask 335136
        %1496 = vst.msk [vmem:[#allocation2 + $0xf8] sm:$0xff] %vm1495, 0.0
        %v1497 = vld [vmem:[#allocation2] sm:$0xff]
        %v1498 = vld [vmem:[#allocation2 + $0x8] sm:$0xff]
        %v1499 = vld [vmem:[#allocation2 + $0x10] sm:$0xff]
        %v1500 = vld [vmem:[#allocation2 + $0x18] sm:$0xff]
        %v1501 = vld [vmem:[#allocation2 + $0x20] sm:$0xff]
        %v1502 = vld [vmem:[#allocation2 + $0x28] sm:$0xff]
        %v1503 = vld [vmem:[#allocation2 + $0x30] sm:$0xff]
        %v1504 = vld [vmem:[#allocation2 + $0x38] sm:$0xff]
        %v1505 = vld [vmem:[#allocation2 + $0x40] sm:$0xff]
        %v1506 = vld [vmem:[#allocation2 + $0x48] sm:$0xff]
        %v1507 = vld [vmem:[#allocation2 + $0x50] sm:$0xff]
        %v1508 = vld [vmem:[#allocation2 + $0x58] sm:$0xff]
        %v1509 = vld [vmem:[#allocation2 + $0x60] sm:$0xff]
        %v1510 = vld [vmem:[#allocation2 + $0x68] sm:$0xff]
        %v1511 = vld [vmem:[#allocation2 + $0x70] sm:$0xff]
        %v1512 = vld [vmem:[#allocation2 + $0x78] sm:$0xff]
        %v1513 = vld [vmem:[#allocation2 + $0x80] sm:$0xff]
        %v1514 = vld [vmem:[#allocation2 + $0x88] sm:$0xff]
        %v1515 = vld [vmem:[#allocation2 + $0x90] sm:$0xff]
        %v1516 = vld [vmem:[#allocation2 + $0x98] sm:$0xff]
        %v1517 = vld [vmem:[#allocation2 + $0xa0] sm:$0xff]
        %v1518 = vld [vmem:[#allocation2 + $0xa8] sm:$0xff]
        %v1519 = vld [vmem:[#allocation2 + $0xb0] sm:$0xff]
        %v1520 = vld [vmem:[#allocation2 + $0xb8] sm:$0xff]
        %v1521 = vld [vmem:[#allocation2 + $0xc0] sm:$0xff]
        %v1522 = vld [vmem:[#allocation2 + $0xc8] sm:$0xff]
        %v1523 = vld [vmem:[#allocation2 + $0xd0] sm:$0xff]
        %1524 = vrot.lane.b32.xlu0 %v1497, 92
        %v1525 = vpop.permute.xlu0 %1524
        %1526 = vrot.lane.b32.xlu0 %v1498, 92
        %v1527 = vpop.permute.xlu0 %1526
        %1528 = vrot.lane.b32.xlu0 %v1499, 92
        %v1529 = vpop.permute.xlu0 %1528
        %1530 = vrot.lane.b32.xlu0 %v1500, 92
        %v1531 = vpop.permute.xlu0 %1530
        %1532 = vrot.lane.b32.xlu0 %v1501, 92
        %v1533 = vpop.permute.xlu0 %1532
        %1534 = vrot.lane.b32.xlu0 %v1502, 92
        %v1535 = vpop.permute.xlu0 %1534
        %1536 = vrot.lane.b32.xlu0 %v1503, 92
        %v1537 = vpop.permute.xlu0 %1536
        %1538 = vrot.lane.b32.xlu0 %v1504, 92
        %v1539 = vpop.permute.xlu0 %1538
        %1540 = vrot.lane.b32.xlu0 %v1505, 92
        %v1541 = vpop.permute.xlu0 %1540
        %1542 = vrot.lane.b32.xlu0 %v1506, 92
        %v1543 = vpop.permute.xlu0 %1542
        %1544 = vrot.lane.b32.xlu0 %v1507, 92
        %v1545 = vpop.permute.xlu0 %1544
        %1546 = vrot.lane.b32.xlu0 %v1508, 92
        %v1547 = vpop.permute.xlu0 %1546
        %1548 = vrot.lane.b32.xlu0 %v1509, 92
        %v1549 = vpop.permute.xlu0 %1548
        %1550 = vrot.lane.b32.xlu0 %v1510, 92
        %v1551 = vpop.permute.xlu0 %1550
        %1552 = vrot.lane.b32.xlu0 %v1511, 92
        %v1553 = vpop.permute.xlu0 %1552
        %1554 = vrot.lane.b32.xlu0 %v1512, 92
        %v1555 = vpop.permute.xlu0 %1554
        %1556 = vrot.lane.b32.xlu0 %v1513, 92
        %v1557 = vpop.permute.xlu0 %1556
        %1558 = vrot.lane.b32.xlu0 %v1514, 92
        %v1559 = vpop.permute.xlu0 %1558
        %1560 = vrot.lane.b32.xlu0 %v1515, 92
        %v1561 = vpop.permute.xlu0 %1560
        %1562 = vrot.lane.b32.xlu0 %v1516, 92
        %v1563 = vpop.permute.xlu0 %1562
        %1564 = vrot.lane.b32.xlu0 %v1517, 92
        %v1565 = vpop.permute.xlu0 %1564
        %1566 = vrot.lane.b32.xlu0 %v1518, 92
        %v1567 = vpop.permute.xlu0 %1566
        %1568 = vrot.lane.b32.xlu0 %v1519, 92
        %v1569 = vpop.permute.xlu0 %1568
        %1570 = vrot.lane.b32.xlu0 %v1520, 92
        %v1571 = vpop.permute.xlu0 %1570
        %1572 = vrot.lane.b32.xlu0 %v1521, 92
        %v1573 = vpop.permute.xlu0 %1572
        %1574 = vrot.lane.b32.xlu0 %v1522, 92
        %v1575 = vpop.permute.xlu0 %1574
        %1576 = vrot.lane.b32.xlu0 %v1523, 92
        %v1577 = vpop.permute.xlu0 %1576
        %vm1578 = vcmp.lt.s32.totalorder %v283, 92
        %v1579 = vsel %vm1578, %v1575, %v1577
        %v1580 = vsel %vm1578, %v1573, %v1575
        %v1581 = vsel %vm1578, %v1571, %v1573
        %v1582 = vsel %vm1578, %v1569, %v1571
        %v1583 = vsel %vm1578, %v1567, %v1569
        %v1584 = vsel %vm1578, %v1565, %v1567
        %v1585 = vsel %vm1578, %v1563, %v1565
        %v1586 = vsel %vm1578, %v1561, %v1563
        %v1587 = vsel %vm1578, %v1559, %v1561
        %v1588 = vsel %vm1578, %v1557, %v1559
        %v1589 = vsel %vm1578, %v1555, %v1557
        %v1590 = vsel %vm1578, %v1553, %v1555
        %v1591 = vsel %vm1578, %v1551, %v1553
        %v1592 = vsel %vm1578, %v1549, %v1551
        %v1593 = vsel %vm1578, %v1547, %v1549
        %v1594 = vsel %vm1578, %v1545, %v1547
        %v1595 = vsel %vm1578, %v1543, %v1545
        %v1596 = vsel %vm1578, %v1541, %v1543
        %v1597 = vsel %vm1578, %v1539, %v1541
        %v1598 = vsel %vm1578, %v1537, %v1539
        %v1599 = vsel %vm1578, %v1535, %v1537
        %v1600 = vsel %vm1578, %v1533, %v1535
        %v1601 = vsel %vm1578, %v1531, %v1533
        %v1602 = vsel %vm1578, %v1529, %v1531
        %v1603 = vsel %vm1578, %v1527, %v1529
        %v1604 = vsel %vm1578, %v1525, %v1527
        %v1605 = vmul.f32 %v1594, 0.0004965871
        %v1606 = vmul.f32 %v1593, 0.0004965871
        %v1607 = vmul.f32 %v1592, 0.0004965871
        %v1608 = vmul.f32 %v1591, 0.0004965871
        %v1609 = vmul.f32 %v1590, 0.0004965871
        %v1610 = vmul.f32 %v1589, 0.0004965871
        %v1611 = vmul.f32 %v1588, 0.0004965871
        %v1612 = vmul.f32 %v1587, 0.0004965871
        %v1613 = vmul.f32 %v1586, 0.0004965871
        %v1614 = vmul.f32 %v1585, 0.0004965871
        %v1615 = vmul.f32 %v1584, 0.0004965871
        %v1616 = vmul.f32 %v1583, 0.0004965871
        %v1617 = vmul.f32 %v1582, 0.0004965871
        %v1618 = vmul.f32 %v1581, 0.0004965871
        %v1619 = vmul.f32 %v1580, 0.0004965871
        %v1620 = vmul.f32 %v1579, 0.0004965871
        %v1621 = vadd.f32 %v1377, %v1605
        %v1622 = vadd.f32 %v1378, %v1606
        %v1623 = vadd.f32 %v1379, %v1607
        %v1624 = vadd.f32 %v1380, %v1608
        %v1625 = vadd.f32 %v1381, %v1609
        %v1626 = vadd.f32 %v1382, %v1610
        %v1627 = vadd.f32 %v1383, %v1611
        %v1628 = vadd.f32 %v1384, %v1612
        %v1629 = vadd.f32 %v1385, %v1613
        %v1630 = vadd.f32 %v1386, %v1614
        %v1631 = vadd.f32 %v1387, %v1615
        %v1632 = vadd.f32 %v1388, %v1616
        %v1633 = vadd.f32 %v1389, %v1617
        %v1634 = vadd.f32 %v1390, %v1618
        %v1635 = vadd.f32 %v1391, %v1619
        %v1636 = vadd.f32 %v1392, %v1620
        %v1637 = vmul.f32 %v1604, 0.0001828776
        %v1638 = vmul.f32 %v1603, 0.0001828776
        %v1639 = vmul.f32 %v1602, 0.0001828776
        %v1640 = vmul.f32 %v1601, 0.0001828776
        %v1641 = vmul.f32 %v1600, 0.0001828776
        %v1642 = vmul.f32 %v1599, 0.0001828776
        %v1643 = vmul.f32 %v1598, 0.0001828776
        %v1644 = vmul.f32 %v1597, 0.0001828776
        %v1645 = vmul.f32 %v1596, 0.0001828776
        %v1646 = vmul.f32 %v1595, 0.0001828776
        %v1647 = vmul.f32 %v1594, 0.0001828776
        %v1648 = vmul.f32 %v1593, 0.0001828776
        %v1649 = vmul.f32 %v1592, 0.0001828776
        %v1650 = vmul.f32 %v1591, 0.0001828776
        %v1651 = vmul.f32 %v1590, 0.0001828776
        %v1652 = vmul.f32 %v1589, 0.0001828776
        %v1653 = vadd.f32 %v1479, %v1637
        %v1654 = vadd.f32 %v1480, %v1638
        %v1655 = vadd.f32 %v1481, %v1639
        %v1656 = vadd.f32 %v1482, %v1640
        %v1657 = vadd.f32 %v1483, %v1641
        %v1658 = vadd.f32 %v1484, %v1642
        %v1659 = vadd.f32 %v1485, %v1643
        %v1660 = vadd.f32 %v1486, %v1644
        %v1661 = vadd.f32 %v1487, %v1645
        %v1662 = vadd.f32 %v1488, %v1646
        %v1663 = vadd.f32 %v1489, %v1647
        %v1664 = vadd.f32 %v1490, %v1648
        %v1665 = vadd.f32 %v1491, %v1649
        %v1666 = vadd.f32 %v1492, %v1650
        %v1667 = vadd.f32 %v1493, %v1651
        %v1668 = vadd.f32 %v1494, %v1652
        %vm1669 = vcmask 294128
        %1670 = vst.msk [vmem:[#allocation2 + $0xf8] sm:$0xff] %vm1669, 0.0
        %v1671 = vld [vmem:[#allocation2 + $0x60] sm:$0xff]
        %v1672 = vld [vmem:[#allocation2 + $0x68] sm:$0xff]
        %v1673 = vld [vmem:[#allocation2 + $0x70] sm:$0xff]
        %v1674 = vld [vmem:[#allocation2 + $0x78] sm:$0xff]
        %v1675 = vld [vmem:[#allocation2 + $0x80] sm:$0xff]
        %v1676 = vld [vmem:[#allocation2 + $0x88] sm:$0xff]
        %v1677 = vld [vmem:[#allocation2 + $0x90] sm:$0xff]
        %v1678 = vld [vmem:[#allocation2 + $0x98] sm:$0xff]
        %v1679 = vld [vmem:[#allocation2 + $0xa0] sm:$0xff]
        %v1680 = vld [vmem:[#allocation2 + $0xa8] sm:$0xff]
        %v1681 = vld [vmem:[#allocation2 + $0xb0] sm:$0xff]
        %v1682 = vld [vmem:[#allocation2 + $0xb8] sm:$0xff]
        %v1683 = vld [vmem:[#allocation2 + $0xc0] sm:$0xff]
        %v1684 = vld [vmem:[#allocation2 + $0xc8] sm:$0xff]
        %v1685 = vld [vmem:[#allocation2 + $0xd0] sm:$0xff]
        %v1686 = vld [vmem:[#allocation2 + $0xd8] sm:$0xff]
        %v1687 = vld [vmem:[#allocation2 + $0xe0] sm:$0xff]
        %1688 = vrot.lane.b32.xlu0 %v1671, 98
        %v1689 = vpop.permute.xlu0 %1688
        %1690 = vrot.lane.b32.xlu0 %v1672, 98
        %v1691 = vpop.permute.xlu0 %1690
        %1692 = vrot.lane.b32.xlu0 %v1673, 98
        %v1693 = vpop.permute.xlu0 %1692
        %1694 = vrot.lane.b32.xlu0 %v1674, 98
        %v1695 = vpop.permute.xlu0 %1694
        %1696 = vrot.lane.b32.xlu0 %v1675, 98
        %v1697 = vpop.permute.xlu0 %1696
        %1698 = vrot.lane.b32.xlu0 %v1676, 98
        %v1699 = vpop.permute.xlu0 %1698
        %1700 = vrot.lane.b32.xlu0 %v1677, 98
        %v1701 = vpop.permute.xlu0 %1700
        %1702 = vrot.lane.b32.xlu0 %v1678, 98
        %v1703 = vpop.permute.xlu0 %1702
        %1704 = vrot.lane.b32.xlu0 %v1679, 98
        %v1705 = vpop.permute.xlu0 %1704
        %1706 = vrot.lane.b32.xlu0 %v1680, 98
        %v1707 = vpop.permute.xlu0 %1706
        %1708 = vrot.lane.b32.xlu0 %v1681, 98
        %v1709 = vpop.permute.xlu0 %1708
        %1710 = vrot.lane.b32.xlu0 %v1682, 98
        %v1711 = vpop.permute.xlu0 %1710
        %1712 = vrot.lane.b32.xlu0 %v1683, 98
        %v1713 = vpop.permute.xlu0 %1712
        %1714 = vrot.lane.b32.xlu0 %v1684, 98
        %v1715 = vpop.permute.xlu0 %1714
        %1716 = vrot.lane.b32.xlu0 %v1685, 98
        %v1717 = vpop.permute.xlu0 %1716
        %1718 = vrot.lane.b32.xlu0 %v1686, 98
        %v1719 = vpop.permute.xlu0 %1718
        %1720 = vrot.lane.b32.xlu0 %v1687, 98
        %v1721 = vpop.permute.xlu0 %1720
        %vm1722 = vcmp.lt.s32.totalorder %v283, 98
        %v1723 = vsel %vm1722, %v1719, %v1721
        %v1724 = vsel %vm1722, %v1717, %v1719
        %v1725 = vsel %vm1722, %v1715, %v1717
        %v1726 = vsel %vm1722, %v1713, %v1715
        %v1727 = vsel %vm1722, %v1711, %v1713
        %v1728 = vsel %vm1722, %v1709, %v1711
        %v1729 = vsel %vm1722, %v1707, %v1709
        %v1730 = vsel %vm1722, %v1705, %v1707
        %v1731 = vsel %vm1722, %v1703, %v1705
        %v1732 = vsel %vm1722, %v1701, %v1703
        %v1733 = vsel %vm1722, %v1699, %v1701
        %v1734 = vsel %vm1722, %v1697, %v1699
        %v1735 = vsel %vm1722, %v1695, %v1697
        %v1736 = vsel %vm1722, %v1693, %v1695
        %v1737 = vsel %vm1722, %v1691, %v1693
        %v1738 = vsel %vm1722, %v1689, %v1691
        %v1739 = vmul.f32 %v1738, 0.0006022131
        %v1740 = vmul.f32 %v1737, 0.0006022131
        %v1741 = vmul.f32 %v1736, 0.0006022131
        %v1742 = vmul.f32 %v1735, 0.0006022131
        %v1743 = vmul.f32 %v1734, 0.0006022131
        %v1744 = vmul.f32 %v1733, 0.0006022131
        %v1745 = vmul.f32 %v1732, 0.0006022131
        %v1746 = vmul.f32 %v1731, 0.0006022131
        %v1747 = vmul.f32 %v1730, 0.0006022131
        %v1748 = vmul.f32 %v1729, 0.0006022131
        %v1749 = vmul.f32 %v1728, 0.0006022131
        %v1750 = vmul.f32 %v1727, 0.0006022131
        %v1751 = vmul.f32 %v1726, 0.0006022131
        %v1752 = vmul.f32 %v1725, 0.0006022131
        %v1753 = vmul.f32 %v1724, 0.0006022131
        %v1754 = vmul.f32 %v1723, 0.0006022131
        %v1755 = vadd.f32 %v1621, %v1739
        %v1756 = vadd.f32 %v1622, %v1740
        %v1757 = vadd.f32 %v1623, %v1741
        %v1758 = vadd.f32 %v1624, %v1742
        %v1759 = vadd.f32 %v1625, %v1743
        %v1760 = vadd.f32 %v1626, %v1744
        %v1761 = vadd.f32 %v1627, %v1745
        %v1762 = vadd.f32 %v1628, %v1746
        %v1763 = vadd.f32 %v1629, %v1747
        %v1764 = vadd.f32 %v1630, %v1748
        %v1765 = vadd.f32 %v1631, %v1749
        %v1766 = vadd.f32 %v1632, %v1750
        %v1767 = vadd.f32 %v1633, %v1751
        %v1768 = vadd.f32 %v1634, %v1752
        %v1769 = vadd.f32 %v1635, %v1753
        %v1770 = vadd.f32 %v1636, %v1754
        %vm1771 = vcmask 244936
        %1772 = vst.msk [vmem:[#allocation2 + $0xf8] sm:$0xff] %vm1771, 0.0
        %v1773 = vld [vmem:[#allocation2 + $0x20] sm:$0xff]
        %v1774 = vld [vmem:[#allocation2 + $0x28] sm:$0xff]
        %v1775 = vld [vmem:[#allocation2 + $0x30] sm:$0xff]
        %v1776 = vld [vmem:[#allocation2 + $0x38] sm:$0xff]
        %v1777 = vld [vmem:[#allocation2 + $0x40] sm:$0xff]
        %v1778 = vld [vmem:[#allocation2 + $0x48] sm:$0xff]
        %v1779 = vld [vmem:[#allocation2 + $0x50] sm:$0xff]
        %v1780 = vld [vmem:[#allocation2 + $0x58] sm:$0xff]
        %v1781 = vld [vmem:[#allocation2 + $0x60] sm:$0xff]
        %v1782 = vld [vmem:[#allocation2 + $0x68] sm:$0xff]
        %v1783 = vld [vmem:[#allocation2 + $0x70] sm:$0xff]
        %v1784 = vld [vmem:[#allocation2 + $0x78] sm:$0xff]
        %v1785 = vld [vmem:[#allocation2 + $0x80] sm:$0xff]
        %v1786 = vld [vmem:[#allocation2 + $0x88] sm:$0xff]
        %v1787 = vld [vmem:[#allocation2 + $0x90] sm:$0xff]
        %v1788 = vld [vmem:[#allocation2 + $0x98] sm:$0xff]
        %v1789 = vld [vmem:[#allocation2 + $0xa0] sm:$0xff]
        %1790 = vrot.lane.b32.xlu0 %v1773, 103
        %v1791 = vpop.permute.xlu0 %1790
        %1792 = vrot.lane.b32.xlu0 %v1774, 103
        %v1793 = vpop.permute.xlu0 %1792
        %1794 = vrot.lane.b32.xlu0 %v1775, 103
        %v1795 = vpop.permute.xlu0 %1794
        %1796 = vrot.lane.b32.xlu0 %v1776, 103
        %v1797 = vpop.permute.xlu0 %1796
        %1798 = vrot.lane.b32.xlu0 %v1777, 103
        %v1799 = vpop.permute.xlu0 %1798
        %1800 = vrot.lane.b32.xlu0 %v1778, 103
        %v1801 = vpop.permute.xlu0 %1800
        %1802 = vrot.lane.b32.xlu0 %v1779, 103
        %v1803 = vpop.permute.xlu0 %1802
        %1804 = vrot.lane.b32.xlu0 %v1780, 103
        %v1805 = vpop.permute.xlu0 %1804
        %1806 = vrot.lane.b32.xlu0 %v1781, 103
        %v1807 = vpop.permute.xlu0 %1806
        %1808 = vrot.lane.b32.xlu0 %v1782, 103
        %v1809 = vpop.permute.xlu0 %1808
        %1810 = vrot.lane.b32.xlu0 %v1783, 103
        %v1811 = vpop.permute.xlu0 %1810
        %1812 = vrot.lane.b32.xlu0 %v1784, 103
        %v1813 = vpop.permute.xlu0 %1812
        %1814 = vrot.lane.b32.xlu0 %v1785, 103
        %v1815 = vpop.permute.xlu0 %1814
        %1816 = vrot.lane.b32.xlu0 %v1786, 103
        %v1817 = vpop.permute.xlu0 %1816
        %1818 = vrot.lane.b32.xlu0 %v1787, 103
        %v1819 = vpop.permute.xlu0 %1818
        %1820 = vrot.lane.b32.xlu0 %v1788, 103
        %v1821 = vpop.permute.xlu0 %1820
        %1822 = vrot.lane.b32.xlu0 %v1789, 103
        %v1823 = vpop.permute.xlu0 %1822
        %vm1824 = vcmp.lt.s32.totalorder %v283, 103
        %v1825 = vsel %vm1824, %v1821, %v1823
        %v1826 = vsel %vm1824, %v1819, %v1821
        %v1827 = vsel %vm1824, %v1817, %v1819
        %v1828 = vsel %vm1824, %v1815, %v1817
        %v1829 = vsel %vm1824, %v1813, %v1815
        %v1830 = vsel %vm1824, %v1811, %v1813
        %v1831 = vsel %vm1824, %v1809, %v1811
        %v1832 = vsel %vm1824, %v1807, %v1809
        %v1833 = vsel %vm1824, %v1805, %v1807
        %v1834 = vsel %vm1824, %v1803, %v1805
        %v1835 = vsel %vm1824, %v1801, %v1803
        %v1836 = vsel %vm1824, %v1799, %v1801
        %v1837 = vsel %vm1824, %v1797, %v1799
        %v1838 = vsel %vm1824, %v1795, %v1797
        %v1839 = vsel %vm1824, %v1793, %v1795
        %v1840 = vsel %vm1824, %v1791, %v1793
        %v1841 = vmul.f32 %v1840, 0.0002723303
        %v1842 = vmul.f32 %v1839, 0.0002723303
        %v1843 = vmul.f32 %v1838, 0.0002723303
        %v1844 = vmul.f32 %v1837, 0.0002723303
        %v1845 = vmul.f32 %v1836, 0.0002723303
        %v1846 = vmul.f32 %v1835, 0.0002723303
        %v1847 = vmul.f32 %v1834, 0.0002723303
        %v1848 = vmul.f32 %v1833, 0.0002723303
        %v1849 = vmul.f32 %v1832, 0.0002723303
        %v1850 = vmul.f32 %v1831, 0.0002723303
        %v1851 = vmul.f32 %v1830, 0.0002723303
        %v1852 = vmul.f32 %v1829, 0.0002723303
        %v1853 = vmul.f32 %v1828, 0.0002723303
        %v1854 = vmul.f32 %v1827, 0.0002723303
        %v1855 = vmul.f32 %v1826, 0.0002723303
        %v1856 = vmul.f32 %v1825, 0.0002723303
        %v1857 = vadd.f32 %v1653, %v1841
        %v1858 = vadd.f32 %v1654, %v1842
        %v1859 = vadd.f32 %v1655, %v1843
        %v1860 = vadd.f32 %v1656, %v1844
        %v1861 = vadd.f32 %v1657, %v1845
        %v1862 = vadd.f32 %v1658, %v1846
        %v1863 = vadd.f32 %v1659, %v1847
        %v1864 = vadd.f32 %v1660, %v1848
        %v1865 = vadd.f32 %v1661, %v1849
        %v1866 = vadd.f32 %v1662, %v1850
        %v1867 = vadd.f32 %v1663, %v1851
        %v1868 = vadd.f32 %v1664, %v1852
        %v1869 = vadd.f32 %v1665, %v1853
        %v1870 = vadd.f32 %v1666, %v1854
        %v1871 = vadd.f32 %v1667, %v1855
        %v1872 = vadd.f32 %v1668, %v1856
        %vm1873 = vcmask 203928
        %1874 = vst.msk [vmem:[#allocation2 + $0xf8] sm:$0xff] %vm1873, 0.0
        %v1875 = vld [vmem:[#allocation2 + $0x70] sm:$0xff]
        %v1876 = vld [vmem:[#allocation2 + $0x78] sm:$0xff]
        %v1877 = vld [vmem:[#allocation2 + $0x80] sm:$0xff]
        %v1878 = vld [vmem:[#allocation2 + $0x88] sm:$0xff]
        %v1879 = vld [vmem:[#allocation2 + $0x90] sm:$0xff]
        %v1880 = vld [vmem:[#allocation2 + $0x98] sm:$0xff]
        %v1881 = vld [vmem:[#allocation2 + $0xa0] sm:$0xff]
        %v1882 = vld [vmem:[#allocation2 + $0xa8] sm:$0xff]
        %v1883 = vld [vmem:[#allocation2 + $0xb0] sm:$0xff]
        %v1884 = vld [vmem:[#allocation2 + $0xb8] sm:$0xff]
        %v1885 = vld [vmem:[#allocation2 + $0xc0] sm:$0xff]
        %v1886 = vld [vmem:[#allocation2 + $0xc8] sm:$0xff]
        %v1887 = vld [vmem:[#allocation2 + $0xd0] sm:$0xff]
        %v1888 = vld [vmem:[#allocation2 + $0xd8] sm:$0xff]
        %v1889 = vld [vmem:[#allocation2 + $0xe0] sm:$0xff]
        %v1890 = vld [vmem:[#allocation2 + $0xe8] sm:$0xff]
        %v1891 = vld [vmem:[#allocation2 + $0xf0] sm:$0xff]
        %1892 = vrot.lane.b32.xlu0 %v1875, 109
        %v1893 = vpop.permute.xlu0 %1892
        %1894 = vrot.lane.b32.xlu0 %v1876, 109
        %v1895 = vpop.permute.xlu0 %1894
        %1896 = vrot.lane.b32.xlu0 %v1877, 109
        %v1897 = vpop.permute.xlu0 %1896
        %1898 = vrot.lane.b32.xlu0 %v1878, 109
        %v1899 = vpop.permute.xlu0 %1898
        %1900 = vrot.lane.b32.xlu0 %v1879, 109
        %v1901 = vpop.permute.xlu0 %1900
        %1902 = vrot.lane.b32.xlu0 %v1880, 109
        %v1903 = vpop.permute.xlu0 %1902
        %1904 = vrot.lane.b32.xlu0 %v1881, 109
        %v1905 = vpop.permute.xlu0 %1904
        %1906 = vrot.lane.b32.xlu0 %v1882, 109
        %v1907 = vpop.permute.xlu0 %1906
        %1908 = vrot.lane.b32.xlu0 %v1883, 109
        %v1909 = vpop.permute.xlu0 %1908
        %1910 = vrot.lane.b32.xlu0 %v1884, 109
        %v1911 = vpop.permute.xlu0 %1910
        %1912 = vrot.lane.b32.xlu0 %v1885, 109
        %v1913 = vpop.permute.xlu0 %1912
        %1914 = vrot.lane.b32.xlu0 %v1886, 109
        %v1915 = vpop.permute.xlu0 %1914
        %1916 = vrot.lane.b32.xlu0 %v1887, 109
        %v1917 = vpop.permute.xlu0 %1916
        %1918 = vrot.lane.b32.xlu0 %v1888, 109
        %v1919 = vpop.permute.xlu0 %1918
        %1920 = vrot.lane.b32.xlu0 %v1889, 109
        %v1921 = vpop.permute.xlu0 %1920
        %1922 = vrot.lane.b32.xlu0 %v1890, 109
        %v1923 = vpop.permute.xlu0 %1922
        %1924 = vrot.lane.b32.xlu0 %v1891, 109
        %v1925 = vpop.permute.xlu0 %1924
        %vm1926 = vcmp.lt.s32.totalorder %v283, 109
        %v1927 = vsel %vm1926, %v1923, %v1925
        %v1928 = vsel %vm1926, %v1921, %v1923
        %v1929 = vsel %vm1926, %v1919, %v1921
        %v1930 = vsel %vm1926, %v1917, %v1919
        %v1931 = vsel %vm1926, %v1915, %v1917
        %v1932 = vsel %vm1926, %v1913, %v1915
        %v1933 = vsel %vm1926, %v1911, %v1913
        %v1934 = vsel %vm1926, %v1909, %v1911
        %v1935 = vsel %vm1926, %v1907, %v1909
        %v1936 = vsel %vm1926, %v1905, %v1907
        %v1937 = vsel %vm1926, %v1903, %v1905
        %v1938 = vsel %vm1926, %v1901, %v1903
        %v1939 = vsel %vm1926, %v1899, %v1901
        %v1940 = vsel %vm1926, %v1897, %v1899
        %v1941 = vsel %vm1926, %v1895, %v1897
        %v1942 = vsel %vm1926, %v1893, %v1895
        %v1943 = vmul.f32 %v1942, 0.00075032265
        %v1944 = vmul.f32 %v1941, 0.00075032265
        %v1945 = vmul.f32 %v1940, 0.00075032265
        %v1946 = vmul.f32 %v1939, 0.00075032265
        %v1947 = vmul.f32 %v1938, 0.00075032265
        %v1948 = vmul.f32 %v1937, 0.00075032265
        %v1949 = vmul.f32 %v1936, 0.00075032265
        %v1950 = vmul.f32 %v1935, 0.00075032265
        %v1951 = vmul.f32 %v1934, 0.00075032265
        %v1952 = vmul.f32 %v1933, 0.00075032265
        %v1953 = vmul.f32 %v1932, 0.00075032265
        %v1954 = vmul.f32 %v1931, 0.00075032265
        %v1955 = vmul.f32 %v1930, 0.00075032265
        %v1956 = vmul.f32 %v1929, 0.00075032265
        %v1957 = vmul.f32 %v1928, 0.00075032265
        %v1958 = vmul.f32 %v1927, 0.00075032265
        %v1959 = vadd.f32 %v1755, %v1943
        %v1960 = vadd.f32 %v1756, %v1944
        %v1961 = vadd.f32 %v1757, %v1945
        %v1962 = vadd.f32 %v1758, %v1946
        %v1963 = vadd.f32 %v1759, %v1947
        %v1964 = vadd.f32 %v1760, %v1948
        %v1965 = vadd.f32 %v1761, %v1949
        %v1966 = vadd.f32 %v1762, %v1950
        %v1967 = vadd.f32 %v1763, %v1951
        %v1968 = vadd.f32 %v1764, %v1952
        %v1969 = vadd.f32 %v1765, %v1953
        %v1970 = vadd.f32 %v1766, %v1954
        %v1971 = vadd.f32 %v1767, %v1955
        %v1972 = vadd.f32 %v1768, %v1956
        %v1973 = vadd.f32 %v1769, %v1957
        %v1974 = vadd.f32 %v1770, %v1958
        %vm1975 = vcmask 154752
        %1976 = vst.msk [vmem:[#allocation2 + $0xf8] sm:$0xff] %vm1975, 0.0
        %v1977 = vld [vmem:[#allocation2 + $0x40] sm:$0xff]
        %v1978 = vld [vmem:[#allocation2 + $0x48] sm:$0xff]
        %v1979 = vld [vmem:[#allocation2 + $0x50] sm:$0xff]
        %v1980 = vld [vmem:[#allocation2 + $0x58] sm:$0xff]
        %v1981 = vld [vmem:[#allocation2 + $0x60] sm:$0xff]
        %v1982 = vld [vmem:[#allocation2 + $0x68] sm:$0xff]
        %v1983 = vld [vmem:[#allocation2 + $0x70] sm:$0xff]
        %v1984 = vld [vmem:[#allocation2 + $0x78] sm:$0xff]
        %v1985 = vld [vmem:[#allocation2 + $0x80] sm:$0xff]
        %v1986 = vld [vmem:[#allocation2 + $0x88] sm:$0xff]
        %v1987 = vld [vmem:[#allocation2 + $0x90] sm:$0xff]
        %v1988 = vld [vmem:[#allocation2 + $0x98] sm:$0xff]
        %v1989 = vld [vmem:[#allocation2 + $0xa0] sm:$0xff]
        %v1990 = vld [vmem:[#allocation2 + $0xa8] sm:$0xff]
        %v1991 = vld [vmem:[#allocation2 + $0xb0] sm:$0xff]
        %v1992 = vld [vmem:[#allocation2 + $0xb8] sm:$0xff]
        %v1993 = vld [vmem:[#allocation2 + $0xc0] sm:$0xff]
        %1994 = vrot.lane.b32.xlu0 %v1977, 112
        %v1995 = vpop.permute.xlu0 %1994
        %1996 = vrot.lane.b32.xlu0 %v1978, 112
        %v1997 = vpop.permute.xlu0 %1996
        %1998 = vrot.lane.b32.xlu0 %v1979, 112
        %v1999 = vpop.permute.xlu0 %1998
        %2000 = vrot.lane.b32.xlu0 %v1980, 112
        %v2001 = vpop.permute.xlu0 %2000
        %2002 = vrot.lane.b32.xlu0 %v1981, 112
        %v2003 = vpop.permute.xlu0 %2002
        %2004 = vrot.lane.b32.xlu0 %v1982, 112
        %v2005 = vpop.permute.xlu0 %2004
        %2006 = vrot.lane.b32.xlu0 %v1983, 112
        %v2007 = vpop.permute.xlu0 %2006
        %2008 = vrot.lane.b32.xlu0 %v1984, 112
        %v2009 = vpop.permute.xlu0 %2008
        %2010 = vrot.lane.b32.xlu0 %v1985, 112
        %v2011 = vpop.permute.xlu0 %2010
        %2012 = vrot.lane.b32.xlu0 %v1986, 112
        %v2013 = vpop.permute.xlu0 %2012
        %2014 = vrot.lane.b32.xlu0 %v1987, 112
        %v2015 = vpop.permute.xlu0 %2014
        %2016 = vrot.lane.b32.xlu0 %v1988, 112
        %v2017 = vpop.permute.xlu0 %2016
        %2018 = vrot.lane.b32.xlu0 %v1989, 112
        %v2019 = vpop.permute.xlu0 %2018
        %2020 = vrot.lane.b32.xlu0 %v1990, 112
        %v2021 = vpop.permute.xlu0 %2020
        %2022 = vrot.lane.b32.xlu0 %v1991, 112
        %v2023 = vpop.permute.xlu0 %2022
        %2024 = vrot.lane.b32.xlu0 %v1992, 112
        %v2025 = vpop.permute.xlu0 %2024
        %2026 = vrot.lane.b32.xlu0 %v1993, 112
        %v2027 = vpop.permute.xlu0 %2026
        %vm2028 = vcmp.lt.s32.totalorder %v283, 112
        %v2029 = vsel %vm2028, %v2025, %v2027
        %v2030 = vsel %vm2028, %v2023, %v2025
        %v2031 = vsel %vm2028, %v2021, %v2023
        %v2032 = vsel %vm2028, %v2019, %v2021
        %v2033 = vsel %vm2028, %v2017, %v2019
        %v2034 = vsel %vm2028, %v2015, %v2017
        %v2035 = vsel %vm2028, %v2013, %v2015
        %v2036 = vsel %vm2028, %v2011, %v2013
        %v2037 = vsel %vm2028, %v2009, %v2011
        %v2038 = vsel %vm2028, %v2007, %v2009
        %v2039 = vsel %vm2028, %v2005, %v2007
        %v2040 = vsel %vm2028, %v2003, %v2005
        %v2041 = vsel %vm2028, %v2001, %v2003
        %v2042 = vsel %vm2028, %v1999, %v2001
        %v2043 = vsel %vm2028, %v1997, %v1999
        %v2044 = vsel %vm2028, %v1995, %v1997
        %v2045 = vmul.f32 %v2044, 0.00041799835
        %v2046 = vmul.f32 %v2043, 0.00041799835
        %v2047 = vmul.f32 %v2042, 0.00041799835
        %v2048 = vmul.f32 %v2041, 0.00041799835
        %v2049 = vmul.f32 %v2040, 0.00041799835
        %v2050 = vmul.f32 %v2039, 0.00041799835
        %v2051 = vmul.f32 %v2038, 0.00041799835
        %v2052 = vmul.f32 %v2037, 0.00041799835
        %v2053 = vmul.f32 %v2036, 0.00041799835
        %v2054 = vmul.f32 %v2035, 0.00041799835
        %v2055 = vmul.f32 %v2034, 0.00041799835
        %v2056 = vmul.f32 %v2033, 0.00041799835
        %v2057 = vmul.f32 %v2032, 0.00041799835
        %v2058 = vmul.f32 %v2031, 0.00041799835
        %v2059 = vmul.f32 %v2030, 0.00041799835
        %v2060 = vmul.f32 %v2029, 0.00041799835
        %v2061 = vadd.f32 %v1857, %v2045
        %v2062 = vadd.f32 %v1858, %v2046
        %v2063 = vadd.f32 %v1859, %v2047
        %v2064 = vadd.f32 %v1860, %v2048
        %v2065 = vadd.f32 %v1861, %v2049
        %v2066 = vadd.f32 %v1862, %v2050
        %v2067 = vadd.f32 %v1863, %v2051
        %v2068 = vadd.f32 %v1864, %v2052
        %v2069 = vadd.f32 %v1865, %v2053
        %v2070 = vadd.f32 %v1866, %v2054
        %v2071 = vadd.f32 %v1867, %v2055
        %v2072 = vadd.f32 %v1868, %v2056
        %v2073 = vadd.f32 %v1869, %v2057
        %v2074 = vadd.f32 %v1870, %v2058
        %v2075 = vadd.f32 %v1871, %v2059
        %v2076 = vadd.f32 %v1872, %v2060
        %vm2077 = vcmask 130152
        %2078 = vst.msk [vmem:[#allocation2 + $0xf8] sm:$0xff] %vm2077, 0.0
        %v2079 = vld [vmem:[#allocation2 + $0x30] sm:$0xff]
        %v2080 = vld [vmem:[#allocation2 + $0x38] sm:$0xff]
        %v2081 = vld [vmem:[#allocation2 + $0x40] sm:$0xff]
        %v2082 = vld [vmem:[#allocation2 + $0x48] sm:$0xff]
        %v2083 = vld [vmem:[#allocation2 + $0x50] sm:$0xff]
        %v2084 = vld [vmem:[#allocation2 + $0x58] sm:$0xff]
        %v2085 = vld [vmem:[#allocation2 + $0x60] sm:$0xff]
        %v2086 = vld [vmem:[#allocation2 + $0x68] sm:$0xff]
        %v2087 = vld [vmem:[#allocation2 + $0x70] sm:$0xff]
        %v2088 = vld [vmem:[#allocation2 + $0x78] sm:$0xff]
        %v2089 = vld [vmem:[#allocation2 + $0x80] sm:$0xff]
        %v2090 = vld [vmem:[#allocation2 + $0x88] sm:$0xff]
        %v2091 = vld [vmem:[#allocation2 + $0x90] sm:$0xff]
        %v2092 = vld [vmem:[#allocation2 + $0x98] sm:$0xff]
        %v2093 = vld [vmem:[#allocation2 + $0xa0] sm:$0xff]
        %v2094 = vld [vmem:[#allocation2 + $0xa8] sm:$0xff]
        %v2095 = vld [vmem:[#allocation2 + $0xb0] sm:$0xff]
        %2096 = vrot.lane.b32.xlu0 %v2079, 115
        %v2097 = vpop.permute.xlu0 %2096
        %2098 = vrot.lane.b32.xlu0 %v2080, 115
        %v2099 = vpop.permute.xlu0 %2098
        %2100 = vrot.lane.b32.xlu0 %v2081, 115
        %v2101 = vpop.permute.xlu0 %2100
        %2102 = vrot.lane.b32.xlu0 %v2082, 115
        %v2103 = vpop.permute.xlu0 %2102
        %2104 = vrot.lane.b32.xlu0 %v2083, 115
        %v2105 = vpop.permute.xlu0 %2104
        %2106 = vrot.lane.b32.xlu0 %v2084, 115
        %v2107 = vpop.permute.xlu0 %2106
        %2108 = vrot.lane.b32.xlu0 %v2085, 115
        %v2109 = vpop.permute.xlu0 %2108
        %2110 = vrot.lane.b32.xlu0 %v2086, 115
        %v2111 = vpop.permute.xlu0 %2110
        %2112 = vrot.lane.b32.xlu0 %v2087, 115
        %v2113 = vpop.permute.xlu0 %2112
        %2114 = vrot.lane.b32.xlu0 %v2088, 115
        %v2115 = vpop.permute.xlu0 %2114
        %2116 = vrot.lane.b32.xlu0 %v2089, 115
        %v2117 = vpop.permute.xlu0 %2116
        %2118 = vrot.lane.b32.xlu0 %v2090, 115
        %v2119 = vpop.permute.xlu0 %2118
        %2120 = vrot.lane.b32.xlu0 %v2091, 115
        %v2121 = vpop.permute.xlu0 %2120
        %2122 = vrot.lane.b32.xlu0 %v2092, 115
        %v2123 = vpop.permute.xlu0 %2122
        %2124 = vrot.lane.b32.xlu0 %v2093, 115
        %v2125 = vpop.permute.xlu0 %2124
        %2126 = vrot.lane.b32.xlu0 %v2094, 115
        %v2127 = vpop.permute.xlu0 %2126
        %2128 = vrot.lane.b32.xlu0 %v2095, 115
        %v2129 = vpop.permute.xlu0 %2128
        %vm2130 = vcmp.lt.s32.totalorder %v283, 115
        %v2131 = vsel %vm2130, %v2127, %v2129
        %v2132 = vsel %vm2130, %v2125, %v2127
        %v2133 = vsel %vm2130, %v2123, %v2125
        %v2134 = vsel %vm2130, %v2121, %v2123
        %v2135 = vsel %vm2130, %v2119, %v2121
        %v2136 = vsel %vm2130, %v2117, %v2119
        %v2137 = vsel %vm2130, %v2115, %v2117
        %v2138 = vsel %vm2130, %v2113, %v2115
        %v2139 = vsel %vm2130, %v2111, %v2113
        %v2140 = vsel %vm2130, %v2109, %v2111
        %v2141 = vsel %vm2130, %v2107, %v2109
        %v2142 = vsel %vm2130, %v2105, %v2107
        %v2143 = vsel %vm2130, %v2103, %v2105
        %v2144 = vsel %vm2130, %v2101, %v2103
        %v2145 = vsel %vm2130, %v2099, %v2101
        %v2146 = vsel %vm2130, %v2097, %v2099
        %v2147 = vmul.f32 %v2146, 0.0003396606
        %v2148 = vmul.f32 %v2145, 0.0003396606
        %v2149 = vmul.f32 %v2144, 0.0003396606
        %v2150 = vmul.f32 %v2143, 0.0003396606
        %v2151 = vmul.f32 %v2142, 0.0003396606
        %v2152 = vmul.f32 %v2141, 0.0003396606
        %v2153 = vmul.f32 %v2140, 0.0003396606
        %v2154 = vmul.f32 %v2139, 0.0003396606
        %v2155 = vmul.f32 %v2138, 0.0003396606
        %v2156 = vmul.f32 %v2137, 0.0003396606
        %v2157 = vmul.f32 %v2136, 0.0003396606
        %v2158 = vmul.f32 %v2135, 0.0003396606
        %v2159 = vmul.f32 %v2134, 0.0003396606
        %v2160 = vmul.f32 %v2133, 0.0003396606
        %v2161 = vmul.f32 %v2132, 0.0003396606
        %v2162 = vmul.f32 %v2131, 0.0003396606
        %v2163 = vadd.f32 %v1959, %v2147
        %v2164 = vadd.f32 %v1960, %v2148
        %v2165 = vadd.f32 %v1961, %v2149
        %v2166 = vadd.f32 %v1962, %v2150
        %v2167 = vadd.f32 %v1963, %v2151
        %v2168 = vadd.f32 %v1964, %v2152
        %v2169 = vadd.f32 %v1965, %v2153
        %v2170 = vadd.f32 %v1966, %v2154
        %v2171 = vadd.f32 %v1967, %v2155
        %v2172 = vadd.f32 %v1968, %v2156
        %v2173 = vadd.f32 %v1969, %v2157
        %v2174 = vadd.f32 %v1970, %v2158
        %v2175 = vadd.f32 %v1971, %v2159
        %v2176 = vadd.f32 %v1972, %v2160
        %v2177 = vadd.f32 %v1973, %v2161
        %v2178 = vadd.f32 %v1974, %v2162
        %vm2179 = vcmask 105552
        %2180 = vst.msk [vmem:[#allocation2 + $0xf8] sm:$0xff] %vm2179, 0.0
        %v2181 = vld [vmem:[#allocation2 + $0x40] sm:$0xff]
        %v2182 = vld [vmem:[#allocation2 + $0x48] sm:$0xff]
        %v2183 = vld [vmem:[#allocation2 + $0x50] sm:$0xff]
        %v2184 = vld [vmem:[#allocation2 + $0x58] sm:$0xff]
        %v2185 = vld [vmem:[#allocation2 + $0x60] sm:$0xff]
        %v2186 = vld [vmem:[#allocation2 + $0x68] sm:$0xff]
        %v2187 = vld [vmem:[#allocation2 + $0x70] sm:$0xff]
        %v2188 = vld [vmem:[#allocation2 + $0x78] sm:$0xff]
        %v2189 = vld [vmem:[#allocation2 + $0x80] sm:$0xff]
        %v2190 = vld [vmem:[#allocation2 + $0x88] sm:$0xff]
        %v2191 = vld [vmem:[#allocation2 + $0x90] sm:$0xff]
        %v2192 = vld [vmem:[#allocation2 + $0x98] sm:$0xff]
        %v2193 = vld [vmem:[#allocation2 + $0xa0] sm:$0xff]
        %v2194 = vld [vmem:[#allocation2 + $0xa8] sm:$0xff]
        %v2195 = vld [vmem:[#allocation2 + $0xb0] sm:$0xff]
        %v2196 = vld [vmem:[#allocation2 + $0xb8] sm:$0xff]
        %v2197 = vld [vmem:[#allocation2 + $0xc0] sm:$0xff]
        %2198 = vrot.lane.b32.xlu0 %v2181, 118
        %v2199 = vpop.permute.xlu0 %2198
        %2200 = vrot.lane.b32.xlu0 %v2182, 118
        %v2201 = vpop.permute.xlu0 %2200
        %2202 = vrot.lane.b32.xlu0 %v2183, 118
        %v2203 = vpop.permute.xlu0 %2202
        %2204 = vrot.lane.b32.xlu0 %v2184, 118
        %v2205 = vpop.permute.xlu0 %2204
        %2206 = vrot.lane.b32.xlu0 %v2185, 118
        %v2207 = vpop.permute.xlu0 %2206
        %2208 = vrot.lane.b32.xlu0 %v2186, 118
        %v2209 = vpop.permute.xlu0 %2208
        %2210 = vrot.lane.b32.xlu0 %v2187, 118
        %v2211 = vpop.permute.xlu0 %2210
        %2212 = vrot.lane.b32.xlu0 %v2188, 118
        %v2213 = vpop.permute.xlu0 %2212
        %2214 = vrot.lane.b32.xlu0 %v2189, 118
        %v2215 = vpop.permute.xlu0 %2214
        %2216 = vrot.lane.b32.xlu0 %v2190, 118
        %v2217 = vpop.permute.xlu0 %2216
        %2218 = vrot.lane.b32.xlu0 %v2191, 118
        %v2219 = vpop.permute.xlu0 %2218
        %2220 = vrot.lane.b32.xlu0 %v2192, 118
        %v2221 = vpop.permute.xlu0 %2220
        %2222 = vrot.lane.b32.xlu0 %v2193, 118
        %v2223 = vpop.permute.xlu0 %2222
        %2224 = vrot.lane.b32.xlu0 %v2194, 118
        %v2225 = vpop.permute.xlu0 %2224
        %2226 = vrot.lane.b32.xlu0 %v2195, 118
        %v2227 = vpop.permute.xlu0 %2226
        %2228 = vrot.lane.b32.xlu0 %v2196, 118
        %v2229 = vpop.permute.xlu0 %2228
        %2230 = vrot.lane.b32.xlu0 %v2197, 118
        %v2231 = vpop.permute.xlu0 %2230
        %vm2232 = vcmp.lt.s32.totalorder %v283, 118
        %v2233 = vsel %vm2232, %v2229, %v2231
        %v2234 = vsel %vm2232, %v2227, %v2229
        %v2235 = vsel %vm2232, %v2225, %v2227
        %v2236 = vsel %vm2232, %v2223, %v2225
        %v2237 = vsel %vm2232, %v2221, %v2223
        %v2238 = vsel %vm2232, %v2219, %v2221
        %v2239 = vsel %vm2232, %v2217, %v2219
        %v2240 = vsel %vm2232, %v2215, %v2217
        %v2241 = vsel %vm2232, %v2213, %v2215
        %v2242 = vsel %vm2232, %v2211, %v2213
        %v2243 = vsel %vm2232, %v2209, %v2211
        %v2244 = vsel %vm2232, %v2207, %v2209
        %v2245 = vsel %vm2232, %v2205, %v2207
        %v2246 = vsel %vm2232, %v2203, %v2205
        %v2247 = vsel %vm2232, %v2201, %v2203
        %v2248 = vsel %vm2232, %v2199, %v2201
        %v2249 = vmul.f32 %v2248, 0.00041276746
        %v2250 = vmul.f32 %v2247, 0.00041276746
        %v2251 = vmul.f32 %v2246, 0.00041276746
        %v2252 = vmul.f32 %v2245, 0.00041276746
        %v2253 = vmul.f32 %v2244, 0.00041276746
        %v2254 = vmul.f32 %v2243, 0.00041276746
        %v2255 = vmul.f32 %v2242, 0.00041276746
        %v2256 = vmul.f32 %v2241, 0.00041276746
        %v2257 = vmul.f32 %v2240, 0.00041276746
        %v2258 = vmul.f32 %v2239, 0.00041276746
        %v2259 = vmul.f32 %v2238, 0.00041276746
        %v2260 = vmul.f32 %v2237, 0.00041276746
        %v2261 = vmul.f32 %v2236, 0.00041276746
        %v2262 = vmul.f32 %v2235, 0.00041276746
        %v2263 = vmul.f32 %v2234, 0.00041276746
        %v2264 = vmul.f32 %v2233, 0.00041276746
        %v2265 = vadd.f32 %v2061, %v2249
        %v2266 = vadd.f32 %v2062, %v2250
        %v2267 = vadd.f32 %v2063, %v2251
        %v2268 = vadd.f32 %v2064, %v2252
        %v2269 = vadd.f32 %v2065, %v2253
        %v2270 = vadd.f32 %v2066, %v2254
        %v2271 = vadd.f32 %v2067, %v2255
        %v2272 = vadd.f32 %v2068, %v2256
        %v2273 = vadd.f32 %v2069, %v2257
        %v2274 = vadd.f32 %v2070, %v2258
        %v2275 = vadd.f32 %v2071, %v2259
        %v2276 = vadd.f32 %v2072, %v2260
        %v2277 = vadd.f32 %v2073, %v2261
        %v2278 = vadd.f32 %v2074, %v2262
        %v2279 = vadd.f32 %v2075, %v2263
        %v2280 = vadd.f32 %v2076, %v2264
        %vm2281 = vcmask 80960
        %2282 = vst.msk [vmem:[#allocation2 + $0xf8] sm:$0xff] %vm2281, 0.0
        %v2283 = vld [vmem:[#allocation2 + $0x10] sm:$0xff]
        %v2284 = vld [vmem:[#allocation2 + $0x18] sm:$0xff]
        %v2285 = vld [vmem:[#allocation2 + $0x20] sm:$0xff]
        %v2286 = vld [vmem:[#allocation2 + $0x28] sm:$0xff]
        %v2287 = vld [vmem:[#allocation2 + $0x30] sm:$0xff]
        %v2288 = vld [vmem:[#allocation2 + $0x38] sm:$0xff]
        %v2289 = vld [vmem:[#allocation2 + $0x40] sm:$0xff]
        %v2290 = vld [vmem:[#allocation2 + $0x48] sm:$0xff]
        %v2291 = vld [vmem:[#allocation2 + $0x50] sm:$0xff]
        %v2292 = vld [vmem:[#allocation2 + $0x58] sm:$0xff]
        %v2293 = vld [vmem:[#allocation2 + $0x60] sm:$0xff]
        %v2294 = vld [vmem:[#allocation2 + $0x68] sm:$0xff]
        %v2295 = vld [vmem:[#allocation2 + $0x70] sm:$0xff]
        %v2296 = vld [vmem:[#allocation2 + $0x78] sm:$0xff]
        %v2297 = vld [vmem:[#allocation2 + $0x80] sm:$0xff]
        %v2298 = vld [vmem:[#allocation2 + $0x88] sm:$0xff]
        %v2299 = vld [vmem:[#allocation2 + $0x90] sm:$0xff]
        %2300 = vrot.lane.b32.xlu0 %v2283, 120
        %v2301 = vpop.permute.xlu0 %2300
        %2302 = vrot.lane.b32.xlu0 %v2284, 120
        %v2303 = vpop.permute.xlu0 %2302
        %2304 = vrot.lane.b32.xlu0 %v2285, 120
        %v2305 = vpop.permute.xlu0 %2304
        %2306 = vrot.lane.b32.xlu0 %v2286, 120
        %v2307 = vpop.permute.xlu0 %2306
        %2308 = vrot.lane.b32.xlu0 %v2287, 120
        %v2309 = vpop.permute.xlu0 %2308
        %2310 = vrot.lane.b32.xlu0 %v2288, 120
        %v2311 = vpop.permute.xlu0 %2310
        %2312 = vrot.lane.b32.xlu0 %v2289, 120
        %v2313 = vpop.permute.xlu0 %2312
        %2314 = vrot.lane.b32.xlu0 %v2290, 120
        %v2315 = vpop.permute.xlu0 %2314
        %2316 = vrot.lane.b32.xlu0 %v2291, 120
        %v2317 = vpop.permute.xlu0 %2316
        %2318 = vrot.lane.b32.xlu0 %v2292, 120
        %v2319 = vpop.permute.xlu0 %2318
        %2320 = vrot.lane.b32.xlu0 %v2293, 120
        %v2321 = vpop.permute.xlu0 %2320
        %2322 = vrot.lane.b32.xlu0 %v2294, 120
        %v2323 = vpop.permute.xlu0 %2322
        %2324 = vrot.lane.b32.xlu0 %v2295, 120
        %v2325 = vpop.permute.xlu0 %2324
        %2326 = vrot.lane.b32.xlu0 %v2296, 120
        %v2327 = vpop.permute.xlu0 %2326
        %2328 = vrot.lane.b32.xlu0 %v2297, 120
        %v2329 = vpop.permute.xlu0 %2328
        %2330 = vrot.lane.b32.xlu0 %v2298, 120
        %v2331 = vpop.permute.xlu0 %2330
        %2332 = vrot.lane.b32.xlu0 %v2299, 120
        %v2333 = vpop.permute.xlu0 %2332
        %vm2334 = vcmp.lt.s32.totalorder %v283, 120
        %v2335 = vsel %vm2334, %v2331, %v2333
        %v2336 = vsel %vm2334, %v2329, %v2331
        %v2337 = vsel %vm2334, %v2327, %v2329
        %v2338 = vsel %vm2334, %v2325, %v2327
        %v2339 = vsel %vm2334, %v2323, %v2325
        %v2340 = vsel %vm2334, %v2321, %v2323
        %v2341 = vsel %vm2334, %v2319, %v2321
        %v2342 = vsel %vm2334, %v2317, %v2319
        %v2343 = vsel %vm2334, %v2315, %v2317
        %v2344 = vsel %vm2334, %v2313, %v2315
        %v2345 = vsel %vm2334, %v2311, %v2313
        %v2346 = vsel %vm2334, %v2309, %v2311
        %v2347 = vsel %vm2334, %v2307, %v2309
        %v2348 = vsel %vm2334, %v2305, %v2307
        %v2349 = vsel %vm2334, %v2303, %v2305
        %v2350 = vsel %vm2334, %v2301, %v2303
        %v2351 = vmul.f32 %v2350, 0.00022449544
        %v2352 = vmul.f32 %v2349, 0.00022449544
        %v2353 = vmul.f32 %v2348, 0.00022449544
        %v2354 = vmul.f32 %v2347, 0.00022449544
        %v2355 = vmul.f32 %v2346, 0.00022449544
        %v2356 = vmul.f32 %v2345, 0.00022449544
        %v2357 = vmul.f32 %v2344, 0.00022449544
        %v2358 = vmul.f32 %v2343, 0.00022449544
        %v2359 = vmul.f32 %v2342, 0.00022449544
        %v2360 = vmul.f32 %v2341, 0.00022449544
        %v2361 = vmul.f32 %v2340, 0.00022449544
        %v2362 = vmul.f32 %v2339, 0.00022449544
        %v2363 = vmul.f32 %v2338, 0.00022449544
        %v2364 = vmul.f32 %v2337, 0.00022449544
        %v2365 = vmul.f32 %v2336, 0.00022449544
        %v2366 = vmul.f32 %v2335, 0.00022449544
        %v2367 = vadd.f32 %v2163, %v2351
        %v2368 = vadd.f32 %v2164, %v2352
        %v2369 = vadd.f32 %v2165, %v2353
        %v2370 = vadd.f32 %v2166, %v2354
        %v2371 = vadd.f32 %v2167, %v2355
        %v2372 = vadd.f32 %v2168, %v2356
        %v2373 = vadd.f32 %v2169, %v2357
        %v2374 = vadd.f32 %v2170, %v2358
        %v2375 = vadd.f32 %v2171, %v2359
        %v2376 = vadd.f32 %v2172, %v2360
        %v2377 = vadd.f32 %v2173, %v2361
        %v2378 = vadd.f32 %v2174, %v2362
        %v2379 = vadd.f32 %v2175, %v2363
        %v2380 = vadd.f32 %v2176, %v2364
        %v2381 = vadd.f32 %v2177, %v2365
        %v2382 = vadd.f32 %v2178, %v2366
        %vm2383 = vcmask 64560
        %2384 = vst.msk [vmem:[#allocation2 + $0xf8] sm:$0xff] %vm2383, 0.0
        %v2385 = vld [vmem:[#allocation2 + $0x50] sm:$0xff]
        %v2386 = vld [vmem:[#allocation2 + $0x58] sm:$0xff]
        %v2387 = vld [vmem:[#allocation2 + $0x60] sm:$0xff]
        %v2388 = vld [vmem:[#allocation2 + $0x68] sm:$0xff]
        %v2389 = vld [vmem:[#allocation2 + $0x70] sm:$0xff]
        %v2390 = vld [vmem:[#allocation2 + $0x78] sm:$0xff]
        %v2391 = vld [vmem:[#allocation2 + $0x80] sm:$0xff]
        %v2392 = vld [vmem:[#allocation2 + $0x88] sm:$0xff]
        %v2393 = vld [vmem:[#allocation2 + $0x90] sm:$0xff]
        %v2394 = vld [vmem:[#allocation2 + $0x98] sm:$0xff]
        %v2395 = vld [vmem:[#allocation2 + $0xa0] sm:$0xff]
        %v2396 = vld [vmem:[#allocation2 + $0xa8] sm:$0xff]
        %v2397 = vld [vmem:[#allocation2 + $0xb0] sm:$0xff]
        %v2398 = vld [vmem:[#allocation2 + $0xb8] sm:$0xff]
        %v2399 = vld [vmem:[#allocation2 + $0xc0] sm:$0xff]
        %v2400 = vld [vmem:[#allocation2 + $0xc8] sm:$0xff]
        %v2401 = vld [vmem:[#allocation2 + $0xd0] sm:$0xff]
        %2402 = vrot.lane.b32.xlu0 %v2385, 122
        %v2403 = vpop.permute.xlu0 %2402
        %2404 = vrot.lane.b32.xlu0 %v2386, 122
        %v2405 = vpop.permute.xlu0 %2404
        %2406 = vrot.lane.b32.xlu0 %v2387, 122
        %v2407 = vpop.permute.xlu0 %2406
        %2408 = vrot.lane.b32.xlu0 %v2388, 122
        %v2409 = vpop.permute.xlu0 %2408
        %2410 = vrot.lane.b32.xlu0 %v2389, 122
        %v2411 = vpop.permute.xlu0 %2410
        %2412 = vrot.lane.b32.xlu0 %v2390, 122
        %v2413 = vpop.permute.xlu0 %2412
        %2414 = vrot.lane.b32.xlu0 %v2391, 122
        %v2415 = vpop.permute.xlu0 %2414
        %2416 = vrot.lane.b32.xlu0 %v2392, 122
        %v2417 = vpop.permute.xlu0 %2416
        %2418 = vrot.lane.b32.xlu0 %v2393, 122
        %v2419 = vpop.permute.xlu0 %2418
        %2420 = vrot.lane.b32.xlu0 %v2394, 122
        %v2421 = vpop.permute.xlu0 %2420
        %2422 = vrot.lane.b32.xlu0 %v2395, 122
        %v2423 = vpop.permute.xlu0 %2422
        %2424 = vrot.lane.b32.xlu0 %v2396, 122
        %v2425 = vpop.permute.xlu0 %2424
        %2426 = vrot.lane.b32.xlu0 %v2397, 122
        %v2427 = vpop.permute.xlu0 %2426
        %2428 = vrot.lane.b32.xlu0 %v2398, 122
        %v2429 = vpop.permute.xlu0 %2428
        %2430 = vrot.lane.b32.xlu0 %v2399, 122
        %v2431 = vpop.permute.xlu0 %2430
        %2432 = vrot.lane.b32.xlu0 %v2400, 122
        %v2433 = vpop.permute.xlu0 %2432
        %2434 = vrot.lane.b32.xlu0 %v2401, 122
        %v2435 = vpop.permute.xlu0 %2434
        %vm2436 = vcmp.lt.s32.totalorder %v283, 122
        %v2437 = vsel %vm2436, %v2433, %v2435
        %v2438 = vsel %vm2436, %v2431, %v2433
        %v2439 = vsel %vm2436, %v2429, %v2431
        %v2440 = vsel %vm2436, %v2427, %v2429
        %v2441 = vsel %vm2436, %v2425, %v2427
        %v2442 = vsel %vm2436, %v2423, %v2425
        %v2443 = vsel %vm2436, %v2421, %v2423
        %v2444 = vsel %vm2436, %v2419, %v2421
        %v2445 = vsel %vm2436, %v2417, %v2419
        %v2446 = vsel %vm2436, %v2415, %v2417
        %v2447 = vsel %vm2436, %v2413, %v2415
        %v2448 = vsel %vm2436, %v2411, %v2413
        %v2449 = vsel %vm2436, %v2409, %v2411
        %v2450 = vsel %vm2436, %v2407, %v2409
        %v2451 = vsel %vm2436, %v2405, %v2407
        %v2452 = vsel %vm2436, %v2403, %v2405
        %v2453 = vmul.f32 %v2452, 0.0005012788
        %v2454 = vmul.f32 %v2451, 0.0005012788
        %v2455 = vmul.f32 %v2450, 0.0005012788
        %v2456 = vmul.f32 %v2449, 0.0005012788
        %v2457 = vmul.f32 %v2448, 0.0005012788
        %v2458 = vmul.f32 %v2447, 0.0005012788
        %v2459 = vmul.f32 %v2446, 0.0005012788
        %v2460 = vmul.f32 %v2445, 0.0005012788
        %v2461 = vmul.f32 %v2444, 0.0005012788
        %v2462 = vmul.f32 %v2443, 0.0005012788
        %v2463 = vmul.f32 %v2442, 0.0005012788
        %v2464 = vmul.f32 %v2441, 0.0005012788
        %v2465 = vmul.f32 %v2440, 0.0005012788
        %v2466 = vmul.f32 %v2439, 0.0005012788
        %v2467 = vmul.f32 %v2438, 0.0005012788
        %v2468 = vmul.f32 %v2437, 0.0005012788
        %v2469 = vadd.f32 %v2265, %v2453
        %v2470 = vadd.f32 %v2266, %v2454
        %v2471 = vadd.f32 %v2267, %v2455
        %v2472 = vadd.f32 %v2268, %v2456
        %v2473 = vadd.f32 %v2269, %v2457
        %v2474 = vadd.f32 %v2270, %v2458
        %v2475 = vadd.f32 %v2271, %v2459
        %v2476 = vadd.f32 %v2272, %v2460
        %v2477 = vadd.f32 %v2273, %v2461
        %v2478 = vadd.f32 %v2274, %v2462
        %v2479 = vadd.f32 %v2275, %v2463
        %v2480 = vadd.f32 %v2276, %v2464
        %v2481 = vadd.f32 %v2277, %v2465
        %v2482 = vadd.f32 %v2278, %v2466
        %v2483 = vadd.f32 %v2279, %v2467
        %v2484 = vadd.f32 %v2280, %v2468
        %v2485 = vadd.f32 %v2367, %v2469
        %v2486 = vadd.f32 %v2368, %v2470
        %v2487 = vadd.f32 %v2369, %v2471
        %v2488 = vadd.f32 %v2370, %v2472
        %v2489 = vadd.f32 %v2371, %v2473
        %v2490 = vadd.f32 %v2372, %v2474
        %v2491 = vadd.f32 %v2373, %v2475
        %v2492 = vadd.f32 %v2374, %v2476
        %v2493 = vadd.f32 %v2375, %v2477
        %v2494 = vadd.f32 %v2376, %v2478
        %v2495 = vadd.f32 %v2377, %v2479
        %v2496 = vadd.f32 %v2378, %v2480
        %v2497 = vadd.f32 %v2379, %v2481
        %v2498 = vadd.f32 %v2380, %v2482
        %v2499 = vadd.f32 %v2381, %v2483
        %v2500 = vadd.f32 %v2382, %v2484
        %2501 = vst [vmem:[%s132] sm:$0xff] %v2485
        %2502 = vst [vmem:[%s132 + $0x8] sm:$0xff] %v2486
        %2503 = vst [vmem:[%s132 + $0x10] sm:$0xff] %v2487
        %2504 = vst [vmem:[%s132 + $0x18] sm:$0xff] %v2488
        %2505 = vst [vmem:[%s132 + $0x20] sm:$0xff] %v2489
        %2506 = vst [vmem:[%s132 + $0x28] sm:$0xff] %v2490
        %2507 = vst [vmem:[%s132 + $0x30] sm:$0xff] %v2491
        %2508 = vst [vmem:[%s132 + $0x38] sm:$0xff] %v2492
        %2509 = vst [vmem:[%s132 + $0x40] sm:$0xff] %v2493
        %2510 = vst [vmem:[%s132 + $0x48] sm:$0xff] %v2494
        %2511 = vst [vmem:[%s132 + $0x50] sm:$0xff] %v2495
        %2512 = vst [vmem:[%s132 + $0x58] sm:$0xff] %v2496
        %2513 = vst [vmem:[%s132 + $0x60] sm:$0xff] %v2497
        %2514 = vst [vmem:[%s132 + $0x68] sm:$0xff] %v2498
        %2515 = vst [vmem:[%s132 + $0x70] sm:$0xff] %v2499
        %2516 = vst [vmem:[%s132 + $0x78] sm:$0xff] %v2500
        %s2517 = sand.u32 %s52, 1
        %s2518 = scalar_lea.sflag [#allocation5], %s2517
        %s2519 = sand.u32 %s52, 1
        %s2520 = smul.addr %s2519, 128
        %s2521 = scalar_lea.vmem [#allocation6], %s2520
        // Predicated region
        $region29: #{tpu_custom_call.1} parent=23 // pred_check
          %p2522 = pneg %p62
        $region30: #{tpu_custom_call.1} parent=23 // pred_check_branch
          %2524 = sbr.rel (%p2522) target = $region32
        $region31: #{tpu_custom_call.1} parent=23 // pred_region
          %s2526 = ssub.s32 2048, 2048
          %2527 = vsyncadd %s2518, %s2526
          %s2528 = smul.addr %s18, 16
          %s2529 = smul.addr %s2528, 128
          %s2530 = scalar_lea.hbm %s1, %s2529
          %s2532 = sshll.u32 %s2521, 4
          %s2533 = int_to_ptr.vmem [resolvable:$true] %s2532
          %2535 = dma.vmem_to_hbm [thread:$0]  %s2533, 2048, %s2530, %s2518
        $region32: #{tpu_custom_call.1} parent=23 // pred_fallthru
          _
      $region24: #{tpu_custom_call.1} parent=5 // pred_fallthru
        _
      %p2536 = scmp.le.s32.totalorder 2, %s13
      // Predicated region
      $region33: #{tpu_custom_call.1} parent=5 // pred_check
        %p2537 = pneg %p2536
      $region34: #{tpu_custom_call.1} parent=5 // pred_check_branch
        %2539 = sbr.rel (%p2537) target = $region36
      $region35: #{tpu_custom_call.1} parent=5 // pred_region
        %s2540 = ssub.s32 %s13, 2
        // Predicated region
        $region37: #{tpu_custom_call.1} parent=35 // pred_check
          %p2541 = pneg %p68
        $region38: #{tpu_custom_call.1} parent=35 // pred_check_branch
          %2543 = sbr.rel (%p2541) target = $region40
        $region39: #{tpu_custom_call.1} parent=35 // pred_region
          %s2544 = sand.u32 %s53, 1
          %s2545 = scalar_lea.sflag [#allocation5], %s2544
          %s2546 = sand.u32 %s53, 1
          %s2547 = smul.addr %s2546, 128
          %s2548 = scalar_lea.vmem [#allocation6], %s2547
          %2549 = dma.done %s2545, 2048
        $region40: #{tpu_custom_call.1} parent=35 // pred_fallthru
          _
      $region36: #{tpu_custom_call.1} parent=5 // pred_fallthru
        _
    $region6: #{tpu_custom_call.1} parent=1 // loop_footer
      %s17 = sadd.s32 1, %s13
    $region7: #{tpu_custom_call.1} parent=1 // loop_footer_branch
      %12 = sbr.rel target = $region3
    $region8: #{tpu_custom_call.1} parent=1 // loop_exit
      _
    %2550 = vsyncpa [#allocation4], 1
    %s2551 = scalar_lea.sflag [#allocation4], 1
    %2552 = vsyncpa %s2551, 1
    %2553 = vsyncpa [#allocation5], 1
    %s2554 = scalar_lea.sflag [#allocation5], 1
    %2555 = vsyncpa %s2554, 1

</llo_original>
